<compile_context>
chip_gen: v6e
topology: v6e:2x2x1
jax: 0.10.0
libtpu: 0.0.40
codegen_flags: <defaults>
</compile_context>

<pallas_src>
import jax
import jax.numpy as jnp
from jax import lax
from jax.experimental import pallas as pl
from jax.experimental.pallas import tpu as pltpu

LN_EPS = 1e-5   # PyTorch nn.LayerNorm default


def duration_predictor_kernel(
    x_ref,                               # (Bb, T, H)   f32 activations
    w1_ref, b1_ref, g1_ref, be1_ref,     # (3, H, H) bf16, (1, H) f32 x3
    w2_ref, b2_ref, g2_ref, be2_ref,     # (3, H, H) bf16, (1, H) f32 x3
    wl_ref, bl_ref,                      # (T, 1) f32, (1, 1) f32
    o_ref,                               # (Bb, H)      f32
):
    Bb, T, H = x_ref.shape
    R = Bb * T
    inv_h = 1.0 / H

    # Conv boundary masks built in-kernel (was two (R,1) HBM operands that
    # lane-pad to (R,128) in VMEM and get double-buffered).
    t_idx = lax.broadcasted_iota(jnp.int32, (Bb, T, 1), 1)
    m_first = (t_idx > 0).astype(jnp.float32).reshape(R, 1)      # 0 where t == 0
    m_last = (t_idx < T - 1).astype(jnp.float32).reshape(R, 1)   # 0 where t == T-1

    # Flatten (batch, time) into MXU rows.  Elementwise math stays f32
    # (v5e-safe); bf16 only at the MXU with f32 accumulation.
    h = x_ref[...].reshape(R, H)

    def conv_relu_ln(h, w_ref, b_ref, g_ref, be_ref):
        # Conv1d(k=3, pad=1) per tap: y[t] = x[t-1]@W0 + x[t]@W1 + x[t+1]@W2 + b
        # Rolls are XLU (cheap); the masks zero rows that "see" padding and
        # also kill cross-batch leakage of the flattened row layout.
        h_m1 = (pltpu.roll(h, shift=1, axis=0) * m_first).astype(jnp.bfloat16)
        h_c = h.astype(jnp.bfloat16)
        h_p1 = (pltpu.roll(h, shift=R - 1, axis=0) * m_last).astype(jnp.bfloat16)
        y = jnp.dot(h_m1, w_ref[0], preferred_element_type=jnp.float32)
        y += jnp.dot(h_c, w_ref[1], preferred_element_type=jnp.float32)
        y += jnp.dot(h_p1, w_ref[2], preferred_element_type=jnp.float32)
        y = jnp.maximum(y + b_ref[...], 0.0)                     # bias + ReLU
        # Two-pass LayerNorm (mean of (y-mu)^2): same op count as E[y^2]-mu^2,
        # no cancellation risk if activations grow.
        mu = jnp.sum(y, axis=-1, keepdims=True) * inv_h
        d = y - mu
        var = jnp.sum(d * d, axis=-1, keepdims=True) * inv_h
        return d * lax.rsqrt(var + LN_EPS) * g_ref[...] + be_ref[...]

    h1 = conv_relu_ln(h, w1_ref, b1_ref, g1_ref, be1_ref)
    h2 = conv_relu_ln(h1, w2_ref, b2_ref, g2_ref, be2_ref)

    # Final nn.Linear(H, 1) applied along T (PyTorch transpose quirk; T == H):
    #   out[b, h] = sum_t h2[b, t, h] * wl[t] + bl
    # as a VPU broadcast-multiply + sublane reduction (the old M=Bb f32 matmul
    # used <7% of the MXU rows and needed a (Bb, Bb*T) selection operand).
    wl_col = wl_ref[...].reshape(1, T, 1)
    o_ref[...] = jnp.sum(h2.reshape(Bb, T, H) * wl_col, axis=1) + bl_ref[...]


def duration_predictor(x, params, *, num_blocks=None):
    """Pallas forward.  x: (B, T, H) f32 in the pre-transpose PyTorch layout."""
    B, T, H = x.shape
    assert T == H, "original PyTorch module only works when T == hidden_size"
    (w1, b1, g1, be1, w2, b2, g2, be2, wl, bl) = params

    # Fewer, taller grid steps (kernel is per-step-overhead dominated at small
    # sizes).  Two blocks let dimension_semantics=("parallel",) occupy both
    # TensorCores on v7x; on single-TC v5e/v6e the extra step costs ~0.35 us
    # (pass num_blocks=1 there if that matters).
    if num_blocks is None:
        num_blocks = 2 if (B % 2 == 0 and B >= 2) else 1
    if B % num_blocks != 0:
        num_blocks = 1
    block_b = B // num_blocks

    # Tiny per-call parameter prep (in a real model, cache these outside the
    # hot path): bf16 conv weights for the MXU, final-linear weight as a
    # (T, 1) column.  x itself is passed raw — no wrapper pad/cast round-trip.
    w1b = w1.astype(jnp.bfloat16)
    w2b = w2.astype(jnp.bfloat16)
    wl_col = wl.reshape(T, 1).astype(jnp.float32)
    bl2 = bl.reshape(1, 1).astype(jnp.float32)

    def const(shape):
        # Grid-invariant operand: full-array block, constant index map.
        # (Still double-buffered by default; at production H >= 512,
        # pipeline_mode=pl.Buffered(1) on these would reclaim the dead second
        # buffer — negligible at these sizes, so left at the default.)
        return pl.BlockSpec(shape, lambda i, _n=len(shape): (0,) * _n)

    return pl.pallas_call(
        duration_predictor_kernel,
        out_shape=jax.ShapeDtypeStruct((B, H), jnp.float32),
        grid_spec=pltpu.PrefetchScalarGridSpec(
            num_scalar_prefetch=0,
            grid=(num_blocks,),
            in_specs=[
                pl.BlockSpec((block_b, T, H), lambda i: (i, 0, 0)),
                const((3, H, H)), const((1, H)), const((1, H)), const((1, H)),
                const((3, H, H)), const((1, H)), const((1, H)), const((1, H)),
                const((T, 1)), const((1, 1)),
            ],
            out_specs=pl.BlockSpec((block_b, H), lambda i: (i, 0)),
        ),
        compiler_params=pltpu.CompilerParams(
            dimension_semantics=("parallel",),
        ),
    )(x, w1b, b1, g1, be1, w2b, b2, g2, be2, wl_col, bl2)


def init_params(key, H):
    """Deterministic synthetic parameters (conv weights stored as (k, H_in, H_out)).

    For real PyTorch weights, transpose Conv1d weight (out, in, k) -> (k, in, out)
    before passing here.
    """
    ks = jax.random.split(key, 6)
    scale = 0.1
    w1 = jax.random.normal(ks[0], (3, H, H), jnp.float32) * scale
    b1 = jax.random.normal(ks[1], (1, H), jnp.float32) * scale
    w2 = jax.random.normal(ks[2], (3, H, H), jnp.float32) * scale
    b2 = jax.random.normal(ks[3], (1, H), jnp.float32) * scale
    g1 = jnp.ones((1, H), jnp.float32)
    be1 = jnp.zeros((1, H), jnp.float32)
    g2 = jnp.ones((1, H), jnp.float32)
    be2 = jnp.zeros((1, H), jnp.float32)
    wl = jax.random.normal(ks[4], (1, H), jnp.float32) * scale   # Linear(H, 1) weight
    bl = jax.random.normal(ks[5], (1, 1), jnp.float32) * scale   # Linear bias
    return (w1, b1, g1, be1, w2, b2, g2, be2, wl, bl)


def reference_forward(x, params):
    """Pure-JAX f32 reference mirroring the PyTorch forward semantics."""
    (w1, b1, g1, be1, w2, b2, g2, be2, wl, bl) = params

    def conv_relu_ln(h, w, b, g, be):
        h_pad = jnp.pad(h, ((0, 0), (1, 1), (0, 0)))
        y = (h_pad[:, :-2] @ w[0] + h_pad[:, 1:-1] @ w[1] + h_pad[:, 2:] @ w[2]) + b
        y = jnp.maximum(y, 0.0)
        mu = y.mean(-1, keepdims=True)
        var = ((y - mu) ** 2).mean(-1, keepdims=True)
        y = (y - mu) / jnp.sqrt(var + LN_EPS)
        return y * g + be

    h = conv_relu_ln(x, w1, b1, g1, be1)
    h = conv_relu_ln(h, w2, b2, g2, be2)
    # Linear applied along the T axis (PyTorch transpose quirk); output (B, H)
    return jnp.einsum("bth,t->bh", h, wl[0]) + bl[0, 0]


if __name__ == "__main__":
    B, H = 16, 32
    T = H  # required by the original module's final linear
    key = jax.random.PRNGKey(0)
    kx, kp = jax.random.split(key)
    x = jax.random.normal(kx, (B, T, H), jnp.float32)
    params = init_params(kp, H)

    out = jax.block_until_ready(duration_predictor(x, params))
    ref = reference_forward(x, params)

    assert out.shape == (B, H)
    # 5e-2 tolerance absorbs the intentional bf16 MXU-operand precision loss.
    err = float(jnp.max(jnp.abs(out - ref)))
    assert jnp.allclose(out, ref, rtol=5e-2, atol=5e-2), f"mismatch vs ref, max_err={err}"

    print("KERNEL_OK")
</pallas_src>

<mosaic_0001>
module attributes {stable_mosaic.version = 11 : i64} {
  func.func @duration_predictor_kernel(%arg0: i32, %arg1: memref<8x32x32xf32, #tpu.memory_space<vmem>>, %arg2: memref<3x32x32xbf16, #tpu.memory_space<vmem>>, %arg3: memref<1x32xf32, #tpu.memory_space<vmem>>, %arg4: memref<1x32xf32, #tpu.memory_space<vmem>>, %arg5: memref<1x32xf32, #tpu.memory_space<vmem>>, %arg6: memref<3x32x32xbf16, #tpu.memory_space<vmem>>, %arg7: memref<1x32xf32, #tpu.memory_space<vmem>>, %arg8: memref<1x32xf32, #tpu.memory_space<vmem>>, %arg9: memref<1x32xf32, #tpu.memory_space<vmem>>, %arg10: memref<32x1xf32, #tpu.memory_space<vmem>>, %arg11: memref<1x1xf32, #tpu.memory_space<vmem>>, %arg12: memref<8x32xf32, #tpu.memory_space<vmem>>) attributes {dimension_semantics = [#tpu.dimension_semantics<parallel>], iteration_bounds = array<i64: 2>, scalar_prefetch = 0 : i64, scratch_operands = 0 : i64, tpu.core_type = #tpu.core_type<tc>, window_params = [{transform_indices = @transform_0, window_bounds = array<i64: 8, 32, 32>}, {pipeline_mode = #tpu.pipeline_mode<synchronous>, transform_indices = @transform_1, window_bounds = array<i64: 3, 32, 32>}, {pipeline_mode = #tpu.pipeline_mode<synchronous>, transform_indices = @transform_2, window_bounds = array<i64: 1, 32>}, {pipeline_mode = #tpu.pipeline_mode<synchronous>, transform_indices = @transform_3, window_bounds = array<i64: 1, 32>}, {pipeline_mode = #tpu.pipeline_mode<synchronous>, transform_indices = @transform_4, window_bounds = array<i64: 1, 32>}, {pipeline_mode = #tpu.pipeline_mode<synchronous>, transform_indices = @transform_5, window_bounds = array<i64: 3, 32, 32>}, {pipeline_mode = #tpu.pipeline_mode<synchronous>, transform_indices = @transform_6, window_bounds = array<i64: 1, 32>}, {pipeline_mode = #tpu.pipeline_mode<synchronous>, transform_indices = @transform_7, window_bounds = array<i64: 1, 32>}, {pipeline_mode = #tpu.pipeline_mode<synchronous>, transform_indices = @transform_8, window_bounds = array<i64: 1, 32>}, {pipeline_mode = #tpu.pipeline_mode<synchronous>, transform_indices = @transform_9, window_bounds = array<i64: 32, 1>}, {pipeline_mode = #tpu.pipeline_mode<synchronous>, transform_indices = @transform_10, window_bounds = array<i64: 1, 1>}, {transform_indices = @transform_11, window_bounds = array<i64: 8, 32>}]} {
    %0 = tpu.iota {dimensions = array<i32: 1>} : vector<8x32x1xi32>
    %c0_i32 = arith.constant 0 : i32
    %1 = vector.broadcast %c0_i32 : i32 to vector<8x32x1xi32>
    %2 = arith.cmpi sgt, %0, %1 : vector<8x32x1xi32>
    %3 = arith.extui %2 : vector<8x32x1xi1> to vector<8x32x1xi32>
    %4 = arith.sitofp %3 : vector<8x32x1xi32> to vector<8x32x1xf32>
    %5 = vector.shape_cast %4 : vector<8x32x1xf32> to vector<256x1xf32>
    %c31_i32 = arith.constant 31 : i32
    %6 = vector.broadcast %c31_i32 : i32 to vector<8x32x1xi32>
    %7 = arith.cmpi slt, %0, %6 : vector<8x32x1xi32>
    %8 = arith.extui %7 : vector<8x32x1xi1> to vector<8x32x1xi32>
    %9 = arith.sitofp %8 : vector<8x32x1xi32> to vector<8x32x1xf32>
    %10 = vector.shape_cast %9 : vector<8x32x1xf32> to vector<256x1xf32>
    %c0 = arith.constant 0 : index
    %c0_0 = arith.constant 0 : index
    %c0_1 = arith.constant 0 : index
    %11 = vector.load %arg1[%c0, %c0_0, %c0_1] : memref<8x32x32xf32, #tpu.memory_space<vmem>>, vector<8x32x32xf32>
    %12 = vector.shape_cast %11 : vector<8x32x32xf32> to vector<256x32xf32>
    %c1_i32 = arith.constant 1 : i32
    %13 = tpu.dynamic_rotate %12 by %c1_i32 dim 0 : vector<256x32xf32>, i32 -> vector<256x32xf32>
    %14 = vector.broadcast %5 : vector<256x1xf32> to vector<256x32xf32>
    %15 = arith.mulf %13, %14 : vector<256x32xf32>
    %16 = arith.truncf %15 : vector<256x32xf32> to vector<256x32xbf16>
    %17 = arith.truncf %12 : vector<256x32xf32> to vector<256x32xbf16>
    %c255_i32 = arith.constant 255 : i32
    %18 = tpu.dynamic_rotate %12 by %c255_i32 dim 0 : vector<256x32xf32>, i32 -> vector<256x32xf32>
    %19 = vector.broadcast %10 : vector<256x1xf32> to vector<256x32xf32>
    %20 = arith.mulf %18, %19 : vector<256x32xf32>
    %21 = arith.truncf %20 : vector<256x32xf32> to vector<256x32xbf16>
    %c0_2 = arith.constant 0 : index
    %c0_3 = arith.constant 0 : index
    %c0_4 = arith.constant 0 : index
    %22 = vector.load %arg2[%c0_2, %c0_3, %c0_4] : memref<3x32x32xbf16, #tpu.memory_space<vmem>>, vector<1x32x32xbf16>
    %23 = vector.shape_cast %22 : vector<1x32x32xbf16> to vector<32x32xbf16>
    %cst = arith.constant dense<0.000000e+00> : vector<256x32xf32>
    %24 = tpu.matmul %16, %23, %cst {dimension_numbers = #tpu.dot_dimension_numbers<[1], [0], [0], [1], [0, 0, 1, 1], [], []>} : vector<256x32xbf16>, vector<32x32xbf16>, vector<256x32xf32> -> vector<256x32xf32>
    %c1 = arith.constant 1 : index
    %c0_5 = arith.constant 0 : index
    %c0_6 = arith.constant 0 : index
    %25 = vector.load %arg2[%c1, %c0_5, %c0_6] : memref<3x32x32xbf16, #tpu.memory_space<vmem>>, vector<1x32x32xbf16>
    %26 = vector.shape_cast %25 : vector<1x32x32xbf16> to vector<32x32xbf16>
    %cst_7 = arith.constant dense<0.000000e+00> : vector<256x32xf32>
    %27 = tpu.matmul %17, %26, %cst_7 {dimension_numbers = #tpu.dot_dimension_numbers<[1], [0], [0], [1], [0, 0, 1, 1], [], []>} : vector<256x32xbf16>, vector<32x32xbf16>, vector<256x32xf32> -> vector<256x32xf32>
    %28 = arith.addf %24, %27 : vector<256x32xf32>
    %c2 = arith.constant 2 : index
    %c0_8 = arith.constant 0 : index
    %c0_9 = arith.constant 0 : index
    %29 = vector.load %arg2[%c2, %c0_8, %c0_9] : memref<3x32x32xbf16, #tpu.memory_space<vmem>>, vector<1x32x32xbf16>
    %30 = vector.shape_cast %29 : vector<1x32x32xbf16> to vector<32x32xbf16>
    %cst_10 = arith.constant dense<0.000000e+00> : vector<256x32xf32>
    %31 = tpu.matmul %21, %30, %cst_10 {dimension_numbers = #tpu.dot_dimension_numbers<[1], [0], [0], [1], [0, 0, 1, 1], [], []>} : vector<256x32xbf16>, vector<32x32xbf16>, vector<256x32xf32> -> vector<256x32xf32>
    %32 = arith.addf %28, %31 : vector<256x32xf32>
    %c0_11 = arith.constant 0 : index
    %c0_12 = arith.constant 0 : index
    %33 = vector.load %arg3[%c0_11, %c0_12] : memref<1x32xf32, #tpu.memory_space<vmem>>, vector<1x32xf32>
    %34 = vector.broadcast %33 : vector<1x32xf32> to vector<256x32xf32>
    %35 = arith.addf %32, %34 : vector<256x32xf32>
    %cst_13 = arith.constant 0.000000e+00 : f32
    %36 = vector.broadcast %cst_13 : f32 to vector<256x32xf32>
    %37 = arith.maximumf %35, %36 : vector<256x32xf32>
    %cst_14 = arith.constant dense<0.000000e+00> : vector<256xf32>
    %38 = vector.multi_reduction <add>, %37, %cst_14 [1] : vector<256x32xf32> to vector<256xf32>
    %39 = vector.shape_cast %38 : vector<256xf32> to vector<256x1xf32>
    %cst_15 = arith.constant 3.125000e-02 : f32
    %40 = vector.broadcast %cst_15 : f32 to vector<256x1xf32>
    %41 = arith.mulf %39, %40 : vector<256x1xf32>
    %42 = vector.broadcast %41 : vector<256x1xf32> to vector<256x32xf32>
    %43 = arith.subf %37, %42 : vector<256x32xf32>
    %44 = arith.mulf %43, %43 : vector<256x32xf32>
    %cst_16 = arith.constant dense<0.000000e+00> : vector<256xf32>
    %45 = vector.multi_reduction <add>, %44, %cst_16 [1] : vector<256x32xf32> to vector<256xf32>
    %46 = vector.shape_cast %45 : vector<256xf32> to vector<256x1xf32>
    %cst_17 = arith.constant 3.125000e-02 : f32
    %47 = vector.broadcast %cst_17 : f32 to vector<256x1xf32>
    %48 = arith.mulf %46, %47 : vector<256x1xf32>
    %cst_18 = arith.constant 9.99999974E-6 : f32
    %49 = vector.broadcast %cst_18 : f32 to vector<256x1xf32>
    %50 = arith.addf %48, %49 : vector<256x1xf32>
    %51 = math.rsqrt %50 : vector<256x1xf32>
    %52 = vector.broadcast %51 : vector<256x1xf32> to vector<256x32xf32>
    %53 = arith.mulf %43, %52 : vector<256x32xf32>
    %c0_19 = arith.constant 0 : index
    %c0_20 = arith.constant 0 : index
    %54 = vector.load %arg4[%c0_19, %c0_20] : memref<1x32xf32, #tpu.memory_space<vmem>>, vector<1x32xf32>
    %55 = vector.broadcast %54 : vector<1x32xf32> to vector<256x32xf32>
    %56 = arith.mulf %53, %55 : vector<256x32xf32>
    %c0_21 = arith.constant 0 : index
    %c0_22 = arith.constant 0 : index
    %57 = vector.load %arg5[%c0_21, %c0_22] : memref<1x32xf32, #tpu.memory_space<vmem>>, vector<1x32xf32>
    %58 = vector.broadcast %57 : vector<1x32xf32> to vector<256x32xf32>
    %59 = arith.addf %56, %58 : vector<256x32xf32>
    %c1_i32_23 = arith.constant 1 : i32
    %60 = tpu.dynamic_rotate %59 by %c1_i32_23 dim 0 : vector<256x32xf32>, i32 -> vector<256x32xf32>
    %61 = vector.broadcast %5 : vector<256x1xf32> to vector<256x32xf32>
    %62 = arith.mulf %60, %61 : vector<256x32xf32>
    %63 = arith.truncf %62 : vector<256x32xf32> to vector<256x32xbf16>
    %64 = arith.truncf %59 : vector<256x32xf32> to vector<256x32xbf16>
    %c255_i32_24 = arith.constant 255 : i32
    %65 = tpu.dynamic_rotate %59 by %c255_i32_24 dim 0 : vector<256x32xf32>, i32 -> vector<256x32xf32>
    %66 = vector.broadcast %10 : vector<256x1xf32> to vector<256x32xf32>
    %67 = arith.mulf %65, %66 : vector<256x32xf32>
    %68 = arith.truncf %67 : vector<256x32xf32> to vector<256x32xbf16>
    %c0_25 = arith.constant 0 : index
    %c0_26 = arith.constant 0 : index
    %c0_27 = arith.constant 0 : index
    %69 = vector.load %arg6[%c0_25, %c0_26, %c0_27] : memref<3x32x32xbf16, #tpu.memory_space<vmem>>, vector<1x32x32xbf16>
    %70 = vector.shape_cast %69 : vector<1x32x32xbf16> to vector<32x32xbf16>
    %cst_28 = arith.constant dense<0.000000e+00> : vector<256x32xf32>
    %71 = tpu.matmul %63, %70, %cst_28 {dimension_numbers = #tpu.dot_dimension_numbers<[1], [0], [0], [1], [0, 0, 1, 1], [], []>} : vector<256x32xbf16>, vector<32x32xbf16>, vector<256x32xf32> -> vector<256x32xf32>
    %c1_29 = arith.constant 1 : index
    %c0_30 = arith.constant 0 : index
    %c0_31 = arith.constant 0 : index
    %72 = vector.load %arg6[%c1_29, %c0_30, %c0_31] : memref<3x32x32xbf16, #tpu.memory_space<vmem>>, vector<1x32x32xbf16>
    %73 = vector.shape_cast %72 : vector<1x32x32xbf16> to vector<32x32xbf16>
    %cst_32 = arith.constant dense<0.000000e+00> : vector<256x32xf32>
    %74 = tpu.matmul %64, %73, %cst_32 {dimension_numbers = #tpu.dot_dimension_numbers<[1], [0], [0], [1], [0, 0, 1, 1], [], []>} : vector<256x32xbf16>, vector<32x32xbf16>, vector<256x32xf32> -> vector<256x32xf32>
    %75 = arith.addf %71, %74 : vector<256x32xf32>
    %c2_33 = arith.constant 2 : index
    %c0_34 = arith.constant 0 : index
    %c0_35 = arith.constant 0 : index
    %76 = vector.load %arg6[%c2_33, %c0_34, %c0_35] : memref<3x32x32xbf16, #tpu.memory_space<vmem>>, vector<1x32x32xbf16>
    %77 = vector.shape_cast %76 : vector<1x32x32xbf16> to vector<32x32xbf16>
    %cst_36 = arith.constant dense<0.000000e+00> : vector<256x32xf32>
    %78 = tpu.matmul %68, %77, %cst_36 {dimension_numbers = #tpu.dot_dimension_numbers<[1], [0], [0], [1], [0, 0, 1, 1], [], []>} : vector<256x32xbf16>, vector<32x32xbf16>, vector<256x32xf32> -> vector<256x32xf32>
    %79 = arith.addf %75, %78 : vector<256x32xf32>
    %c0_37 = arith.constant 0 : index
    %c0_38 = arith.constant 0 : index
    %80 = vector.load %arg7[%c0_37, %c0_38] : memref<1x32xf32, #tpu.memory_space<vmem>>, vector<1x32xf32>
    %81 = vector.broadcast %80 : vector<1x32xf32> to vector<256x32xf32>
    %82 = arith.addf %79, %81 : vector<256x32xf32>
    %cst_39 = arith.constant 0.000000e+00 : f32
    %83 = vector.broadcast %cst_39 : f32 to vector<256x32xf32>
    %84 = arith.maximumf %82, %83 : vector<256x32xf32>
    %cst_40 = arith.constant dense<0.000000e+00> : vector<256xf32>
    %85 = vector.multi_reduction <add>, %84, %cst_40 [1] : vector<256x32xf32> to vector<256xf32>
    %86 = vector.shape_cast %85 : vector<256xf32> to vector<256x1xf32>
    %cst_41 = arith.constant 3.125000e-02 : f32
    %87 = vector.broadcast %cst_41 : f32 to vector<256x1xf32>
    %88 = arith.mulf %86, %87 : vector<256x1xf32>
    %89 = vector.broadcast %88 : vector<256x1xf32> to vector<256x32xf32>
    %90 = arith.subf %84, %89 : vector<256x32xf32>
    %91 = arith.mulf %90, %90 : vector<256x32xf32>
    %cst_42 = arith.constant dense<0.000000e+00> : vector<256xf32>
    %92 = vector.multi_reduction <add>, %91, %cst_42 [1] : vector<256x32xf32> to vector<256xf32>
    %93 = vector.shape_cast %92 : vector<256xf32> to vector<256x1xf32>
    %cst_43 = arith.constant 3.125000e-02 : f32
    %94 = vector.broadcast %cst_43 : f32 to vector<256x1xf32>
    %95 = arith.mulf %93, %94 : vector<256x1xf32>
    %cst_44 = arith.constant 9.99999974E-6 : f32
    %96 = vector.broadcast %cst_44 : f32 to vector<256x1xf32>
    %97 = arith.addf %95, %96 : vector<256x1xf32>
    %98 = math.rsqrt %97 : vector<256x1xf32>
    %99 = vector.broadcast %98 : vector<256x1xf32> to vector<256x32xf32>
    %100 = arith.mulf %90, %99 : vector<256x32xf32>
    %c0_45 = arith.constant 0 : index
    %c0_46 = arith.constant 0 : index
    %101 = vector.load %arg8[%c0_45, %c0_46] : memref<1x32xf32, #tpu.memory_space<vmem>>, vector<1x32xf32>
    %102 = vector.broadcast %101 : vector<1x32xf32> to vector<256x32xf32>
    %103 = arith.mulf %100, %102 : vector<256x32xf32>
    %c0_47 = arith.constant 0 : index
    %c0_48 = arith.constant 0 : index
    %104 = vector.load %arg9[%c0_47, %c0_48] : memref<1x32xf32, #tpu.memory_space<vmem>>, vector<1x32xf32>
    %105 = vector.broadcast %104 : vector<1x32xf32> to vector<256x32xf32>
    %106 = arith.addf %103, %105 : vector<256x32xf32>
    %c0_49 = arith.constant 0 : index
    %c0_50 = arith.constant 0 : index
    %107 = vector.load %arg10[%c0_49, %c0_50] : memref<32x1xf32, #tpu.memory_space<vmem>>, vector<32x1xf32>
    %108 = vector.shape_cast %107 : vector<32x1xf32> to vector<1x32x1xf32>
    %109 = vector.shape_cast %106 : vector<256x32xf32> to vector<8x32x32xf32>
    %110 = vector.broadcast %108 : vector<1x32x1xf32> to vector<8x32x32xf32>
    %111 = arith.mulf %109, %110 : vector<8x32x32xf32>
    %cst_51 = arith.constant dense<0.000000e+00> : vector<8x32xf32>
    %112 = vector.multi_reduction <add>, %111, %cst_51 [1] : vector<8x32x32xf32> to vector<8x32xf32>
    %c0_52 = arith.constant 0 : index
    %c0_53 = arith.constant 0 : index
    %113 = vector.load %arg11[%c0_52, %c0_53] : memref<1x1xf32, #tpu.memory_space<vmem>>, vector<1x1xf32>
    %114 = vector.broadcast %113 : vector<1x1xf32> to vector<8x32xf32>
    %115 = arith.addf %112, %114 : vector<8x32xf32>
    %c0_54 = arith.constant 0 : index
    %c0_55 = arith.constant 0 : index
    %116 = vector.load %arg12[%c0_54, %c0_55] : memref<8x32xf32, #tpu.memory_space<vmem>>, vector<8x32xf32>
    tpu.vector_store %arg12[%c0_54, %c0_55], %115 {strides = array<i32>} : memref<8x32xf32, #tpu.memory_space<vmem>>, vector<8x32xf32>,
    return
  }
  func.func @transform_0(%arg0: i32) -> (i32, i32, i32) {
    %c0_i32 = arith.constant 0 : i32
    %c0_i32_0 = arith.constant 0 : i32
    %c0_i32_1 = arith.constant 0 : i32
    return %arg0, %c0_i32, %c0_i32_0 : i32, i32, i32
  }
  func.func @transform_1(%arg0: i32) -> (i32, i32, i32) {
    %c0_i32 = arith.constant 0 : i32
    %c0_i32_0 = arith.constant 0 : i32
    %c0_i32_1 = arith.constant 0 : i32
    %c0_i32_2 = arith.constant 0 : i32
    return %c0_i32, %c0_i32_0, %c0_i32_1 : i32, i32, i32
  }
  func.func @transform_2(%arg0: i32) -> (i32, i32) {
    %c0_i32 = arith.constant 0 : i32
    %c0_i32_0 = arith.constant 0 : i32
    %c0_i32_1 = arith.constant 0 : i32
    return %c0_i32, %c0_i32_0 : i32, i32
  }
  func.func @transform_3(%arg0: i32) -> (i32, i32) {
    %c0_i32 = arith.constant 0 : i32
    %c0_i32_0 = arith.constant 0 : i32
    %c0_i32_1 = arith.constant 0 : i32
    return %c0_i32, %c0_i32_0 : i32, i32
  }
  func.func @transform_4(%arg0: i32) -> (i32, i32) {
    %c0_i32 = arith.constant 0 : i32
    %c0_i32_0 = arith.constant 0 : i32
    %c0_i32_1 = arith.constant 0 : i32
    return %c0_i32, %c0_i32_0 : i32, i32
  }
  func.func @transform_5(%arg0: i32) -> (i32, i32, i32) {
    %c0_i32 = arith.constant 0 : i32
    %c0_i32_0 = arith.constant 0 : i32
    %c0_i32_1 = arith.constant 0 : i32
    %c0_i32_2 = arith.constant 0 : i32
    return %c0_i32, %c0_i32_0, %c0_i32_1 : i32, i32, i32
  }
  func.func @transform_6(%arg0: i32) -> (i32, i32) {
    %c0_i32 = arith.constant 0 : i32
    %c0_i32_0 = arith.constant 0 : i32
    %c0_i32_1 = arith.constant 0 : i32
    return %c0_i32, %c0_i32_0 : i32, i32
  }
  func.func @transform_7(%arg0: i32) -> (i32, i32) {
    %c0_i32 = arith.constant 0 : i32
    %c0_i32_0 = arith.constant 0 : i32
    %c0_i32_1 = arith.constant 0 : i32
    return %c0_i32, %c0_i32_0 : i32, i32
  }
  func.func @transform_8(%arg0: i32) -> (i32, i32) {
    %c0_i32 = arith.constant 0 : i32
    %c0_i32_0 = arith.constant 0 : i32
    %c0_i32_1 = arith.constant 0 : i32
    return %c0_i32, %c0_i32_0 : i32, i32
  }
  func.func @transform_9(%arg0: i32) -> (i32, i32) {
    %c0_i32 = arith.constant 0 : i32
    %c0_i32_0 = arith.constant 0 : i32
    %c0_i32_1 = arith.constant 0 : i32
    return %c0_i32, %c0_i32_0 : i32, i32
  }
  func.func @transform_10(%arg0: i32) -> (i32, i32) {
    %c0_i32 = arith.constant 0 : i32
    %c0_i32_0 = arith.constant 0 : i32
    %c0_i32_1 = arith.constant 0 : i32
    return %c0_i32, %c0_i32_0 : i32, i32
  }
  func.func @transform_11(%arg0: i32) -> (i32, i32) {
    %c0_i32 = arith.constant 0 : i32
    %c0_i32_0 = arith.constant 0 : i32
    return %arg0, %c0_i32 : i32, i32
  }
}

</mosaic_0001>

<llo_original>
// kernel: tpu_custom_call.1
$region0: #{tpu_custom_call.1}
  #allocation0 [shape = 'u32[]', space=smem, size = 0x4, offset = 0x4, fixed_abs, tag = 'smem constant byte address 0x4 - core index']
  #allocation1 [shape = 'u32[144,128]{1,0:T(1,128)}', space=vmem, size = 0x12000, scoped, tag = 'internal scratch']
  #allocation2 [shape = 'f32[1,1]{1,0:T(1,128)S(1)}', space=vmem, size = 0x200, scoped, tag = 'scoped memory for tpu_custom_call.1']
  %s0 = inlined_call_operand.hbm [shape: f32[16,32,32], index: 0, kind: input, shape index: {}]
  %s1 = inlined_call_operand.hbm [shape: bf16[3,32,32], index: 1, kind: input, shape index: {}]
  %s2 = inlined_call_operand.vmem [shape: f32[1,32], index: 2, kind: input, shape index: {}]
  %s3 = inlined_call_operand.vmem [shape: f32[1,32], index: 3, kind: input, shape index: {}]
  %s4 = inlined_call_operand.vmem [shape: f32[1,32], index: 4, kind: input, shape index: {}]
  %s5 = inlined_call_operand.hbm [shape: bf16[3,32,32], index: 5, kind: input, shape index: {}]
  %s6 = inlined_call_operand.vmem [shape: f32[1,32], index: 6, kind: input, shape index: {}]
  %s7 = inlined_call_operand.vmem [shape: f32[1,32], index: 7, kind: input, shape index: {}]
  %s8 = inlined_call_operand.vmem [shape: f32[1,32], index: 8, kind: input, shape index: {}]
  %s9 = inlined_call_operand.vmem [shape: f32[32,1], index: 9, kind: input, shape index: {}]
  %s10 = inlined_call_operand.<no memory space> [shape: f32[1,1], index: 10, kind: input, shape index: {}]
  %s11 = inlined_call_operand.hbm [shape: f32[16,32], index: 11, kind: output, shape index: {}]
  %s12 = sld [smem:[#allocation0]]
  $region89: #{tpu_custom_call.1} parent=0
    _
  %s14 = ssub.s32 1, %s12
  %s15 = scalar_select 0, %s14, %s12
  %v16 = vstv %s10
  %17 = vst [vmem:[#allocation2] sm:$0x1] %v16
  $region1: #{tpu_custom_call.1} parent=0
    #allocation3 [shape = 'u8[262144]{0}', space=vmem, size = 0x40000, scoped, tag = 'input window, operand 0']
    #allocation4 [shape = 's32[2]{0}', space=sflag, size = 0x8, scoped, tag = 'scoped memory for tpu_custom_call.1']
    #allocation5 [shape = 's32[2]{0}', space=sflag, size = 0x8, scoped, tag = 'scoped memory for tpu_custom_call.1']
    #allocation6 [shape = 'u8[24576]{0}', space=vmem, size = 0x6000, scoped, tag = 'input window, operand 1, single buffered']
    #allocation7 [shape = 's32[1]{0}', space=sflag, size = 0x4, scoped, tag = 'scoped memory for tpu_custom_call.1']
    #allocation8 [shape = 'u8[24576]{0}', space=vmem, size = 0x6000, scoped, tag = 'input window, operand 5, single buffered']
    #allocation9 [shape = 'u8[8192]{0}', space=vmem, size = 0x2000, scoped, tag = 'output window, operand 0']
    %18 = vsyncpa [#allocation4], 0
    %s19 = scalar_lea.sflag [#allocation4], 1
    %20 = vsyncpa %s19, 0
    %21 = vsyncpa [#allocation7], 0
    %22 = vsyncpa [#allocation5], 0
    %s23 = scalar_lea.sflag [#allocation5], 1
    %24 = vsyncpa %s23, 0
    loop: start=0, step=1, limit=4
    $region2: #{tpu_custom_call.1} parent=1 // loop_pre_header
      _
    $region3: #{tpu_custom_call.1} parent=1 // loop_header
      %s26 = sphi 0, %s30
      %p27 = scmp.ge.s32.totalorder %s26, 4
      %s36 = sphi 0, %s38
      %s39 = sphi 0, %s36
      %s40 = sphi 0, %s39
      %s56 = sphi 0, %s40
      %s60 = sphi 0, %s60
      %s62 = sphi 0, %s60
      %s63 = sphi 0, %s62
      %s77 = sphi 0, %s63
      %s81 = sphi 0, %s81
      %s83 = sphi 0, %s81
      %s84 = sphi 0, %s83
      %s98 = sphi 0, %s84
      %s102 = sphi 0, %s102
      %s104 = sphi 0, %s102
      %s105 = sphi 0, %s104
      %s119 = sphi 0, %s105
      %s123 = sphi 0, %s123
      %s125 = sphi 0, %s123
      %s126 = sphi 0, %s125
      %s140 = sphi 0, %s126
      %s144 = sphi 0, %s144
      %s146 = sphi 0, %s144
      %s147 = sphi 0, %s146
      %s161 = sphi 0, %s147
      %s165 = sphi 0, %s165
      %s167 = sphi 0, %s165
      %s168 = sphi 0, %s167
      %s182 = sphi 0, %s168
      %s186 = sphi 0, %s186
      %s188 = sphi 0, %s186
      %s189 = sphi 0, %s188
      %s203 = sphi 0, %s189
      %s207 = sphi 0, %s207
      %s209 = sphi 0, %s207
      %s210 = sphi 0, %s209
      %s224 = sphi 0, %s210
      %s228 = sphi 0, %s228
      %s230 = sphi 0, %s228
      %s231 = sphi 0, %s230
      %s245 = sphi 0, %s231
      %s249 = sphi 0, %s249
      %s251 = sphi 0, %s249
      %s252 = sphi 0, %s251
      %s266 = sphi 0, %s252
      %s272 = sphi 0, %s274
      %s275 = sphi 0, %s272
      %s276 = sphi 0, %s275
      %s292 = sphi 0, %s276
    $region4: #{tpu_custom_call.1} parent=1 // loop_header_branch
      %29 = sbr.rel (%p27) target = $region8
    $region5: #{tpu_custom_call.1} parent=1 // loop_body
      %s31 = ssub.s32 %s26, 1
      %s32 = ssub.s32 %s26, 2
      %s33 = sadd.s32 %s26, 1
      %s34 = ssub.s32 %s26, %s33
      %p35 = scmp.eq.s32.totalorder %s34, 0
      %s37 = sadd.s32 %s36, 1
      %s38 = scalar_select %p35, %s36, %s37
      %p41 = pneg %p35
      %p42 = scmp.eq.s32.totalorder %s26, 1
      %p43 = por %p41, %p42
      %p44 = scmp.ne.s32.totalorder %s36, %s39
      %p45 = scmp.eq.s32.totalorder %s26, 0
      %p46 = por %p44, %p45
      %p47 = scmp.ne.s32.totalorder %s36, %s39
      %p48 = scmp.eq.s32.totalorder %s31, 1
      %p49 = por %p47, %p48
      %p50 = scmp.ne.s32.totalorder %s39, %s40
      %p51 = scmp.eq.s32.totalorder %s31, 0
      %p52 = por %p50, %p51
      %p53 = scmp.ne.s32.totalorder %s39, %s40
      %p54 = scmp.eq.s32.totalorder %s32, 1
      %p55 = por %p53, %p54
      %p57 = scmp.ne.s32.totalorder %s40, %s56
      %p58 = scmp.eq.s32.totalorder %s32, 0
      %p59 = por %p57, %p58
      %s61 = sadd.s32 %s60, 1
      %p64 = scmp.eq.s32.totalorder %s26, 1
      %p65 = scmp.ne.s32.totalorder %s60, %s62
      %p66 = scmp.eq.s32.totalorder %s26, 0
      %p67 = por %p65, %p66
      %p68 = scmp.ne.s32.totalorder %s60, %s62
      %p69 = scmp.eq.s32.totalorder %s31, 1
      %p70 = por %p68, %p69
      %p71 = scmp.ne.s32.totalorder %s62, %s63
      %p72 = scmp.eq.s32.totalorder %s31, 0
      %p73 = por %p71, %p72
      %p74 = scmp.ne.s32.totalorder %s62, %s63
      %p75 = scmp.eq.s32.totalorder %s32, 1
      %p76 = por %p74, %p75
      %p78 = scmp.ne.s32.totalorder %s63, %s77
      %p79 = scmp.eq.s32.totalorder %s32, 0
      %p80 = por %p78, %p79
      %s82 = sadd.s32 %s81, 1
      %p85 = scmp.eq.s32.totalorder %s26, 1
      %p86 = scmp.ne.s32.totalorder %s81, %s83
      %p87 = scmp.eq.s32.totalorder %s26, 0
      %p88 = por %p86, %p87
      %p89 = scmp.ne.s32.totalorder %s81, %s83
      %p90 = scmp.eq.s32.totalorder %s31, 1
      %p91 = por %p89, %p90
      %p92 = scmp.ne.s32.totalorder %s83, %s84
      %p93 = scmp.eq.s32.totalorder %s31, 0
      %p94 = por %p92, %p93
      %p95 = scmp.ne.s32.totalorder %s83, %s84
      %p96 = scmp.eq.s32.totalorder %s32, 1
      %p97 = por %p95, %p96
      %p99 = scmp.ne.s32.totalorder %s84, %s98
      %p100 = scmp.eq.s32.totalorder %s32, 0
      %p101 = por %p99, %p100
      %s103 = sadd.s32 %s102, 1
      %p106 = scmp.eq.s32.totalorder %s26, 1
      %p107 = scmp.ne.s32.totalorder %s102, %s104
      %p108 = scmp.eq.s32.totalorder %s26, 0
      %p109 = por %p107, %p108
      %p110 = scmp.ne.s32.totalorder %s102, %s104
      %p111 = scmp.eq.s32.totalorder %s31, 1
      %p112 = por %p110, %p111
      %p113 = scmp.ne.s32.totalorder %s104, %s105
      %p114 = scmp.eq.s32.totalorder %s31, 0
      %p115 = por %p113, %p114
      %p116 = scmp.ne.s32.totalorder %s104, %s105
      %p117 = scmp.eq.s32.totalorder %s32, 1
      %p118 = por %p116, %p117
      %p120 = scmp.ne.s32.totalorder %s105, %s119
      %p121 = scmp.eq.s32.totalorder %s32, 0
      %p122 = por %p120, %p121
      %s124 = sadd.s32 %s123, 1
      %p127 = scmp.eq.s32.totalorder %s26, 1
      %p128 = scmp.ne.s32.totalorder %s123, %s125
      %p129 = scmp.eq.s32.totalorder %s26, 0
      %p130 = por %p128, %p129
      %p131 = scmp.ne.s32.totalorder %s123, %s125
      %p132 = scmp.eq.s32.totalorder %s31, 1
      %p133 = por %p131, %p132
      %p134 = scmp.ne.s32.totalorder %s125, %s126
      %p135 = scmp.eq.s32.totalorder %s31, 0
      %p136 = por %p134, %p135
      %p137 = scmp.ne.s32.totalorder %s125, %s126
      %p138 = scmp.eq.s32.totalorder %s32, 1
      %p139 = por %p137, %p138
      %p141 = scmp.ne.s32.totalorder %s126, %s140
      %p142 = scmp.eq.s32.totalorder %s32, 0
      %p143 = por %p141, %p142
      %s145 = sadd.s32 %s144, 1
      %p148 = scmp.eq.s32.totalorder %s26, 1
      %p149 = scmp.ne.s32.totalorder %s144, %s146
      %p150 = scmp.eq.s32.totalorder %s26, 0
      %p151 = por %p149, %p150
      %p152 = scmp.ne.s32.totalorder %s144, %s146
      %p153 = scmp.eq.s32.totalorder %s31, 1
      %p154 = por %p152, %p153
      %p155 = scmp.ne.s32.totalorder %s146, %s147
      %p156 = scmp.eq.s32.totalorder %s31, 0
      %p157 = por %p155, %p156
      %p158 = scmp.ne.s32.totalorder %s146, %s147
      %p159 = scmp.eq.s32.totalorder %s32, 1
      %p160 = por %p158, %p159
      %p162 = scmp.ne.s32.totalorder %s147, %s161
      %p163 = scmp.eq.s32.totalorder %s32, 0
      %p164 = por %p162, %p163
      %s166 = sadd.s32 %s165, 1
      %p169 = scmp.eq.s32.totalorder %s26, 1
      %p170 = scmp.ne.s32.totalorder %s165, %s167
      %p171 = scmp.eq.s32.totalorder %s26, 0
      %p172 = por %p170, %p171
      %p173 = scmp.ne.s32.totalorder %s165, %s167
      %p174 = scmp.eq.s32.totalorder %s31, 1
      %p175 = por %p173, %p174
      %p176 = scmp.ne.s32.totalorder %s167, %s168
      %p177 = scmp.eq.s32.totalorder %s31, 0
      %p178 = por %p176, %p177
      %p179 = scmp.ne.s32.totalorder %s167, %s168
      %p180 = scmp.eq.s32.totalorder %s32, 1
      %p181 = por %p179, %p180
      %p183 = scmp.ne.s32.totalorder %s168, %s182
      %p184 = scmp.eq.s32.totalorder %s32, 0
      %p185 = por %p183, %p184
      %s187 = sadd.s32 %s186, 1
      %p190 = scmp.eq.s32.totalorder %s26, 1
      %p191 = scmp.ne.s32.totalorder %s186, %s188
      %p192 = scmp.eq.s32.totalorder %s26, 0
      %p193 = por %p191, %p192
      %p194 = scmp.ne.s32.totalorder %s186, %s188
      %p195 = scmp.eq.s32.totalorder %s31, 1
      %p196 = por %p194, %p195
      %p197 = scmp.ne.s32.totalorder %s188, %s189
      %p198 = scmp.eq.s32.totalorder %s31, 0
      %p199 = por %p197, %p198
      %p200 = scmp.ne.s32.totalorder %s188, %s189
      %p201 = scmp.eq.s32.totalorder %s32, 1
      %p202 = por %p200, %p201
      %p204 = scmp.ne.s32.totalorder %s189, %s203
      %p205 = scmp.eq.s32.totalorder %s32, 0
      %p206 = por %p204, %p205
      %s208 = sadd.s32 %s207, 1
      %p211 = scmp.eq.s32.totalorder %s26, 1
      %p212 = scmp.ne.s32.totalorder %s207, %s209
      %p213 = scmp.eq.s32.totalorder %s26, 0
      %p214 = por %p212, %p213
      %p215 = scmp.ne.s32.totalorder %s207, %s209
      %p216 = scmp.eq.s32.totalorder %s31, 1
      %p217 = por %p215, %p216
      %p218 = scmp.ne.s32.totalorder %s209, %s210
      %p219 = scmp.eq.s32.totalorder %s31, 0
      %p220 = por %p218, %p219
      %p221 = scmp.ne.s32.totalorder %s209, %s210
      %p222 = scmp.eq.s32.totalorder %s32, 1
      %p223 = por %p221, %p222
      %p225 = scmp.ne.s32.totalorder %s210, %s224
      %p226 = scmp.eq.s32.totalorder %s32, 0
      %p227 = por %p225, %p226
      %s229 = sadd.s32 %s228, 1
      %p232 = scmp.eq.s32.totalorder %s26, 1
      %p233 = scmp.ne.s32.totalorder %s228, %s230
      %p234 = scmp.eq.s32.totalorder %s26, 0
      %p235 = por %p233, %p234
      %p236 = scmp.ne.s32.totalorder %s228, %s230
      %p237 = scmp.eq.s32.totalorder %s31, 1
      %p238 = por %p236, %p237
      %p239 = scmp.ne.s32.totalorder %s230, %s231
      %p240 = scmp.eq.s32.totalorder %s31, 0
      %p241 = por %p239, %p240
      %p242 = scmp.ne.s32.totalorder %s230, %s231
      %p243 = scmp.eq.s32.totalorder %s32, 1
      %p244 = por %p242, %p243
      %p246 = scmp.ne.s32.totalorder %s231, %s245
      %p247 = scmp.eq.s32.totalorder %s32, 0
      %p248 = por %p246, %p247
      %s250 = sadd.s32 %s249, 1
      %p253 = scmp.eq.s32.totalorder %s26, 1
      %p254 = scmp.ne.s32.totalorder %s249, %s251
      %p255 = scmp.eq.s32.totalorder %s26, 0
      %p256 = por %p254, %p255
      %p257 = scmp.ne.s32.totalorder %s249, %s251
      %p258 = scmp.eq.s32.totalorder %s31, 1
      %p259 = por %p257, %p258
      %p260 = scmp.ne.s32.totalorder %s251, %s252
      %p261 = scmp.eq.s32.totalorder %s31, 0
      %p262 = por %p260, %p261
      %p263 = scmp.ne.s32.totalorder %s251, %s252
      %p264 = scmp.eq.s32.totalorder %s32, 1
      %p265 = por %p263, %p264
      %p267 = scmp.ne.s32.totalorder %s252, %s266
      %p268 = scmp.eq.s32.totalorder %s32, 0
      %p269 = por %p267, %p268
      %s270 = ssub.s32 %s26, %s33
      %p271 = scmp.eq.s32.totalorder %s270, 0
      %s273 = sadd.s32 %s272, 1
      %s274 = scalar_select %p271, %s272, %s273
      %p277 = pneg %p271
      %p278 = scmp.eq.s32.totalorder %s26, 1
      %p279 = por %p277, %p278
      %p280 = scmp.ne.s32.totalorder %s272, %s275
      %p281 = scmp.eq.s32.totalorder %s26, 0
      %p282 = por %p280, %p281
      %p283 = scmp.ne.s32.totalorder %s272, %s275
      %p284 = scmp.eq.s32.totalorder %s31, 1
      %p285 = por %p283, %p284
      %p286 = scmp.ne.s32.totalorder %s275, %s276
      %p287 = scmp.eq.s32.totalorder %s31, 0
      %p288 = por %p286, %p287
      %p289 = scmp.ne.s32.totalorder %s275, %s276
      %p290 = scmp.eq.s32.totalorder %s32, 1
      %p291 = por %p289, %p290
      %p293 = scmp.ne.s32.totalorder %s276, %s292
      %p294 = scmp.eq.s32.totalorder %s32, 0
      %p295 = por %p293, %p294
      %p296 = scmp.le.s32.totalorder 1, %s26
      %p297 = scmp.lt.s32.totalorder %s26, 3
      %p298 = pnand %p296, %p297
      %p299 = pneg %p298
      // Predicated region
      $region9: #{tpu_custom_call.1} parent=5 // pred_check
        _
      $region10: #{tpu_custom_call.1} parent=5 // pred_check_branch
        %301 = sbr.rel (%p298) target = $region12
      $region11: #{tpu_custom_call.1} parent=5 // pred_region
        %s302 = ssub.s32 %s26, 1
        // Predicated region
        $region13: #{tpu_custom_call.1} parent=11 // pred_check
          %p303 = pneg %p73
        $region14: #{tpu_custom_call.1} parent=11 // pred_check_branch
          %305 = sbr.rel (%p303) target = $region16
        $region15: #{tpu_custom_call.1} parent=11 // pred_region
          %s307 = ssub.s32 768, 768
          %308 = vsyncadd [#allocation7], %s307
          %s309 = sshll.u32 [#allocation6], 4
          %s310 = int_to_ptr.vmem [resolvable:$true] %s309
          %315 = dma.hbm_to_vmem [thread:$0]  %s1, 768, %s310, [#allocation7], 64, 64, 4
        $region16: #{tpu_custom_call.1} parent=11 // pred_fallthru
          _
        // Predicated region
        $region17: #{tpu_custom_call.1} parent=11 // pred_check
          %p316 = pneg %p94
        $region18: #{tpu_custom_call.1} parent=11 // pred_check_branch
          %318 = sbr.rel (%p316) target = $region20
        $region19: #{tpu_custom_call.1} parent=11 // pred_region
          _
        $region20: #{tpu_custom_call.1} parent=11 // pred_fallthru
          _
        // Predicated region
        $region21: #{tpu_custom_call.1} parent=11 // pred_check
          %p319 = pneg %p115
        $region22: #{tpu_custom_call.1} parent=11 // pred_check_branch
          %321 = sbr.rel (%p319) target = $region24
        $region23: #{tpu_custom_call.1} parent=11 // pred_region
          _
        $region24: #{tpu_custom_call.1} parent=11 // pred_fallthru
          _
        // Predicated region
        $region25: #{tpu_custom_call.1} parent=11 // pred_check
          %p322 = pneg %p136
        $region26: #{tpu_custom_call.1} parent=11 // pred_check_branch
          %324 = sbr.rel (%p322) target = $region28
        $region27: #{tpu_custom_call.1} parent=11 // pred_region
          _
        $region28: #{tpu_custom_call.1} parent=11 // pred_fallthru
          _
        // Predicated region
        $region29: #{tpu_custom_call.1} parent=11 // pred_check
          %p325 = pneg %p157
        $region30: #{tpu_custom_call.1} parent=11 // pred_check_branch
          %327 = sbr.rel (%p325) target = $region32
        $region31: #{tpu_custom_call.1} parent=11 // pred_region
          %s329 = ssub.s32 768, 768
          %330 = vsyncadd [#allocation7], %s329
          %s331 = sshll.u32 [#allocation8], 4
          %s332 = int_to_ptr.vmem [resolvable:$true] %s331
          %337 = dma.hbm_to_vmem [thread:$0]  %s5, 768, %s332, [#allocation7], 64, 64, 4
        $region32: #{tpu_custom_call.1} parent=11 // pred_fallthru
          _
        // Predicated region
        $region33: #{tpu_custom_call.1} parent=11 // pred_check
          %p338 = pneg %p178
        $region34: #{tpu_custom_call.1} parent=11 // pred_check_branch
          %340 = sbr.rel (%p338) target = $region36
        $region35: #{tpu_custom_call.1} parent=11 // pred_region
          _
        $region36: #{tpu_custom_call.1} parent=11 // pred_fallthru
          _
        // Predicated region
        $region37: #{tpu_custom_call.1} parent=11 // pred_check
          %p341 = pneg %p199
        $region38: #{tpu_custom_call.1} parent=11 // pred_check_branch
          %343 = sbr.rel (%p341) target = $region40
        $region39: #{tpu_custom_call.1} parent=11 // pred_region
          _
        $region40: #{tpu_custom_call.1} parent=11 // pred_fallthru
          _
        // Predicated region
        $region41: #{tpu_custom_call.1} parent=11 // pred_check
          %p344 = pneg %p220
        $region42: #{tpu_custom_call.1} parent=11 // pred_check_branch
          %346 = sbr.rel (%p344) target = $region44
        $region43: #{tpu_custom_call.1} parent=11 // pred_region
          _
        $region44: #{tpu_custom_call.1} parent=11 // pred_fallthru
          _
        // Predicated region
        $region45: #{tpu_custom_call.1} parent=11 // pred_check
          %p347 = pneg %p241
        $region46: #{tpu_custom_call.1} parent=11 // pred_check_branch
          %349 = sbr.rel (%p347) target = $region48
        $region47: #{tpu_custom_call.1} parent=11 // pred_region
          _
        $region48: #{tpu_custom_call.1} parent=11 // pred_fallthru
          _
        // Predicated region
        $region49: #{tpu_custom_call.1} parent=11 // pred_check
          %p350 = pneg %p262
        $region50: #{tpu_custom_call.1} parent=11 // pred_check_branch
          %352 = sbr.rel (%p350) target = $region52
        $region51: #{tpu_custom_call.1} parent=11 // pred_region
          _
        $region52: #{tpu_custom_call.1} parent=11 // pred_fallthru
          _
      $region12: #{tpu_custom_call.1} parent=5 // pred_fallthru
        _
      %p353 = scmp.lt.s32.totalorder %s26, 2
      // Predicated region
      $region53: #{tpu_custom_call.1} parent=5 // pred_check
        %p354 = pneg %p353
      $region54: #{tpu_custom_call.1} parent=5 // pred_check_branch
        %356 = sbr.rel (%p354) target = $region56
      $region55: #{tpu_custom_call.1} parent=5 // pred_region
        // Predicated region
        $region57: #{tpu_custom_call.1} parent=55 // pred_check
          %p357 = pneg %p46
        $region58: #{tpu_custom_call.1} parent=55 // pred_check_branch
          %359 = sbr.rel (%p357) target = $region60
        $region59: #{tpu_custom_call.1} parent=55 // pred_region
          %s360 = sand.u32 %s36, 1
          %s361 = scalar_lea.sflag [#allocation4], %s360
          %s362 = sand.u32 %s36, 1
          %s363 = smul.addr %s362, 256
          %s364 = scalar_lea.vmem [#allocation3], %s363
          %s365 = smul.u32 8, %s26
          %s367 = ssub.s32 4096, 4096
          %368 = vsyncadd %s361, %s367
          %s369 = smul.addr %s365, 4
          %s370 = smul.addr %s369, 128
          %s371 = scalar_lea.hbm %s0, %s370
          %s372 = sshll.u32 %s364, 4
          %s373 = int_to_ptr.vmem [resolvable:$true] %s372
          %378 = dma.hbm_to_vmem [thread:$0]  %s371, 4096, %s373, %s361, 128, 128, 8
        $region60: #{tpu_custom_call.1} parent=55 // pred_fallthru
          _
      $region56: #{tpu_custom_call.1} parent=5 // pred_fallthru
        _
      %p379 = scmp.le.s32.totalorder 1, %s26
      %p380 = scmp.lt.s32.totalorder %s26, 3
      %p381 = pnand %p379, %p380
      %p382 = pneg %p381
      // Predicated region
      $region61: #{tpu_custom_call.1} parent=5 // pred_check
        _
      $region62: #{tpu_custom_call.1} parent=5 // pred_check_branch
        %384 = sbr.rel (%p381) target = $region64
      $region63: #{tpu_custom_call.1} parent=5 // pred_region
        %s385 = ssub.s32 %s26, 1
        %s386 = sand.u32 %s39, 1
        %s387 = scalar_lea.sflag [#allocation4], %s386
        %s388 = sand.u32 %s39, 1
        %s389 = smul.addr %s388, 256
        %s390 = scalar_lea.vmem [#allocation3], %s389
        // Predicated region
        $region65: #{tpu_custom_call.1} parent=63 // pred_check
          %p391 = pneg %p52
        $region66: #{tpu_custom_call.1} parent=63 // pred_check_branch
          %393 = sbr.rel (%p391) target = $region68
        $region67: #{tpu_custom_call.1} parent=63 // pred_region
          %394 = dma.done %s387, 4096
        $region68: #{tpu_custom_call.1} parent=63 // pred_fallthru
          _
        // Predicated region
        $region69: #{tpu_custom_call.1} parent=63 // pred_check
          %p395 = pneg %p73
        $region70: #{tpu_custom_call.1} parent=63 // pred_check_branch
          %397 = sbr.rel (%p395) target = $region72
        $region71: #{tpu_custom_call.1} parent=63 // pred_region
          %398 = dma.done [#allocation7], 768
        $region72: #{tpu_custom_call.1} parent=63 // pred_fallthru
          _
        // Predicated region
        $region73: #{tpu_custom_call.1} parent=63 // pred_check
          %p399 = pneg %p157
        $region74: #{tpu_custom_call.1} parent=63 // pred_check_branch
          %401 = sbr.rel (%p399) target = $region76
        $region75: #{tpu_custom_call.1} parent=63 // pred_region
          %402 = dma.done [#allocation7], 768
        $region76: #{tpu_custom_call.1} parent=63 // pred_fallthru
          _
        %s403 = sand.u32 %s39, 1
        %s404 = scalar_lea.sflag [#allocation4], %s403
        %s405 = sand.u32 %s39, 1
        %s406 = smul.addr %s405, 256
        %s407 = scalar_lea.vmem [#allocation3], %s406
        %p408 = pneg %p52
        %p409 = pneg %p49
        %p410 = pneg %p73
        %p411 = pneg %p70
        %p412 = pneg %p94
        %p413 = pneg %p91
        %p414 = pneg %p115
        %p415 = pneg %p112
        %p416 = pneg %p136
        %p417 = pneg %p133
        %p418 = pneg %p157
        %p419 = pneg %p154
        %p420 = pneg %p178
        %p421 = pneg %p175
        %p422 = pneg %p199
        %p423 = pneg %p196
        %p424 = pneg %p220
        %p425 = pneg %p217
        %p426 = pneg %p241
        %p427 = pneg %p238
        %p428 = pneg %p262
        %p429 = pneg %p259
        %p430 = pneg %p288
        %p431 = pneg %p285
        %s432 = sand.u32 %s275, 1
        %s433 = scalar_lea.sflag [#allocation5], %s432
        %s434 = sand.u32 %s275, 1
        %s435 = smul.addr %s434, 8
        %s436 = scalar_lea.vmem [#allocation9], %s435
        %s437 = smul.u32 8, %s31
        %v439 = vlaneseq
        %v440 = vshrl.u32 %v439, 7
        %v441 = vadd.s32 %v440, 8
        %v442 = vadd.s32 %v440, 16
        %v443 = vadd.s32 %v440, 24
        %vm444 = vcmp.gt.s32.totalorder %v440, 0
        %vm445 = vcmp.gt.s32.totalorder %v441, 0
        %vm446 = vcmp.gt.s32.totalorder %v442, 0
        %vm447 = vcmp.gt.s32.totalorder %v443, 0
        %v448 = vsel %vm444, 1, 0
        %v449 = vsel %vm445, 1, 0
        %v450 = vsel %vm446, 1, 0
        %v451 = vsel %vm447, 1, 0
        %v452 = vcvt.s32.f32 %v448
        %v453 = vcvt.s32.f32 %v449
        %v454 = vcvt.s32.f32 %v450
        %v455 = vcvt.s32.f32 %v451
        %vm456 = vcmp.lt.s32.totalorder %v440, 31
        %vm457 = vcmp.lt.s32.totalorder %v441, 31
        %vm458 = vcmp.lt.s32.totalorder %v442, 31
        %vm459 = vcmp.lt.s32.totalorder %v443, 31
        %v460 = vsel %vm456, 1, 0
        %v461 = vsel %vm457, 1, 0
        %v462 = vsel %vm458, 1, 0
        %v463 = vsel %vm459, 1, 0
        %v464 = vcvt.s32.f32 %v460
        %v465 = vcvt.s32.f32 %v461
        %v466 = vcvt.s32.f32 %v462
        %v467 = vcvt.s32.f32 %v463
        %v468 = vld [vmem:[%s390] sm:$0xff]
        %v469 = vld [vmem:[%s390 + $0x8] sm:$0xff]
        %v470 = vld [vmem:[%s390 + $0x10] sm:$0xff]
        %v471 = vld [vmem:[%s390 + $0x18] sm:$0xff]
        %v472 = vld [vmem:[%s390 + $0x20] sm:$0xff]
        %v473 = vld [vmem:[%s390 + $0x28] sm:$0xff]
        %v474 = vld [vmem:[%s390 + $0x30] sm:$0xff]
        %v475 = vld [vmem:[%s390 + $0x38] sm:$0xff]
        %v476 = vld [vmem:[%s390 + $0x40] sm:$0xff]
        %v477 = vld [vmem:[%s390 + $0x48] sm:$0xff]
        %v478 = vld [vmem:[%s390 + $0x50] sm:$0xff]
        %v479 = vld [vmem:[%s390 + $0x58] sm:$0xff]
        %v480 = vld [vmem:[%s390 + $0x60] sm:$0xff]
        %v481 = vld [vmem:[%s390 + $0x68] sm:$0xff]
        %v482 = vld [vmem:[%s390 + $0x70] sm:$0xff]
        %v483 = vld [vmem:[%s390 + $0x78] sm:$0xff]
        %v484 = vld [vmem:[%s390 + $0x80] sm:$0xff]
        %v485 = vld [vmem:[%s390 + $0x88] sm:$0xff]
        %v486 = vld [vmem:[%s390 + $0x90] sm:$0xff]
        %v487 = vld [vmem:[%s390 + $0x98] sm:$0xff]
        %v488 = vld [vmem:[%s390 + $0xa0] sm:$0xff]
        %v489 = vld [vmem:[%s390 + $0xa8] sm:$0xff]
        %v490 = vld [vmem:[%s390 + $0xb0] sm:$0xff]
        %v491 = vld [vmem:[%s390 + $0xb8] sm:$0xff]
        %v492 = vld [vmem:[%s390 + $0xc0] sm:$0xff]
        %v493 = vld [vmem:[%s390 + $0xc8] sm:$0xff]
        %v494 = vld [vmem:[%s390 + $0xd0] sm:$0xff]
        %v495 = vld [vmem:[%s390 + $0xd8] sm:$0xff]
        %v496 = vld [vmem:[%s390 + $0xe0] sm:$0xff]
        %v497 = vld [vmem:[%s390 + $0xe8] sm:$0xff]
        %v498 = vld [vmem:[%s390 + $0xf0] sm:$0xff]
        %v499 = vld [vmem:[%s390 + $0xf8] sm:$0xff]
        %v500 = vrot.slane %v468, 7
        %v501 = vrot.slane %v469, 7
        %v502 = vrot.slane %v470, 7
        %v503 = vrot.slane %v471, 7
        %v504 = vrot.slane %v472, 7
        %v505 = vrot.slane %v473, 7
        %v506 = vrot.slane %v474, 7
        %v507 = vrot.slane %v475, 7
        %v508 = vrot.slane %v476, 7
        %v509 = vrot.slane %v477, 7
        %v510 = vrot.slane %v478, 7
        %v511 = vrot.slane %v479, 7
        %v512 = vrot.slane %v480, 7
        %v513 = vrot.slane %v481, 7
        %v514 = vrot.slane %v482, 7
        %v515 = vrot.slane %v483, 7
        %v516 = vrot.slane %v484, 7
        %v517 = vrot.slane %v485, 7
        %v518 = vrot.slane %v486, 7
        %v519 = vrot.slane %v487, 7
        %v520 = vrot.slane %v488, 7
        %v521 = vrot.slane %v489, 7
        %v522 = vrot.slane %v490, 7
        %v523 = vrot.slane %v491, 7
        %v524 = vrot.slane %v492, 7
        %v525 = vrot.slane %v493, 7
        %v526 = vrot.slane %v494, 7
        %v527 = vrot.slane %v495, 7
        %v528 = vrot.slane %v496, 7
        %v529 = vrot.slane %v497, 7
        %v530 = vrot.slane %v498, 7
        %v531 = vrot.slane %v499, 7
        %vm532 = vcmp.lt.s32.totalorder %v440, 1
        %v533 = vsel %vm532, %v530, %v531
        %v534 = vsel %vm532, %v529, %v530
        %v535 = vsel %vm532, %v528, %v529
        %v536 = vsel %vm532, %v527, %v528
        %v537 = vsel %vm532, %v526, %v527
        %v538 = vsel %vm532, %v525, %v526
        %v539 = vsel %vm532, %v524, %v525
        %v540 = vsel %vm532, %v523, %v524
        %v541 = vsel %vm532, %v522, %v523
        %v542 = vsel %vm532, %v521, %v522
        %v543 = vsel %vm532, %v520, %v521
        %v544 = vsel %vm532, %v519, %v520
        %v545 = vsel %vm532, %v518, %v519
        %v546 = vsel %vm532, %v517, %v518
        %v547 = vsel %vm532, %v516, %v517
        %v548 = vsel %vm532, %v515, %v516
        %v549 = vsel %vm532, %v514, %v515
        %v550 = vsel %vm532, %v513, %v514
        %v551 = vsel %vm532, %v512, %v513
        %v552 = vsel %vm532, %v511, %v512
        %v553 = vsel %vm532, %v510, %v511
        %v554 = vsel %vm532, %v509, %v510
        %v555 = vsel %vm532, %v508, %v509
        %v556 = vsel %vm532, %v507, %v508
        %v557 = vsel %vm532, %v506, %v507
        %v558 = vsel %vm532, %v505, %v506
        %v559 = vsel %vm532, %v504, %v505
        %v560 = vsel %vm532, %v503, %v504
        %v561 = vsel %vm532, %v502, %v503
        %v562 = vsel %vm532, %v501, %v502
        %v563 = vsel %vm532, %v500, %v501
        %v564 = vsel %vm532, %v531, %v500
        %v565 = vmul.f32 %v564, %v452
        %v566 = vmul.f32 %v563, %v453
        %v567 = vmul.f32 %v562, %v454
        %v568 = vmul.f32 %v561, %v455
        %v569 = vmul.f32 %v560, %v452
        %v570 = vmul.f32 %v559, %v453
        %v571 = vmul.f32 %v558, %v454
        %v572 = vmul.f32 %v557, %v455
        %v573 = vmul.f32 %v556, %v452
        %v574 = vmul.f32 %v555, %v453
        %v575 = vmul.f32 %v554, %v454
        %v576 = vmul.f32 %v553, %v455
        %v577 = vmul.f32 %v552, %v452
        %v578 = vmul.f32 %v551, %v453
        %v579 = vmul.f32 %v550, %v454
        %v580 = vmul.f32 %v549, %v455
        %v581 = vmul.f32 %v548, %v452
        %v582 = vmul.f32 %v547, %v453
        %v583 = vmul.f32 %v546, %v454
        %v584 = vmul.f32 %v545, %v455
        %v585 = vmul.f32 %v544, %v452
        %v586 = vmul.f32 %v543, %v453
        %v587 = vmul.f32 %v542, %v454
        %v588 = vmul.f32 %v541, %v455
        %v589 = vmul.f32 %v540, %v452
        %v590 = vmul.f32 %v539, %v453
        %v591 = vmul.f32 %v538, %v454
        %v592 = vmul.f32 %v537, %v455
        %v593 = vmul.f32 %v536, %v452
        %v594 = vmul.f32 %v535, %v453
        %v595 = vmul.f32 %v534, %v454
        %v596 = vmul.f32 %v533, %v455
        %v597 = vpack.c.bf16 %v566, %v565
        %v598 = vpack.c.bf16 %v568, %v567
        %v599 = vpack.c.bf16 %v570, %v569
        %v600 = vpack.c.bf16 %v572, %v571
        %v601 = vpack.c.bf16 %v574, %v573
        %v602 = vpack.c.bf16 %v576, %v575
        %v603 = vpack.c.bf16 %v578, %v577
        %v604 = vpack.c.bf16 %v580, %v579
        %v605 = vpack.c.bf16 %v582, %v581
        %v606 = vpack.c.bf16 %v584, %v583
        %v607 = vpack.c.bf16 %v586, %v585
        %v608 = vpack.c.bf16 %v588, %v587
        %v609 = vpack.c.bf16 %v590, %v589
        %v610 = vpack.c.bf16 %v592, %v591
        %v611 = vpack.c.bf16 %v594, %v593
        %v612 = vpack.c.bf16 %v596, %v595
        %v613 = vpack.c.bf16 %v469, %v468
        %v614 = vpack.c.bf16 %v471, %v470
        %v615 = vpack.c.bf16 %v473, %v472
        %v616 = vpack.c.bf16 %v475, %v474
        %v617 = vpack.c.bf16 %v477, %v476
        %v618 = vpack.c.bf16 %v479, %v478
        %v619 = vpack.c.bf16 %v481, %v480
        %v620 = vpack.c.bf16 %v483, %v482
        %v621 = vpack.c.bf16 %v485, %v484
        %v622 = vpack.c.bf16 %v487, %v486
        %v623 = vpack.c.bf16 %v489, %v488
        %v624 = vpack.c.bf16 %v491, %v490
        %v625 = vpack.c.bf16 %v493, %v492
        %v626 = vpack.c.bf16 %v495, %v494
        %v627 = vpack.c.bf16 %v497, %v496
        %v628 = vpack.c.bf16 %v499, %v498
        %v629 = vrot.slane %v468, 1
        %v630 = vrot.slane %v469, 1
        %v631 = vrot.slane %v470, 1
        %v632 = vrot.slane %v471, 1
        %v633 = vrot.slane %v472, 1
        %v634 = vrot.slane %v473, 1
        %v635 = vrot.slane %v474, 1
        %v636 = vrot.slane %v475, 1
        %v637 = vrot.slane %v476, 1
        %v638 = vrot.slane %v477, 1
        %v639 = vrot.slane %v478, 1
        %v640 = vrot.slane %v479, 1
        %v641 = vrot.slane %v480, 1
        %v642 = vrot.slane %v481, 1
        %v643 = vrot.slane %v482, 1
        %v644 = vrot.slane %v483, 1
        %v645 = vrot.slane %v484, 1
        %v646 = vrot.slane %v485, 1
        %v647 = vrot.slane %v486, 1
        %v648 = vrot.slane %v487, 1
        %v649 = vrot.slane %v488, 1
        %v650 = vrot.slane %v489, 1
        %v651 = vrot.slane %v490, 1
        %v652 = vrot.slane %v491, 1
        %v653 = vrot.slane %v492, 1
        %v654 = vrot.slane %v493, 1
        %v655 = vrot.slane %v494, 1
        %v656 = vrot.slane %v495, 1
        %v657 = vrot.slane %v496, 1
        %v658 = vrot.slane %v497, 1
        %v659 = vrot.slane %v498, 1
        %v660 = vrot.slane %v499, 1
        %vm661 = vcmp.lt.s32.totalorder %v440, 7
        %v662 = vsel %vm661, %v659, %v660
        %v663 = vsel %vm661, %v658, %v659
        %v664 = vsel %vm661, %v657, %v658
        %v665 = vsel %vm661, %v656, %v657
        %v666 = vsel %vm661, %v655, %v656
        %v667 = vsel %vm661, %v654, %v655
        %v668 = vsel %vm661, %v653, %v654
        %v669 = vsel %vm661, %v652, %v653
        %v670 = vsel %vm661, %v651, %v652
        %v671 = vsel %vm661, %v650, %v651
        %v672 = vsel %vm661, %v649, %v650
        %v673 = vsel %vm661, %v648, %v649
        %v674 = vsel %vm661, %v647, %v648
        %v675 = vsel %vm661, %v646, %v647
        %v676 = vsel %vm661, %v645, %v646
        %v677 = vsel %vm661, %v644, %v645
        %v678 = vsel %vm661, %v643, %v644
        %v679 = vsel %vm661, %v642, %v643
        %v680 = vsel %vm661, %v641, %v642
        %v681 = vsel %vm661, %v640, %v641
        %v682 = vsel %vm661, %v639, %v640
        %v683 = vsel %vm661, %v638, %v639
        %v684 = vsel %vm661, %v637, %v638
        %v685 = vsel %vm661, %v636, %v637
        %v686 = vsel %vm661, %v635, %v636
        %v687 = vsel %vm661, %v634, %v635
        %v688 = vsel %vm661, %v633, %v634
        %v689 = vsel %vm661, %v632, %v633
        %v690 = vsel %vm661, %v631, %v632
        %v691 = vsel %vm661, %v630, %v631
        %v692 = vsel %vm661, %v629, %v630
        %v693 = vsel %vm661, %v660, %v629
        %v694 = vmul.f32 %v692, %v464
        %v695 = vmul.f32 %v691, %v465
        %v696 = vmul.f32 %v690, %v466
        %v697 = vmul.f32 %v689, %v467
        %v698 = vmul.f32 %v688, %v464
        %v699 = vmul.f32 %v687, %v465
        %v700 = vmul.f32 %v686, %v466
        %v701 = vmul.f32 %v685, %v467
        %v702 = vmul.f32 %v684, %v464
        %v703 = vmul.f32 %v683, %v465
        %v704 = vmul.f32 %v682, %v466
        %v705 = vmul.f32 %v681, %v467
        %v706 = vmul.f32 %v680, %v464
        %v707 = vmul.f32 %v679, %v465
        %v708 = vmul.f32 %v678, %v466
        %v709 = vmul.f32 %v677, %v467
        %v710 = vmul.f32 %v676, %v464
        %v711 = vmul.f32 %v675, %v465
        %v712 = vmul.f32 %v674, %v466
        %v713 = vmul.f32 %v673, %v467
        %v714 = vmul.f32 %v672, %v464
        %v715 = vmul.f32 %v671, %v465
        %v716 = vmul.f32 %v670, %v466
        %v717 = vmul.f32 %v669, %v467
        %v718 = vmul.f32 %v668, %v464
        %v719 = vmul.f32 %v667, %v465
        %v720 = vmul.f32 %v666, %v466
        %v721 = vmul.f32 %v665, %v467
        %v722 = vmul.f32 %v664, %v464
        %v723 = vmul.f32 %v663, %v465
        %v724 = vmul.f32 %v662, %v466
        %v725 = vmul.f32 %v693, %v467
        %v726 = vpack.c.bf16 %v695, %v694
        %v727 = vpack.c.bf16 %v697, %v696
        %v728 = vpack.c.bf16 %v699, %v698
        %v729 = vpack.c.bf16 %v701, %v700
        %v730 = vpack.c.bf16 %v703, %v702
        %v731 = vpack.c.bf16 %v705, %v704
        %v732 = vpack.c.bf16 %v707, %v706
        %v733 = vpack.c.bf16 %v709, %v708
        %v734 = vpack.c.bf16 %v711, %v710
        %v735 = vpack.c.bf16 %v713, %v712
        %v736 = vpack.c.bf16 %v715, %v714
        %v737 = vpack.c.bf16 %v717, %v716
        %v738 = vpack.c.bf16 %v719, %v718
        %v739 = vpack.c.bf16 %v721, %v720
        %v740 = vpack.c.bf16 %v723, %v722
        %v741 = vpack.c.bf16 %v725, %v724
        %v742 = vld [vmem:[#allocation6] sm:$0xf]
        %v743 = vld [vmem:[#allocation6 + $0x4] sm:$0xf]
        %v744 = vld [vmem:[#allocation6 + $0x8] sm:$0xf]
        %v745 = vld [vmem:[#allocation6 + $0xc] sm:$0xf]
        %s746 = scalar_lea.vmem [#allocation6], 16
        %v747 = vld [vmem:[%s746] sm:$0xf]
        %v748 = vld [vmem:[%s746 + $0x4] sm:$0xf]
        %v749 = vld [vmem:[%s746 + $0x8] sm:$0xf]
        %v750 = vld [vmem:[%s746 + $0xc] sm:$0xf]
        %v755 = vunpack.c.l.b16 %v747
        %v756 = vunpack.c.l.b16 %v748
        %v757 = vunpack.c.l.b16 %v749
        %v758 = vunpack.c.l.b16 %v750
        %v759 = vpack.c.b16 %v756, %v755
        %v760 = vpack.c.b16 %v758, %v757
        %vm763 = vcmask 261120
        %v765 = vsel %vm763, %v613, 0
        %v768 = vsel %vm763, %v614, 0
        %v771 = vsel %vm763, %v615, 0
        %v774 = vsel %vm763, %v616, 0
        %v777 = vsel %vm763, %v617, 0
        %v780 = vsel %vm763, %v618, 0
        %v783 = vsel %vm763, %v619, 0
        %v786 = vsel %vm763, %v620, 0
        %v789 = vsel %vm763, %v621, 0
        %v792 = vsel %vm763, %v622, 0
        %v795 = vsel %vm763, %v623, 0
        %v798 = vsel %vm763, %v624, 0
        %v801 = vsel %vm763, %v625, 0
        %v804 = vsel %vm763, %v626, 0
        %v807 = vsel %vm763, %v627, 0
        %v810 = vsel %vm763, %v628, 0
        %812 = vmatprep.subr.bf16.mxu0 0
        %813 = vmatpush1.bf16.msra.mxu0 0
        %814 = vmatprep.subr.bf16.mxu0 0
        %815 = vmatpush1.bf16.msra.mxu0 0
        %816 = vmatprep.subr.bf16.mxu0 0
        %817 = vmatpush1.bf16.msra.mxu0 0
        %818 = vmatprep.subr.bf16.mxu0 0
        %819 = vmatpush1.bf16.msra.mxu0 0
        %820 = vmatprep.subr.bf16.mxu0 0
        %821 = vmatpush1.bf16.msra.mxu0 0
        %822 = vmatprep.subr.bf16.mxu0 0
        %823 = vmatpush1.bf16.msra.mxu0 0
        %824 = vmatprep.subr.bf16.mxu0 0
        %825 = vmatpush1.bf16.msra.mxu0 %v760
        %826 = vmatprep.subr.bf16.mxu0 0
        %827 = vmatpush1.bf16.msra.mxu0 %v759
        %828 = vmatprep.subr.bf16.mxu0 0
        %829 = vmatpush2.bf16.msra.mxu0 0
        %830 = vmatprep.subr.bf16.mxu0 0
        %831 = vmatpush2.bf16.msra.mxu0 0
        %832 = vmatprep.subr.bf16.mxu0 0
        %833 = vmatpush2.bf16.msra.mxu0 0
        %834 = vmatprep.subr.bf16.mxu0 0
        %835 = vmatpush2.bf16.msra.mxu0 0
        %836 = vmatprep.subr.bf16.mxu0 0
        %837 = vmatpush2.bf16.msra.mxu0 0
        %838 = vmatprep.subr.bf16.mxu0 0
        %839 = vmatpush2.bf16.msra.mxu0 0
        %840 = vmatprep.subr.bf16.mxu0 0
        %841 = vmatpush2.bf16.msra.mxu0 0
        %842 = vmatprep.subr.bf16.mxu0 0
        %843 = vmatpush2.bf16.msra.mxu0 0
        %844 = vmatprep.mubr.bf16.mxu0 0
        %845 = vmatmul.mubr.bf16.gmra.mxu0 %v765
        %v846 = vpop.f32.mrf.mxu0
        %v847 = vadd.f32 0.0, %v846
        %v848 = vpop.f32.mrf.mxu0
        %v849 = vpop.f32.mrf.mxu0
        %v850 = vadd.f32 0.0, %v849
        %v851 = vpop.f32.mrf.mxu0
        %852 = vmatprep.mubr.bf16.mxu0 0
        %853 = vmatmul.mubr.bf16.gmra.mxu0 %v768
        %v854 = vpop.f32.mrf.mxu0
        %v855 = vadd.f32 0.0, %v854
        %v856 = vpop.f32.mrf.mxu0
        %v857 = vpop.f32.mrf.mxu0
        %v858 = vadd.f32 0.0, %v857
        %v859 = vpop.f32.mrf.mxu0
        %860 = vmatprep.mubr.bf16.mxu0 0
        %861 = vmatmul.mubr.bf16.gmra.mxu0 %v771
        %v862 = vpop.f32.mrf.mxu0
        %v863 = vadd.f32 0.0, %v862
        %v864 = vpop.f32.mrf.mxu0
        %v865 = vpop.f32.mrf.mxu0
        %v866 = vadd.f32 0.0, %v865
        %v867 = vpop.f32.mrf.mxu0
        %868 = vmatprep.mubr.bf16.mxu0 0
        %869 = vmatmul.mubr.bf16.gmra.mxu0 %v774
        %v870 = vpop.f32.mrf.mxu0
        %v871 = vadd.f32 0.0, %v870
        %v872 = vpop.f32.mrf.mxu0
        %v873 = vpop.f32.mrf.mxu0
        %v874 = vadd.f32 0.0, %v873
        %v875 = vpop.f32.mrf.mxu0
        %876 = vmatprep.mubr.bf16.mxu0 0
        %877 = vmatmul.mubr.bf16.gmra.mxu0 %v777
        %v878 = vpop.f32.mrf.mxu0
        %v879 = vadd.f32 0.0, %v878
        %v880 = vpop.f32.mrf.mxu0
        %v881 = vpop.f32.mrf.mxu0
        %v882 = vadd.f32 0.0, %v881
        %v883 = vpop.f32.mrf.mxu0
        %884 = vmatprep.mubr.bf16.mxu0 0
        %885 = vmatmul.mubr.bf16.gmra.mxu0 %v780
        %v886 = vpop.f32.mrf.mxu0
        %v887 = vadd.f32 0.0, %v886
        %v888 = vpop.f32.mrf.mxu0
        %v889 = vpop.f32.mrf.mxu0
        %v890 = vadd.f32 0.0, %v889
        %v891 = vpop.f32.mrf.mxu0
        %892 = vmatprep.mubr.bf16.mxu0 0
        %893 = vmatmul.mubr.bf16.gmra.mxu0 %v783
        %v894 = vpop.f32.mrf.mxu0
        %v895 = vadd.f32 0.0, %v894
        %v896 = vpop.f32.mrf.mxu0
        %v897 = vpop.f32.mrf.mxu0
        %v898 = vadd.f32 0.0, %v897
        %v899 = vpop.f32.mrf.mxu0
        %900 = vmatprep.mubr.bf16.mxu0 0
        %901 = vmatmul.mubr.bf16.gmra.mxu0 %v786
        %v902 = vpop.f32.mrf.mxu0
        %v903 = vadd.f32 0.0, %v902
        %v904 = vpop.f32.mrf.mxu0
        %v905 = vpop.f32.mrf.mxu0
        %v906 = vadd.f32 0.0, %v905
        %v907 = vpop.f32.mrf.mxu0
        %908 = vmatprep.mubr.bf16.mxu0 0
        %909 = vmatmul.mubr.bf16.gmra.mxu0 %v789
        %v910 = vpop.f32.mrf.mxu0
        %v911 = vadd.f32 0.0, %v910
        %v912 = vpop.f32.mrf.mxu0
        %v913 = vpop.f32.mrf.mxu0
        %v914 = vadd.f32 0.0, %v913
        %v915 = vpop.f32.mrf.mxu0
        %916 = vmatprep.mubr.bf16.mxu0 0
        %917 = vmatmul.mubr.bf16.gmra.mxu0 %v792
        %v918 = vpop.f32.mrf.mxu0
        %v919 = vadd.f32 0.0, %v918
        %v920 = vpop.f32.mrf.mxu0
        %v921 = vpop.f32.mrf.mxu0
        %v922 = vadd.f32 0.0, %v921
        %v923 = vpop.f32.mrf.mxu0
        %924 = vmatprep.mubr.bf16.mxu0 0
        %925 = vmatmul.mubr.bf16.gmra.mxu0 %v795
        %v926 = vpop.f32.mrf.mxu0
        %v927 = vadd.f32 0.0, %v926
        %v928 = vpop.f32.mrf.mxu0
        %v929 = vpop.f32.mrf.mxu0
        %v930 = vadd.f32 0.0, %v929
        %v931 = vpop.f32.mrf.mxu0
        %932 = vmatprep.mubr.bf16.mxu0 0
        %933 = vmatmul.mubr.bf16.gmra.mxu0 %v798
        %v934 = vpop.f32.mrf.mxu0
        %v935 = vadd.f32 0.0, %v934
        %v936 = vpop.f32.mrf.mxu0
        %v937 = vpop.f32.mrf.mxu0
        %v938 = vadd.f32 0.0, %v937
        %v939 = vpop.f32.mrf.mxu0
        %940 = vmatprep.mubr.bf16.mxu0 0
        %941 = vmatmul.mubr.bf16.gmra.mxu0 %v801
        %v942 = vpop.f32.mrf.mxu0
        %v943 = vadd.f32 0.0, %v942
        %v944 = vpop.f32.mrf.mxu0
        %v945 = vpop.f32.mrf.mxu0
        %v946 = vadd.f32 0.0, %v945
        %v947 = vpop.f32.mrf.mxu0
        %948 = vmatprep.mubr.bf16.mxu0 0
        %949 = vmatmul.mubr.bf16.gmra.mxu0 %v804
        %v950 = vpop.f32.mrf.mxu0
        %v951 = vadd.f32 0.0, %v950
        %v952 = vpop.f32.mrf.mxu0
        %v953 = vpop.f32.mrf.mxu0
        %v954 = vadd.f32 0.0, %v953
        %v955 = vpop.f32.mrf.mxu0
        %956 = vmatprep.mubr.bf16.mxu0 0
        %957 = vmatmul.mubr.bf16.gmra.mxu0 %v807
        %v958 = vpop.f32.mrf.mxu0
        %v959 = vadd.f32 0.0, %v958
        %v960 = vpop.f32.mrf.mxu0
        %v961 = vpop.f32.mrf.mxu0
        %v962 = vadd.f32 0.0, %v961
        %v963 = vpop.f32.mrf.mxu0
        %964 = vmatprep.mubr.bf16.mxu0 0
        %965 = vmatmul.mubr.bf16.gmra.mxu0 %v810
        %v966 = vpop.f32.mrf.mxu0
        %v967 = vadd.f32 0.0, %v966
        %v968 = vpop.f32.mrf.mxu0
        %v969 = vpop.f32.mrf.mxu0
        %v970 = vadd.f32 0.0, %v969
        %v971 = vpop.f32.mrf.mxu0
        %972 = vdwg.mxu0
        %v977 = vunpack.c.l.b16 %v742
        %v978 = vunpack.c.l.b16 %v743
        %v979 = vunpack.c.l.b16 %v744
        %v980 = vunpack.c.l.b16 %v745
        %v981 = vpack.c.b16 %v978, %v977
        %v982 = vpack.c.b16 %v980, %v979
        %v986 = vsel %vm763, %v597, 0
        %v989 = vsel %vm763, %v598, 0
        %v992 = vsel %vm763, %v599, 0
        %v995 = vsel %vm763, %v600, 0
        %v998 = vsel %vm763, %v601, 0
        %v1001 = vsel %vm763, %v602, 0
        %v1004 = vsel %vm763, %v603, 0
        %v1007 = vsel %vm763, %v604, 0
        %v1010 = vsel %vm763, %v605, 0
        %v1013 = vsel %vm763, %v606, 0
        %v1016 = vsel %vm763, %v607, 0
        %v1019 = vsel %vm763, %v608, 0
        %v1022 = vsel %vm763, %v609, 0
        %v1025 = vsel %vm763, %v610, 0
        %v1028 = vsel %vm763, %v611, 0
        %v1031 = vsel %vm763, %v612, 0
        %1033 = vmatprep.subr.bf16.mxu0 0
        %1034 = vmatpush1.bf16.msra.mxu0 0
        %1035 = vmatprep.subr.bf16.mxu0 0
        %1036 = vmatpush1.bf16.msra.mxu0 0
        %1037 = vmatprep.subr.bf16.mxu0 0
        %1038 = vmatpush1.bf16.msra.mxu0 0
        %1039 = vmatprep.subr.bf16.mxu0 0
        %1040 = vmatpush1.bf16.msra.mxu0 0
        %1041 = vmatprep.subr.bf16.mxu0 0
        %1042 = vmatpush1.bf16.msra.mxu0 0
        %1043 = vmatprep.subr.bf16.mxu0 0
        %1044 = vmatpush1.bf16.msra.mxu0 0
        %1045 = vmatprep.subr.bf16.mxu0 0
        %1046 = vmatpush1.bf16.msra.mxu0 %v982
        %1047 = vmatprep.subr.bf16.mxu0 0
        %1048 = vmatpush1.bf16.msra.mxu0 %v981
        %1049 = vmatprep.subr.bf16.mxu0 0
        %1050 = vmatpush2.bf16.msra.mxu0 0
        %1051 = vmatprep.subr.bf16.mxu0 0
        %1052 = vmatpush2.bf16.msra.mxu0 0
        %1053 = vmatprep.subr.bf16.mxu0 0
        %1054 = vmatpush2.bf16.msra.mxu0 0
        %1055 = vmatprep.subr.bf16.mxu0 0
        %1056 = vmatpush2.bf16.msra.mxu0 0
        %1057 = vmatprep.subr.bf16.mxu0 0
        %1058 = vmatpush2.bf16.msra.mxu0 0
        %1059 = vmatprep.subr.bf16.mxu0 0
        %1060 = vmatpush2.bf16.msra.mxu0 0
        %1061 = vmatprep.subr.bf16.mxu0 0
        %1062 = vmatpush2.bf16.msra.mxu0 0
        %1063 = vmatprep.subr.bf16.mxu0 0
        %1064 = vmatpush2.bf16.msra.mxu0 0
        %1065 = vmatprep.mubr.bf16.mxu0 0
        %1066 = vmatmul.mubr.bf16.gmra.mxu0 %v986
        %v1067 = vpop.f32.mrf.mxu0
        %v1068 = vadd.f32 %v847, %v1067
        %v1069 = vpop.f32.mrf.mxu0
        %v1070 = vpop.f32.mrf.mxu0
        %v1071 = vadd.f32 %v850, %v1070
        %v1072 = vpop.f32.mrf.mxu0
        %1073 = vmatprep.mubr.bf16.mxu0 0
        %1074 = vmatmul.mubr.bf16.gmra.mxu0 %v989
        %v1075 = vpop.f32.mrf.mxu0
        %v1076 = vadd.f32 %v855, %v1075
        %v1077 = vpop.f32.mrf.mxu0
        %v1078 = vpop.f32.mrf.mxu0
        %v1079 = vadd.f32 %v858, %v1078
        %v1080 = vpop.f32.mrf.mxu0
        %1081 = vmatprep.mubr.bf16.mxu0 0
        %1082 = vmatmul.mubr.bf16.gmra.mxu0 %v992
        %v1083 = vpop.f32.mrf.mxu0
        %v1084 = vadd.f32 %v863, %v1083
        %v1085 = vpop.f32.mrf.mxu0
        %v1086 = vpop.f32.mrf.mxu0
        %v1087 = vadd.f32 %v866, %v1086
        %v1088 = vpop.f32.mrf.mxu0
        %1089 = vmatprep.mubr.bf16.mxu0 0
        %1090 = vmatmul.mubr.bf16.gmra.mxu0 %v995
        %v1091 = vpop.f32.mrf.mxu0
        %v1092 = vadd.f32 %v871, %v1091
        %v1093 = vpop.f32.mrf.mxu0
        %v1094 = vpop.f32.mrf.mxu0
        %v1095 = vadd.f32 %v874, %v1094
        %v1096 = vpop.f32.mrf.mxu0
        %1097 = vmatprep.mubr.bf16.mxu0 0
        %1098 = vmatmul.mubr.bf16.gmra.mxu0 %v998
        %v1099 = vpop.f32.mrf.mxu0
        %v1100 = vadd.f32 %v879, %v1099
        %v1101 = vpop.f32.mrf.mxu0
        %v1102 = vpop.f32.mrf.mxu0
        %v1103 = vadd.f32 %v882, %v1102
        %v1104 = vpop.f32.mrf.mxu0
        %1105 = vmatprep.mubr.bf16.mxu0 0
        %1106 = vmatmul.mubr.bf16.gmra.mxu0 %v1001
        %v1107 = vpop.f32.mrf.mxu0
        %v1108 = vadd.f32 %v887, %v1107
        %v1109 = vpop.f32.mrf.mxu0
        %v1110 = vpop.f32.mrf.mxu0
        %v1111 = vadd.f32 %v890, %v1110
        %v1112 = vpop.f32.mrf.mxu0
        %1113 = vmatprep.mubr.bf16.mxu0 0
        %1114 = vmatmul.mubr.bf16.gmra.mxu0 %v1004
        %v1115 = vpop.f32.mrf.mxu0
        %v1116 = vadd.f32 %v895, %v1115
        %v1117 = vpop.f32.mrf.mxu0
        %v1118 = vpop.f32.mrf.mxu0
        %v1119 = vadd.f32 %v898, %v1118
        %v1120 = vpop.f32.mrf.mxu0
        %1121 = vmatprep.mubr.bf16.mxu0 0
        %1122 = vmatmul.mubr.bf16.gmra.mxu0 %v1007
        %v1123 = vpop.f32.mrf.mxu0
        %v1124 = vadd.f32 %v903, %v1123
        %v1125 = vpop.f32.mrf.mxu0
        %v1126 = vpop.f32.mrf.mxu0
        %v1127 = vadd.f32 %v906, %v1126
        %v1128 = vpop.f32.mrf.mxu0
        %1129 = vmatprep.mubr.bf16.mxu0 0
        %1130 = vmatmul.mubr.bf16.gmra.mxu0 %v1010
        %v1131 = vpop.f32.mrf.mxu0
        %v1132 = vadd.f32 %v911, %v1131
        %v1133 = vpop.f32.mrf.mxu0
        %v1134 = vpop.f32.mrf.mxu0
        %v1135 = vadd.f32 %v914, %v1134
        %v1136 = vpop.f32.mrf.mxu0
        %1137 = vmatprep.mubr.bf16.mxu0 0
        %1138 = vmatmul.mubr.bf16.gmra.mxu0 %v1013
        %v1139 = vpop.f32.mrf.mxu0
        %v1140 = vadd.f32 %v919, %v1139
        %v1141 = vpop.f32.mrf.mxu0
        %v1142 = vpop.f32.mrf.mxu0
        %v1143 = vadd.f32 %v922, %v1142
        %v1144 = vpop.f32.mrf.mxu0
        %1145 = vmatprep.mubr.bf16.mxu0 0
        %1146 = vmatmul.mubr.bf16.gmra.mxu0 %v1016
        %v1147 = vpop.f32.mrf.mxu0
        %v1148 = vadd.f32 %v927, %v1147
        %v1149 = vpop.f32.mrf.mxu0
        %v1150 = vpop.f32.mrf.mxu0
        %v1151 = vadd.f32 %v930, %v1150
        %v1152 = vpop.f32.mrf.mxu0
        %1153 = vmatprep.mubr.bf16.mxu0 0
        %1154 = vmatmul.mubr.bf16.gmra.mxu0 %v1019
        %v1155 = vpop.f32.mrf.mxu0
        %v1156 = vadd.f32 %v935, %v1155
        %v1157 = vpop.f32.mrf.mxu0
        %v1158 = vpop.f32.mrf.mxu0
        %v1159 = vadd.f32 %v938, %v1158
        %v1160 = vpop.f32.mrf.mxu0
        %1161 = vmatprep.mubr.bf16.mxu0 0
        %1162 = vmatmul.mubr.bf16.gmra.mxu0 %v1022
        %v1163 = vpop.f32.mrf.mxu0
        %v1164 = vadd.f32 %v943, %v1163
        %v1165 = vpop.f32.mrf.mxu0
        %v1166 = vpop.f32.mrf.mxu0
        %v1167 = vadd.f32 %v946, %v1166
        %v1168 = vpop.f32.mrf.mxu0
        %1169 = vmatprep.mubr.bf16.mxu0 0
        %1170 = vmatmul.mubr.bf16.gmra.mxu0 %v1025
        %v1171 = vpop.f32.mrf.mxu0
        %v1172 = vadd.f32 %v951, %v1171
        %v1173 = vpop.f32.mrf.mxu0
        %v1174 = vpop.f32.mrf.mxu0
        %v1175 = vadd.f32 %v954, %v1174
        %v1176 = vpop.f32.mrf.mxu0
        %1177 = vmatprep.mubr.bf16.mxu0 0
        %1178 = vmatmul.mubr.bf16.gmra.mxu0 %v1028
        %v1179 = vpop.f32.mrf.mxu0
        %v1180 = vadd.f32 %v959, %v1179
        %v1181 = vpop.f32.mrf.mxu0
        %v1182 = vpop.f32.mrf.mxu0
        %v1183 = vadd.f32 %v962, %v1182
        %v1184 = vpop.f32.mrf.mxu0
        %1185 = vmatprep.mubr.bf16.mxu0 0
        %1186 = vmatmul.mubr.bf16.gmra.mxu0 %v1031
        %v1187 = vpop.f32.mrf.mxu0
        %v1188 = vadd.f32 %v967, %v1187
        %v1189 = vpop.f32.mrf.mxu0
        %v1190 = vpop.f32.mrf.mxu0
        %v1191 = vadd.f32 %v970, %v1190
        %v1192 = vpop.f32.mrf.mxu0
        %1193 = vdwg.mxu0
        %s1194 = scalar_lea.vmem [#allocation6], 32
        %v1195 = vld [vmem:[%s1194] sm:$0xf]
        %v1196 = vld [vmem:[%s1194 + $0x4] sm:$0xf]
        %v1197 = vld [vmem:[%s1194 + $0x8] sm:$0xf]
        %v1198 = vld [vmem:[%s1194 + $0xc] sm:$0xf]
        %v1203 = vunpack.c.l.b16 %v1195
        %v1204 = vunpack.c.l.b16 %v1196
        %v1205 = vunpack.c.l.b16 %v1197
        %v1206 = vunpack.c.l.b16 %v1198
        %v1207 = vpack.c.b16 %v1204, %v1203
        %v1208 = vpack.c.b16 %v1206, %v1205
        %v1212 = vsel %vm763, %v726, 0
        %v1215 = vsel %vm763, %v727, 0
        %v1218 = vsel %vm763, %v728, 0
        %v1221 = vsel %vm763, %v729, 0
        %v1224 = vsel %vm763, %v730, 0
        %v1227 = vsel %vm763, %v731, 0
        %v1230 = vsel %vm763, %v732, 0
        %v1233 = vsel %vm763, %v733, 0
        %v1236 = vsel %vm763, %v734, 0
        %v1239 = vsel %vm763, %v735, 0
        %v1242 = vsel %vm763, %v736, 0
        %v1245 = vsel %vm763, %v737, 0
        %v1248 = vsel %vm763, %v738, 0
        %v1251 = vsel %vm763, %v739, 0
        %v1254 = vsel %vm763, %v740, 0
        %v1257 = vsel %vm763, %v741, 0
        %1259 = vmatprep.subr.bf16.mxu0 0
        %1260 = vmatpush1.bf16.msra.mxu0 0
        %1261 = vmatprep.subr.bf16.mxu0 0
        %1262 = vmatpush1.bf16.msra.mxu0 0
        %1263 = vmatprep.subr.bf16.mxu0 0
        %1264 = vmatpush1.bf16.msra.mxu0 0
        %1265 = vmatprep.subr.bf16.mxu0 0
        %1266 = vmatpush1.bf16.msra.mxu0 0
        %1267 = vmatprep.subr.bf16.mxu0 0
        %1268 = vmatpush1.bf16.msra.mxu0 0
        %1269 = vmatprep.subr.bf16.mxu0 0
        %1270 = vmatpush1.bf16.msra.mxu0 0
        %1271 = vmatprep.subr.bf16.mxu0 0
        %1272 = vmatpush1.bf16.msra.mxu0 %v1208
        %1273 = vmatprep.subr.bf16.mxu0 0
        %1274 = vmatpush1.bf16.msra.mxu0 %v1207
        %1275 = vmatprep.subr.bf16.mxu0 0
        %1276 = vmatpush2.bf16.msra.mxu0 0
        %1277 = vmatprep.subr.bf16.mxu0 0
        %1278 = vmatpush2.bf16.msra.mxu0 0
        %1279 = vmatprep.subr.bf16.mxu0 0
        %1280 = vmatpush2.bf16.msra.mxu0 0
        %1281 = vmatprep.subr.bf16.mxu0 0
        %1282 = vmatpush2.bf16.msra.mxu0 0
        %1283 = vmatprep.subr.bf16.mxu0 0
        %1284 = vmatpush2.bf16.msra.mxu0 0
        %1285 = vmatprep.subr.bf16.mxu0 0
        %1286 = vmatpush2.bf16.msra.mxu0 0
        %1287 = vmatprep.subr.bf16.mxu0 0
        %1288 = vmatpush2.bf16.msra.mxu0 0
        %1289 = vmatprep.subr.bf16.mxu0 0
        %1290 = vmatpush2.bf16.msra.mxu0 0
        %1291 = vmatprep.mubr.bf16.mxu0 0
        %1292 = vmatmul.mubr.bf16.gmra.mxu0 %v1212
        %v1293 = vpop.f32.mrf.mxu0
        %v1294 = vadd.f32 0.0, %v1293
        %v1295 = vpop.f32.mrf.mxu0
        %v1296 = vpop.f32.mrf.mxu0
        %v1297 = vadd.f32 0.0, %v1296
        %v1298 = vpop.f32.mrf.mxu0
        %1299 = vmatprep.mubr.bf16.mxu0 0
        %1300 = vmatmul.mubr.bf16.gmra.mxu0 %v1215
        %v1301 = vpop.f32.mrf.mxu0
        %v1302 = vadd.f32 0.0, %v1301
        %v1303 = vpop.f32.mrf.mxu0
        %v1304 = vpop.f32.mrf.mxu0
        %v1305 = vadd.f32 0.0, %v1304
        %v1306 = vpop.f32.mrf.mxu0
        %1307 = vmatprep.mubr.bf16.mxu0 0
        %1308 = vmatmul.mubr.bf16.gmra.mxu0 %v1218
        %v1309 = vpop.f32.mrf.mxu0
        %v1310 = vadd.f32 0.0, %v1309
        %v1311 = vpop.f32.mrf.mxu0
        %v1312 = vpop.f32.mrf.mxu0
        %v1313 = vadd.f32 0.0, %v1312
        %v1314 = vpop.f32.mrf.mxu0
        %1315 = vmatprep.mubr.bf16.mxu0 0
        %1316 = vmatmul.mubr.bf16.gmra.mxu0 %v1221
        %v1317 = vpop.f32.mrf.mxu0
        %v1318 = vadd.f32 0.0, %v1317
        %v1319 = vpop.f32.mrf.mxu0
        %v1320 = vpop.f32.mrf.mxu0
        %v1321 = vadd.f32 0.0, %v1320
        %v1322 = vpop.f32.mrf.mxu0
        %1323 = vmatprep.mubr.bf16.mxu0 0
        %1324 = vmatmul.mubr.bf16.gmra.mxu0 %v1224
        %v1325 = vpop.f32.mrf.mxu0
        %v1326 = vadd.f32 0.0, %v1325
        %v1327 = vpop.f32.mrf.mxu0
        %v1328 = vpop.f32.mrf.mxu0
        %v1329 = vadd.f32 0.0, %v1328
        %v1330 = vpop.f32.mrf.mxu0
        %1331 = vmatprep.mubr.bf16.mxu0 0
        %1332 = vmatmul.mubr.bf16.gmra.mxu0 %v1227
        %v1333 = vpop.f32.mrf.mxu0
        %v1334 = vadd.f32 0.0, %v1333
        %v1335 = vpop.f32.mrf.mxu0
        %v1336 = vpop.f32.mrf.mxu0
        %v1337 = vadd.f32 0.0, %v1336
        %v1338 = vpop.f32.mrf.mxu0
        %1339 = vmatprep.mubr.bf16.mxu0 0
        %1340 = vmatmul.mubr.bf16.gmra.mxu0 %v1230
        %v1341 = vpop.f32.mrf.mxu0
        %v1342 = vadd.f32 0.0, %v1341
        %v1343 = vpop.f32.mrf.mxu0
        %v1344 = vpop.f32.mrf.mxu0
        %v1345 = vadd.f32 0.0, %v1344
        %v1346 = vpop.f32.mrf.mxu0
        %1347 = vmatprep.mubr.bf16.mxu0 0
        %1348 = vmatmul.mubr.bf16.gmra.mxu0 %v1233
        %v1349 = vpop.f32.mrf.mxu0
        %v1350 = vadd.f32 0.0, %v1349
        %v1351 = vpop.f32.mrf.mxu0
        %v1352 = vpop.f32.mrf.mxu0
        %v1353 = vadd.f32 0.0, %v1352
        %v1354 = vpop.f32.mrf.mxu0
        %1355 = vmatprep.mubr.bf16.mxu0 0
        %1356 = vmatmul.mubr.bf16.gmra.mxu0 %v1236
        %v1357 = vpop.f32.mrf.mxu0
        %v1358 = vadd.f32 0.0, %v1357
        %v1359 = vpop.f32.mrf.mxu0
        %v1360 = vpop.f32.mrf.mxu0
        %v1361 = vadd.f32 0.0, %v1360
        %v1362 = vpop.f32.mrf.mxu0
        %1363 = vmatprep.mubr.bf16.mxu0 0
        %1364 = vmatmul.mubr.bf16.gmra.mxu0 %v1239
        %v1365 = vpop.f32.mrf.mxu0
        %v1366 = vadd.f32 0.0, %v1365
        %v1367 = vpop.f32.mrf.mxu0
        %v1368 = vpop.f32.mrf.mxu0
        %v1369 = vadd.f32 0.0, %v1368
        %v1370 = vpop.f32.mrf.mxu0
        %1371 = vmatprep.mubr.bf16.mxu0 0
        %1372 = vmatmul.mubr.bf16.gmra.mxu0 %v1242
        %v1373 = vpop.f32.mrf.mxu0
        %v1374 = vadd.f32 0.0, %v1373
        %v1375 = vpop.f32.mrf.mxu0
        %v1376 = vpop.f32.mrf.mxu0
        %v1377 = vadd.f32 0.0, %v1376
        %v1378 = vpop.f32.mrf.mxu0
        %1379 = vmatprep.mubr.bf16.mxu0 0
        %1380 = vmatmul.mubr.bf16.gmra.mxu0 %v1245
        %v1381 = vpop.f32.mrf.mxu0
        %v1382 = vadd.f32 0.0, %v1381
        %v1383 = vpop.f32.mrf.mxu0
        %v1384 = vpop.f32.mrf.mxu0
        %v1385 = vadd.f32 0.0, %v1384
        %v1386 = vpop.f32.mrf.mxu0
        %1387 = vmatprep.mubr.bf16.mxu0 0
        %1388 = vmatmul.mubr.bf16.gmra.mxu0 %v1248
        %v1389 = vpop.f32.mrf.mxu0
        %v1390 = vadd.f32 0.0, %v1389
        %v1391 = vpop.f32.mrf.mxu0
        %v1392 = vpop.f32.mrf.mxu0
        %v1393 = vadd.f32 0.0, %v1392
        %v1394 = vpop.f32.mrf.mxu0
        %1395 = vmatprep.mubr.bf16.mxu0 0
        %1396 = vmatmul.mubr.bf16.gmra.mxu0 %v1251
        %v1397 = vpop.f32.mrf.mxu0
        %v1398 = vadd.f32 0.0, %v1397
        %v1399 = vpop.f32.mrf.mxu0
        %v1400 = vpop.f32.mrf.mxu0
        %v1401 = vadd.f32 0.0, %v1400
        %v1402 = vpop.f32.mrf.mxu0
        %1403 = vmatprep.mubr.bf16.mxu0 0
        %1404 = vmatmul.mubr.bf16.gmra.mxu0 %v1254
        %v1405 = vpop.f32.mrf.mxu0
        %v1406 = vadd.f32 0.0, %v1405
        %v1407 = vpop.f32.mrf.mxu0
        %v1408 = vpop.f32.mrf.mxu0
        %v1409 = vadd.f32 0.0, %v1408
        %v1410 = vpop.f32.mrf.mxu0
        %1411 = vmatprep.mubr.bf16.mxu0 0
        %1412 = vmatmul.mubr.bf16.gmra.mxu0 %v1257
        %v1413 = vpop.f32.mrf.mxu0
        %v1414 = vadd.f32 0.0, %v1413
        %v1415 = vpop.f32.mrf.mxu0
        %v1416 = vpop.f32.mrf.mxu0
        %v1417 = vadd.f32 0.0, %v1416
        %v1418 = vpop.f32.mrf.mxu0
        %1419 = vdwg.mxu0
        %v1420 = vadd.f32 %v1068, %v1294
        %v1421 = vadd.f32 %v1071, %v1297
        %v1422 = vadd.f32 %v1076, %v1302
        %v1423 = vadd.f32 %v1079, %v1305
        %v1424 = vadd.f32 %v1084, %v1310
        %v1425 = vadd.f32 %v1087, %v1313
        %v1426 = vadd.f32 %v1092, %v1318
        %v1427 = vadd.f32 %v1095, %v1321
        %v1428 = vadd.f32 %v1100, %v1326
        %v1429 = vadd.f32 %v1103, %v1329
        %v1430 = vadd.f32 %v1108, %v1334
        %v1431 = vadd.f32 %v1111, %v1337
        %v1432 = vadd.f32 %v1116, %v1342
        %v1433 = vadd.f32 %v1119, %v1345
        %v1434 = vadd.f32 %v1124, %v1350
        %v1435 = vadd.f32 %v1127, %v1353
        %v1436 = vadd.f32 %v1132, %v1358
        %v1437 = vadd.f32 %v1135, %v1361
        %v1438 = vadd.f32 %v1140, %v1366
        %v1439 = vadd.f32 %v1143, %v1369
        %v1440 = vadd.f32 %v1148, %v1374
        %v1441 = vadd.f32 %v1151, %v1377
        %v1442 = vadd.f32 %v1156, %v1382
        %v1443 = vadd.f32 %v1159, %v1385
        %v1444 = vadd.f32 %v1164, %v1390
        %v1445 = vadd.f32 %v1167, %v1393
        %v1446 = vadd.f32 %v1172, %v1398
        %v1447 = vadd.f32 %v1175, %v1401
        %v1448 = vadd.f32 %v1180, %v1406
        %v1449 = vadd.f32 %v1183, %v1409
        %v1450 = vadd.f32 %v1188, %v1414
        %v1451 = vadd.f32 %v1191, %v1417
        %v1452 = vld [vmem:[%s2] sm:$0x1]
        %v1454 = vlaneseq
        %v1455 = vshrl.u32 %v1454, 7
        %v1456 = vsub.s32 0, %v1455
        %v1457 = vrot.slane %v1452, %v1456
        %v1459 = vadd.f32 %v1420, %v1457
        %v1460 = vadd.f32 %v1421, %v1457
        %v1461 = vadd.f32 %v1422, %v1457
        %v1462 = vadd.f32 %v1423, %v1457
        %v1463 = vadd.f32 %v1424, %v1457
        %v1464 = vadd.f32 %v1425, %v1457
        %v1465 = vadd.f32 %v1426, %v1457
        %v1466 = vadd.f32 %v1427, %v1457
        %v1467 = vadd.f32 %v1428, %v1457
        %v1468 = vadd.f32 %v1429, %v1457
        %v1469 = vadd.f32 %v1430, %v1457
        %v1470 = vadd.f32 %v1431, %v1457
        %v1471 = vadd.f32 %v1432, %v1457
        %v1472 = vadd.f32 %v1433, %v1457
        %v1473 = vadd.f32 %v1434, %v1457
        %v1474 = vadd.f32 %v1435, %v1457
        %v1475 = vadd.f32 %v1436, %v1457
        %v1476 = vadd.f32 %v1437, %v1457
        %v1477 = vadd.f32 %v1438, %v1457
        %v1478 = vadd.f32 %v1439, %v1457
        %v1479 = vadd.f32 %v1440, %v1457
        %v1480 = vadd.f32 %v1441, %v1457
        %v1481 = vadd.f32 %v1442, %v1457
        %v1482 = vadd.f32 %v1443, %v1457
        %v1483 = vadd.f32 %v1444, %v1457
        %v1484 = vadd.f32 %v1445, %v1457
        %v1485 = vadd.f32 %v1446, %v1457
        %v1486 = vadd.f32 %v1447, %v1457
        %v1487 = vadd.f32 %v1448, %v1457
        %v1488 = vadd.f32 %v1449, %v1457
        %v1489 = vadd.f32 %v1450, %v1457
        %v1490 = vadd.f32 %v1451, %v1457
        %v1491 = vmax.f32 %v1459, 0.0
        %v1492 = vmax.f32 %v1460, 0.0
        %v1493 = vmax.f32 %v1461, 0.0
        %v1494 = vmax.f32 %v1462, 0.0
        %v1495 = vmax.f32 %v1463, 0.0
        %v1496 = vmax.f32 %v1464, 0.0
        %v1497 = vmax.f32 %v1465, 0.0
        %v1498 = vmax.f32 %v1466, 0.0
        %v1499 = vmax.f32 %v1467, 0.0
        %v1500 = vmax.f32 %v1468, 0.0
        %v1501 = vmax.f32 %v1469, 0.0
        %v1502 = vmax.f32 %v1470, 0.0
        %v1503 = vmax.f32 %v1471, 0.0
        %v1504 = vmax.f32 %v1472, 0.0
        %v1505 = vmax.f32 %v1473, 0.0
        %v1506 = vmax.f32 %v1474, 0.0
        %v1507 = vmax.f32 %v1475, 0.0
        %v1508 = vmax.f32 %v1476, 0.0
        %v1509 = vmax.f32 %v1477, 0.0
        %v1510 = vmax.f32 %v1478, 0.0
        %v1511 = vmax.f32 %v1479, 0.0
        %v1512 = vmax.f32 %v1480, 0.0
        %v1513 = vmax.f32 %v1481, 0.0
        %v1514 = vmax.f32 %v1482, 0.0
        %v1515 = vmax.f32 %v1483, 0.0
        %v1516 = vmax.f32 %v1484, 0.0
        %v1517 = vmax.f32 %v1485, 0.0
        %v1518 = vmax.f32 %v1486, 0.0
        %v1519 = vmax.f32 %v1487, 0.0
        %v1520 = vmax.f32 %v1488, 0.0
        %v1521 = vmax.f32 %v1489, 0.0
        %v1522 = vmax.f32 %v1490, 0.0
        %v1523 = vsel %vm763, %v1491, 0.0
        %1524 = vadd.xlane.f32.xlu0 %v1523
        %v1525 = vpop.xlane.xlu0 %1524
        %v1526 = vsel %vm763, %v1492, 0.0
        %1527 = vadd.xlane.f32.xlu0 %v1526
        %v1528 = vpop.xlane.xlu0 %1527
        %v1529 = vsel %vm763, %v1493, 0.0
        %1530 = vadd.xlane.f32.xlu0 %v1529
        %v1531 = vpop.xlane.xlu0 %1530
        %v1532 = vsel %vm763, %v1494, 0.0
        %1533 = vadd.xlane.f32.xlu0 %v1532
        %v1534 = vpop.xlane.xlu0 %1533
        %v1535 = vsel %vm763, %v1495, 0.0
        %1536 = vadd.xlane.f32.xlu0 %v1535
        %v1537 = vpop.xlane.xlu0 %1536
        %v1538 = vsel %vm763, %v1496, 0.0
        %1539 = vadd.xlane.f32.xlu0 %v1538
        %v1540 = vpop.xlane.xlu0 %1539
        %v1541 = vsel %vm763, %v1497, 0.0
        %1542 = vadd.xlane.f32.xlu0 %v1541
        %v1543 = vpop.xlane.xlu0 %1542
        %v1544 = vsel %vm763, %v1498, 0.0
        %1545 = vadd.xlane.f32.xlu0 %v1544
        %v1546 = vpop.xlane.xlu0 %1545
        %v1547 = vsel %vm763, %v1499, 0.0
        %1548 = vadd.xlane.f32.xlu0 %v1547
        %v1549 = vpop.xlane.xlu0 %1548
        %v1550 = vsel %vm763, %v1500, 0.0
        %1551 = vadd.xlane.f32.xlu0 %v1550
        %v1552 = vpop.xlane.xlu0 %1551
        %v1553 = vsel %vm763, %v1501, 0.0
        %1554 = vadd.xlane.f32.xlu0 %v1553
        %v1555 = vpop.xlane.xlu0 %1554
        %v1556 = vsel %vm763, %v1502, 0.0
        %1557 = vadd.xlane.f32.xlu0 %v1556
        %v1558 = vpop.xlane.xlu0 %1557
        %v1559 = vsel %vm763, %v1503, 0.0
        %1560 = vadd.xlane.f32.xlu0 %v1559
        %v1561 = vpop.xlane.xlu0 %1560
        %v1562 = vsel %vm763, %v1504, 0.0
        %1563 = vadd.xlane.f32.xlu0 %v1562
        %v1564 = vpop.xlane.xlu0 %1563
        %v1565 = vsel %vm763, %v1505, 0.0
        %1566 = vadd.xlane.f32.xlu0 %v1565
        %v1567 = vpop.xlane.xlu0 %1566
        %v1568 = vsel %vm763, %v1506, 0.0
        %1569 = vadd.xlane.f32.xlu0 %v1568
        %v1570 = vpop.xlane.xlu0 %1569
        %v1571 = vsel %vm763, %v1507, 0.0
        %1572 = vadd.xlane.f32.xlu0 %v1571
        %v1573 = vpop.xlane.xlu0 %1572
        %v1574 = vsel %vm763, %v1508, 0.0
        %1575 = vadd.xlane.f32.xlu0 %v1574
        %v1576 = vpop.xlane.xlu0 %1575
        %v1577 = vsel %vm763, %v1509, 0.0
        %1578 = vadd.xlane.f32.xlu0 %v1577
        %v1579 = vpop.xlane.xlu0 %1578
        %v1580 = vsel %vm763, %v1510, 0.0
        %1581 = vadd.xlane.f32.xlu0 %v1580
        %v1582 = vpop.xlane.xlu0 %1581
        %v1583 = vsel %vm763, %v1511, 0.0
        %1584 = vadd.xlane.f32.xlu0 %v1583
        %v1585 = vpop.xlane.xlu0 %1584
        %v1586 = vsel %vm763, %v1512, 0.0
        %1587 = vadd.xlane.f32.xlu0 %v1586
        %v1588 = vpop.xlane.xlu0 %1587
        %v1589 = vsel %vm763, %v1513, 0.0
        %1590 = vadd.xlane.f32.xlu0 %v1589
        %v1591 = vpop.xlane.xlu0 %1590
        %v1592 = vsel %vm763, %v1514, 0.0
        %1593 = vadd.xlane.f32.xlu0 %v1592
        %v1594 = vpop.xlane.xlu0 %1593
        %v1595 = vsel %vm763, %v1515, 0.0
        %1596 = vadd.xlane.f32.xlu0 %v1595
        %v1597 = vpop.xlane.xlu0 %1596
        %v1598 = vsel %vm763, %v1516, 0.0
        %1599 = vadd.xlane.f32.xlu0 %v1598
        %v1600 = vpop.xlane.xlu0 %1599
        %v1601 = vsel %vm763, %v1517, 0.0
        %1602 = vadd.xlane.f32.xlu0 %v1601
        %v1603 = vpop.xlane.xlu0 %1602
        %v1604 = vsel %vm763, %v1518, 0.0
        %1605 = vadd.xlane.f32.xlu0 %v1604
        %v1606 = vpop.xlane.xlu0 %1605
        %v1607 = vsel %vm763, %v1519, 0.0
        %1608 = vadd.xlane.f32.xlu0 %v1607
        %v1609 = vpop.xlane.xlu0 %1608
        %v1610 = vsel %vm763, %v1520, 0.0
        %1611 = vadd.xlane.f32.xlu0 %v1610
        %v1612 = vpop.xlane.xlu0 %1611
        %v1613 = vsel %vm763, %v1521, 0.0
        %1614 = vadd.xlane.f32.xlu0 %v1613
        %v1615 = vpop.xlane.xlu0 %1614
        %v1616 = vsel %vm763, %v1522, 0.0
        %1617 = vadd.xlane.f32.xlu0 %v1616
        %v1618 = vpop.xlane.xlu0 %1617
        %v1619 = vmul.f32 %v1525, 0.03125
        %v1620 = vmul.f32 %v1528, 0.03125
        %v1621 = vmul.f32 %v1531, 0.03125
        %v1622 = vmul.f32 %v1534, 0.03125
        %v1623 = vmul.f32 %v1537, 0.03125
        %v1624 = vmul.f32 %v1540, 0.03125
        %v1625 = vmul.f32 %v1543, 0.03125
        %v1626 = vmul.f32 %v1546, 0.03125
        %v1627 = vmul.f32 %v1549, 0.03125
        %v1628 = vmul.f32 %v1552, 0.03125
        %v1629 = vmul.f32 %v1555, 0.03125
        %v1630 = vmul.f32 %v1558, 0.03125
        %v1631 = vmul.f32 %v1561, 0.03125
        %v1632 = vmul.f32 %v1564, 0.03125
        %v1633 = vmul.f32 %v1567, 0.03125
        %v1634 = vmul.f32 %v1570, 0.03125
        %v1635 = vmul.f32 %v1573, 0.03125
        %v1636 = vmul.f32 %v1576, 0.03125
        %v1637 = vmul.f32 %v1579, 0.03125
        %v1638 = vmul.f32 %v1582, 0.03125
        %v1639 = vmul.f32 %v1585, 0.03125
        %v1640 = vmul.f32 %v1588, 0.03125
        %v1641 = vmul.f32 %v1591, 0.03125
        %v1642 = vmul.f32 %v1594, 0.03125
        %v1643 = vmul.f32 %v1597, 0.03125
        %v1644 = vmul.f32 %v1600, 0.03125
        %v1645 = vmul.f32 %v1603, 0.03125
        %v1646 = vmul.f32 %v1606, 0.03125
        %v1647 = vmul.f32 %v1609, 0.03125
        %v1648 = vmul.f32 %v1612, 0.03125
        %v1649 = vmul.f32 %v1615, 0.03125
        %v1650 = vmul.f32 %v1618, 0.03125
        %v1651 = vsub.f32 %v1491, %v1619
        %v1652 = vsub.f32 %v1492, %v1620
        %v1653 = vsub.f32 %v1493, %v1621
        %v1654 = vsub.f32 %v1494, %v1622
        %v1655 = vsub.f32 %v1495, %v1623
        %v1656 = vsub.f32 %v1496, %v1624
        %v1657 = vsub.f32 %v1497, %v1625
        %v1658 = vsub.f32 %v1498, %v1626
        %v1659 = vsub.f32 %v1499, %v1627
        %v1660 = vsub.f32 %v1500, %v1628
        %v1661 = vsub.f32 %v1501, %v1629
        %v1662 = vsub.f32 %v1502, %v1630
        %v1663 = vsub.f32 %v1503, %v1631
        %v1664 = vsub.f32 %v1504, %v1632
        %v1665 = vsub.f32 %v1505, %v1633
        %v1666 = vsub.f32 %v1506, %v1634
        %v1667 = vsub.f32 %v1507, %v1635
        %v1668 = vsub.f32 %v1508, %v1636
        %v1669 = vsub.f32 %v1509, %v1637
        %v1670 = vsub.f32 %v1510, %v1638
        %v1671 = vsub.f32 %v1511, %v1639
        %v1672 = vsub.f32 %v1512, %v1640
        %v1673 = vsub.f32 %v1513, %v1641
        %v1674 = vsub.f32 %v1514, %v1642
        %v1675 = vsub.f32 %v1515, %v1643
        %v1676 = vsub.f32 %v1516, %v1644
        %v1677 = vsub.f32 %v1517, %v1645
        %v1678 = vsub.f32 %v1518, %v1646
        %v1679 = vsub.f32 %v1519, %v1647
        %v1680 = vsub.f32 %v1520, %v1648
        %v1681 = vsub.f32 %v1521, %v1649
        %v1682 = vsub.f32 %v1522, %v1650
        %v1683 = vmul.f32 %v1651, %v1651
        %v1684 = vmul.f32 %v1652, %v1652
        %v1685 = vmul.f32 %v1653, %v1653
        %v1686 = vmul.f32 %v1654, %v1654
        %v1687 = vmul.f32 %v1655, %v1655
        %v1688 = vmul.f32 %v1656, %v1656
        %v1689 = vmul.f32 %v1657, %v1657
        %v1690 = vmul.f32 %v1658, %v1658
        %v1691 = vmul.f32 %v1659, %v1659
        %v1692 = vmul.f32 %v1660, %v1660
        %v1693 = vmul.f32 %v1661, %v1661
        %v1694 = vmul.f32 %v1662, %v1662
        %v1695 = vmul.f32 %v1663, %v1663
        %v1696 = vmul.f32 %v1664, %v1664
        %v1697 = vmul.f32 %v1665, %v1665
        %v1698 = vmul.f32 %v1666, %v1666
        %v1699 = vmul.f32 %v1667, %v1667
        %v1700 = vmul.f32 %v1668, %v1668
        %v1701 = vmul.f32 %v1669, %v1669
        %v1702 = vmul.f32 %v1670, %v1670
        %v1703 = vmul.f32 %v1671, %v1671
        %v1704 = vmul.f32 %v1672, %v1672
        %v1705 = vmul.f32 %v1673, %v1673
        %v1706 = vmul.f32 %v1674, %v1674
        %v1707 = vmul.f32 %v1675, %v1675
        %v1708 = vmul.f32 %v1676, %v1676
        %v1709 = vmul.f32 %v1677, %v1677
        %v1710 = vmul.f32 %v1678, %v1678
        %v1711 = vmul.f32 %v1679, %v1679
        %v1712 = vmul.f32 %v1680, %v1680
        %v1713 = vmul.f32 %v1681, %v1681
        %v1714 = vmul.f32 %v1682, %v1682
        %v1715 = vsel %vm763, %v1683, 0.0
        %1716 = vadd.xlane.f32.xlu0 %v1715
        %v1717 = vpop.xlane.xlu0 %1716
        %v1718 = vsel %vm763, %v1684, 0.0
        %1719 = vadd.xlane.f32.xlu0 %v1718
        %v1720 = vpop.xlane.xlu0 %1719
        %v1721 = vsel %vm763, %v1685, 0.0
        %1722 = vadd.xlane.f32.xlu0 %v1721
        %v1723 = vpop.xlane.xlu0 %1722
        %v1724 = vsel %vm763, %v1686, 0.0
        %1725 = vadd.xlane.f32.xlu0 %v1724
        %v1726 = vpop.xlane.xlu0 %1725
        %v1727 = vsel %vm763, %v1687, 0.0
        %1728 = vadd.xlane.f32.xlu0 %v1727
        %v1729 = vpop.xlane.xlu0 %1728
        %v1730 = vsel %vm763, %v1688, 0.0
        %1731 = vadd.xlane.f32.xlu0 %v1730
        %v1732 = vpop.xlane.xlu0 %1731
        %v1733 = vsel %vm763, %v1689, 0.0
        %1734 = vadd.xlane.f32.xlu0 %v1733
        %v1735 = vpop.xlane.xlu0 %1734
        %v1736 = vsel %vm763, %v1690, 0.0
        %1737 = vadd.xlane.f32.xlu0 %v1736
        %v1738 = vpop.xlane.xlu0 %1737
        %v1739 = vsel %vm763, %v1691, 0.0
        %1740 = vadd.xlane.f32.xlu0 %v1739
        %v1741 = vpop.xlane.xlu0 %1740
        %v1742 = vsel %vm763, %v1692, 0.0
        %1743 = vadd.xlane.f32.xlu0 %v1742
        %v1744 = vpop.xlane.xlu0 %1743
        %v1745 = vsel %vm763, %v1693, 0.0
        %1746 = vadd.xlane.f32.xlu0 %v1745
        %v1747 = vpop.xlane.xlu0 %1746
        %v1748 = vsel %vm763, %v1694, 0.0
        %1749 = vadd.xlane.f32.xlu0 %v1748
        %v1750 = vpop.xlane.xlu0 %1749
        %v1751 = vsel %vm763, %v1695, 0.0
        %1752 = vadd.xlane.f32.xlu0 %v1751
        %v1753 = vpop.xlane.xlu0 %1752
        %v1754 = vsel %vm763, %v1696, 0.0
        %1755 = vadd.xlane.f32.xlu0 %v1754
        %v1756 = vpop.xlane.xlu0 %1755
        %v1757 = vsel %vm763, %v1697, 0.0
        %1758 = vadd.xlane.f32.xlu0 %v1757
        %v1759 = vpop.xlane.xlu0 %1758
        %v1760 = vsel %vm763, %v1698, 0.0
        %1761 = vadd.xlane.f32.xlu0 %v1760
        %v1762 = vpop.xlane.xlu0 %1761
        %v1763 = vsel %vm763, %v1699, 0.0
        %1764 = vadd.xlane.f32.xlu0 %v1763
        %v1765 = vpop.xlane.xlu0 %1764
        %v1766 = vsel %vm763, %v1700, 0.0
        %1767 = vadd.xlane.f32.xlu0 %v1766
        %v1768 = vpop.xlane.xlu0 %1767
        %v1769 = vsel %vm763, %v1701, 0.0
        %1770 = vadd.xlane.f32.xlu0 %v1769
        %v1771 = vpop.xlane.xlu0 %1770
        %v1772 = vsel %vm763, %v1702, 0.0
        %1773 = vadd.xlane.f32.xlu0 %v1772
        %v1774 = vpop.xlane.xlu0 %1773
        %v1775 = vsel %vm763, %v1703, 0.0
        %1776 = vadd.xlane.f32.xlu0 %v1775
        %v1777 = vpop.xlane.xlu0 %1776
        %v1778 = vsel %vm763, %v1704, 0.0
        %1779 = vadd.xlane.f32.xlu0 %v1778
        %v1780 = vpop.xlane.xlu0 %1779
        %v1781 = vsel %vm763, %v1705, 0.0
        %1782 = vadd.xlane.f32.xlu0 %v1781
        %v1783 = vpop.xlane.xlu0 %1782
        %v1784 = vsel %vm763, %v1706, 0.0
        %1785 = vadd.xlane.f32.xlu0 %v1784
        %v1786 = vpop.xlane.xlu0 %1785
        %v1787 = vsel %vm763, %v1707, 0.0
        %1788 = vadd.xlane.f32.xlu0 %v1787
        %v1789 = vpop.xlane.xlu0 %1788
        %v1790 = vsel %vm763, %v1708, 0.0
        %1791 = vadd.xlane.f32.xlu0 %v1790
        %v1792 = vpop.xlane.xlu0 %1791
        %v1793 = vsel %vm763, %v1709, 0.0
        %1794 = vadd.xlane.f32.xlu0 %v1793
        %v1795 = vpop.xlane.xlu0 %1794
        %v1796 = vsel %vm763, %v1710, 0.0
        %1797 = vadd.xlane.f32.xlu0 %v1796
        %v1798 = vpop.xlane.xlu0 %1797
        %v1799 = vsel %vm763, %v1711, 0.0
        %1800 = vadd.xlane.f32.xlu0 %v1799
        %v1801 = vpop.xlane.xlu0 %1800
        %v1802 = vsel %vm763, %v1712, 0.0
        %1803 = vadd.xlane.f32.xlu0 %v1802
        %v1804 = vpop.xlane.xlu0 %1803
        %v1805 = vsel %vm763, %v1713, 0.0
        %1806 = vadd.xlane.f32.xlu0 %v1805
        %v1807 = vpop.xlane.xlu0 %1806
        %v1808 = vsel %vm763, %v1714, 0.0
        %1809 = vadd.xlane.f32.xlu0 %v1808
        %v1810 = vpop.xlane.xlu0 %1809
        %v1811 = vmul.f32 %v1717, 0.03125
        %v1812 = vmul.f32 %v1720, 0.03125
        %v1813 = vmul.f32 %v1723, 0.03125
        %v1814 = vmul.f32 %v1726, 0.03125
        %v1815 = vmul.f32 %v1729, 0.03125
        %v1816 = vmul.f32 %v1732, 0.03125
        %v1817 = vmul.f32 %v1735, 0.03125
        %v1818 = vmul.f32 %v1738, 0.03125
        %v1819 = vmul.f32 %v1741, 0.03125
        %v1820 = vmul.f32 %v1744, 0.03125
        %v1821 = vmul.f32 %v1747, 0.03125
        %v1822 = vmul.f32 %v1750, 0.03125
        %v1823 = vmul.f32 %v1753, 0.03125
        %v1824 = vmul.f32 %v1756, 0.03125
        %v1825 = vmul.f32 %v1759, 0.03125
        %v1826 = vmul.f32 %v1762, 0.03125
        %v1827 = vmul.f32 %v1765, 0.03125
        %v1828 = vmul.f32 %v1768, 0.03125
        %v1829 = vmul.f32 %v1771, 0.03125
        %v1830 = vmul.f32 %v1774, 0.03125
        %v1831 = vmul.f32 %v1777, 0.03125
        %v1832 = vmul.f32 %v1780, 0.03125
        %v1833 = vmul.f32 %v1783, 0.03125
        %v1834 = vmul.f32 %v1786, 0.03125
        %v1835 = vmul.f32 %v1789, 0.03125
        %v1836 = vmul.f32 %v1792, 0.03125
        %v1837 = vmul.f32 %v1795, 0.03125
        %v1838 = vmul.f32 %v1798, 0.03125
        %v1839 = vmul.f32 %v1801, 0.03125
        %v1840 = vmul.f32 %v1804, 0.03125
        %v1841 = vmul.f32 %v1807, 0.03125
        %v1842 = vmul.f32 %v1810, 0.03125
        %v1843 = vadd.f32 %v1811, 1e-05
        %v1844 = vadd.f32 %v1812, 1e-05
        %v1845 = vadd.f32 %v1813, 1e-05
        %v1846 = vadd.f32 %v1814, 1e-05
        %v1847 = vadd.f32 %v1815, 1e-05
        %v1848 = vadd.f32 %v1816, 1e-05
        %v1849 = vadd.f32 %v1817, 1e-05
        %v1850 = vadd.f32 %v1818, 1e-05
        %v1851 = vadd.f32 %v1819, 1e-05
        %v1852 = vadd.f32 %v1820, 1e-05
        %v1853 = vadd.f32 %v1821, 1e-05
        %v1854 = vadd.f32 %v1822, 1e-05
        %v1855 = vadd.f32 %v1823, 1e-05
        %v1856 = vadd.f32 %v1824, 1e-05
        %v1857 = vadd.f32 %v1825, 1e-05
        %v1858 = vadd.f32 %v1826, 1e-05
        %v1859 = vadd.f32 %v1827, 1e-05
        %v1860 = vadd.f32 %v1828, 1e-05
        %v1861 = vadd.f32 %v1829, 1e-05
        %v1862 = vadd.f32 %v1830, 1e-05
        %v1863 = vadd.f32 %v1831, 1e-05
        %v1864 = vadd.f32 %v1832, 1e-05
        %v1865 = vadd.f32 %v1833, 1e-05
        %v1866 = vadd.f32 %v1834, 1e-05
        %v1867 = vadd.f32 %v1835, 1e-05
        %v1868 = vadd.f32 %v1836, 1e-05
        %v1869 = vadd.f32 %v1837, 1e-05
        %v1870 = vadd.f32 %v1838, 1e-05
        %v1871 = vadd.f32 %v1839, 1e-05
        %v1872 = vadd.f32 %v1840, 1e-05
        %v1873 = vadd.f32 %v1841, 1e-05
        %v1874 = vadd.f32 %v1842, 1e-05
        %v1875 = vrsqrt.pop %v1843
        %v1876 = vrsqrt.pop %v1844
        %v1877 = vrsqrt.pop %v1845
        %v1878 = vrsqrt.pop %v1846
        %v1879 = vrsqrt.pop %v1847
        %v1880 = vrsqrt.pop %v1848
        %v1881 = vrsqrt.pop %v1849
        %v1882 = vrsqrt.pop %v1850
        %v1883 = vrsqrt.pop %v1851
        %v1884 = vrsqrt.pop %v1852
        %v1885 = vrsqrt.pop %v1853
        %v1886 = vrsqrt.pop %v1854
        %v1887 = vrsqrt.pop %v1855
        %v1888 = vrsqrt.pop %v1856
        %v1889 = vrsqrt.pop %v1857
        %v1890 = vrsqrt.pop %v1858
        %v1891 = vrsqrt.pop %v1859
        %v1892 = vrsqrt.pop %v1860
        %v1893 = vrsqrt.pop %v1861
        %v1894 = vrsqrt.pop %v1862
        %v1895 = vrsqrt.pop %v1863
        %v1896 = vrsqrt.pop %v1864
        %v1897 = vrsqrt.pop %v1865
        %v1898 = vrsqrt.pop %v1866
        %v1899 = vrsqrt.pop %v1867
        %v1900 = vrsqrt.pop %v1868
        %v1901 = vrsqrt.pop %v1869
        %v1902 = vrsqrt.pop %v1870
        %v1903 = vrsqrt.pop %v1871
        %v1904 = vrsqrt.pop %v1872
        %v1905 = vrsqrt.pop %v1873
        %v1906 = vrsqrt.pop %v1874
        %v1907 = vmul.f32 %v1651, %v1875
        %v1908 = vmul.f32 %v1652, %v1876
        %v1909 = vmul.f32 %v1653, %v1877
        %v1910 = vmul.f32 %v1654, %v1878
        %v1911 = vmul.f32 %v1655, %v1879
        %v1912 = vmul.f32 %v1656, %v1880
        %v1913 = vmul.f32 %v1657, %v1881
        %v1914 = vmul.f32 %v1658, %v1882
        %v1915 = vmul.f32 %v1659, %v1883
        %v1916 = vmul.f32 %v1660, %v1884
        %v1917 = vmul.f32 %v1661, %v1885
        %v1918 = vmul.f32 %v1662, %v1886
        %v1919 = vmul.f32 %v1663, %v1887
        %v1920 = vmul.f32 %v1664, %v1888
        %v1921 = vmul.f32 %v1665, %v1889
        %v1922 = vmul.f32 %v1666, %v1890
        %v1923 = vmul.f32 %v1667, %v1891
        %v1924 = vmul.f32 %v1668, %v1892
        %v1925 = vmul.f32 %v1669, %v1893
        %v1926 = vmul.f32 %v1670, %v1894
        %v1927 = vmul.f32 %v1671, %v1895
        %v1928 = vmul.f32 %v1672, %v1896
        %v1929 = vmul.f32 %v1673, %v1897
        %v1930 = vmul.f32 %v1674, %v1898
        %v1931 = vmul.f32 %v1675, %v1899
        %v1932 = vmul.f32 %v1676, %v1900
        %v1933 = vmul.f32 %v1677, %v1901
        %v1934 = vmul.f32 %v1678, %v1902
        %v1935 = vmul.f32 %v1679, %v1903
        %v1936 = vmul.f32 %v1680, %v1904
        %v1937 = vmul.f32 %v1681, %v1905
        %v1938 = vmul.f32 %v1682, %v1906
        %v1939 = vld [vmem:[%s3] sm:$0x1]
        %v1941 = vlaneseq
        %v1942 = vshrl.u32 %v1941, 7
        %v1943 = vsub.s32 0, %v1942
        %v1944 = vrot.slane %v1939, %v1943
        %v1946 = vmul.f32 %v1907, %v1944
        %v1947 = vmul.f32 %v1908, %v1944
        %v1948 = vmul.f32 %v1909, %v1944
        %v1949 = vmul.f32 %v1910, %v1944
        %v1950 = vmul.f32 %v1911, %v1944
        %v1951 = vmul.f32 %v1912, %v1944
        %v1952 = vmul.f32 %v1913, %v1944
        %v1953 = vmul.f32 %v1914, %v1944
        %v1954 = vmul.f32 %v1915, %v1944
        %v1955 = vmul.f32 %v1916, %v1944
        %v1956 = vmul.f32 %v1917, %v1944
        %v1957 = vmul.f32 %v1918, %v1944
        %v1958 = vmul.f32 %v1919, %v1944
        %v1959 = vmul.f32 %v1920, %v1944
        %v1960 = vmul.f32 %v1921, %v1944
        %v1961 = vmul.f32 %v1922, %v1944
        %v1962 = vmul.f32 %v1923, %v1944
        %v1963 = vmul.f32 %v1924, %v1944
        %v1964 = vmul.f32 %v1925, %v1944
        %v1965 = vmul.f32 %v1926, %v1944
        %v1966 = vmul.f32 %v1927, %v1944
        %v1967 = vmul.f32 %v1928, %v1944
        %v1968 = vmul.f32 %v1929, %v1944
        %v1969 = vmul.f32 %v1930, %v1944
        %v1970 = vmul.f32 %v1931, %v1944
        %v1971 = vmul.f32 %v1932, %v1944
        %v1972 = vmul.f32 %v1933, %v1944
        %v1973 = vmul.f32 %v1934, %v1944
        %v1974 = vmul.f32 %v1935, %v1944
        %v1975 = vmul.f32 %v1936, %v1944
        %v1976 = vmul.f32 %v1937, %v1944
        %v1977 = vmul.f32 %v1938, %v1944
        %v1978 = vld [vmem:[%s4] sm:$0x1]
        %v1980 = vlaneseq
        %v1981 = vshrl.u32 %v1980, 7
        %v1982 = vsub.s32 0, %v1981
        %v1983 = vrot.slane %v1978, %v1982
        %v1985 = vadd.f32 %v1946, %v1983
        %v1986 = vadd.f32 %v1947, %v1983
        %v1987 = vadd.f32 %v1948, %v1983
        %v1988 = vadd.f32 %v1949, %v1983
        %v1989 = vadd.f32 %v1950, %v1983
        %v1990 = vadd.f32 %v1951, %v1983
        %v1991 = vadd.f32 %v1952, %v1983
        %v1992 = vadd.f32 %v1953, %v1983
        %v1993 = vadd.f32 %v1954, %v1983
        %v1994 = vadd.f32 %v1955, %v1983
        %v1995 = vadd.f32 %v1956, %v1983
        %v1996 = vadd.f32 %v1957, %v1983
        %v1997 = vadd.f32 %v1958, %v1983
        %v1998 = vadd.f32 %v1959, %v1983
        %v1999 = vadd.f32 %v1960, %v1983
        %v2000 = vadd.f32 %v1961, %v1983
        %v2001 = vadd.f32 %v1962, %v1983
        %v2002 = vadd.f32 %v1963, %v1983
        %v2003 = vadd.f32 %v1964, %v1983
        %v2004 = vadd.f32 %v1965, %v1983
        %v2005 = vadd.f32 %v1966, %v1983
        %v2006 = vadd.f32 %v1967, %v1983
        %v2007 = vadd.f32 %v1968, %v1983
        %v2008 = vadd.f32 %v1969, %v1983
        %v2009 = vadd.f32 %v1970, %v1983
        %v2010 = vadd.f32 %v1971, %v1983
        %v2011 = vadd.f32 %v1972, %v1983
        %v2012 = vadd.f32 %v1973, %v1983
        %v2013 = vadd.f32 %v1974, %v1983
        %v2014 = vadd.f32 %v1975, %v1983
        %v2015 = vadd.f32 %v1976, %v1983
        %v2016 = vadd.f32 %v1977, %v1983
        %v2017 = vrot.slane %v1985, 7
        %v2018 = vrot.slane %v1986, 7
        %v2019 = vrot.slane %v1987, 7
        %v2020 = vrot.slane %v1988, 7
        %v2021 = vrot.slane %v1989, 7
        %v2022 = vrot.slane %v1990, 7
        %v2023 = vrot.slane %v1991, 7
        %v2024 = vrot.slane %v1992, 7
        %v2025 = vrot.slane %v1993, 7
        %v2026 = vrot.slane %v1994, 7
        %v2027 = vrot.slane %v1995, 7
        %v2028 = vrot.slane %v1996, 7
        %v2029 = vrot.slane %v1997, 7
        %v2030 = vrot.slane %v1998, 7
        %v2031 = vrot.slane %v1999, 7
        %v2032 = vrot.slane %v2000, 7
        %v2033 = vrot.slane %v2001, 7
        %v2034 = vrot.slane %v2002, 7
        %v2035 = vrot.slane %v2003, 7
        %v2036 = vrot.slane %v2004, 7
        %v2037 = vrot.slane %v2005, 7
        %v2038 = vrot.slane %v2006, 7
        %v2039 = vrot.slane %v2007, 7
        %v2040 = vrot.slane %v2008, 7
        %v2041 = vrot.slane %v2009, 7
        %v2042 = vrot.slane %v2010, 7
        %v2043 = vrot.slane %v2011, 7
        %v2044 = vrot.slane %v2012, 7
        %v2045 = vrot.slane %v2013, 7
        %v2046 = vrot.slane %v2014, 7
        %v2047 = vrot.slane %v2015, 7
        %v2048 = vrot.slane %v2016, 7
        %v2049 = vsel %vm532, %v2047, %v2048
        %v2050 = vsel %vm532, %v2046, %v2047
        %v2051 = vsel %vm532, %v2045, %v2046
        %v2052 = vsel %vm532, %v2044, %v2045
        %v2053 = vsel %vm532, %v2043, %v2044
        %v2054 = vsel %vm532, %v2042, %v2043
        %v2055 = vsel %vm532, %v2041, %v2042
        %v2056 = vsel %vm532, %v2040, %v2041
        %v2057 = vsel %vm532, %v2039, %v2040
        %v2058 = vsel %vm532, %v2038, %v2039
        %v2059 = vsel %vm532, %v2037, %v2038
        %v2060 = vsel %vm532, %v2036, %v2037
        %v2061 = vsel %vm532, %v2035, %v2036
        %v2062 = vsel %vm532, %v2034, %v2035
        %v2063 = vsel %vm532, %v2033, %v2034
        %v2064 = vsel %vm532, %v2032, %v2033
        %v2065 = vsel %vm532, %v2031, %v2032
        %v2066 = vsel %vm532, %v2030, %v2031
        %v2067 = vsel %vm532, %v2029, %v2030
        %v2068 = vsel %vm532, %v2028, %v2029
        %v2069 = vsel %vm532, %v2027, %v2028
        %v2070 = vsel %vm532, %v2026, %v2027
        %v2071 = vsel %vm532, %v2025, %v2026
        %v2072 = vsel %vm532, %v2024, %v2025
        %v2073 = vsel %vm532, %v2023, %v2024
        %v2074 = vsel %vm532, %v2022, %v2023
        %v2075 = vsel %vm532, %v2021, %v2022
        %v2076 = vsel %vm532, %v2020, %v2021
        %v2077 = vsel %vm532, %v2019, %v2020
        %v2078 = vsel %vm532, %v2018, %v2019
        %v2079 = vsel %vm532, %v2017, %v2018
        %v2080 = vsel %vm532, %v2048, %v2017
        %v2081 = vmul.f32 %v2080, %v452
        %v2082 = vmul.f32 %v2079, %v453
        %v2083 = vmul.f32 %v2078, %v454
        %v2084 = vmul.f32 %v2077, %v455
        %v2085 = vmul.f32 %v2076, %v452
        %v2086 = vmul.f32 %v2075, %v453
        %v2087 = vmul.f32 %v2074, %v454
        %v2088 = vmul.f32 %v2073, %v455
        %v2089 = vmul.f32 %v2072, %v452
        %v2090 = vmul.f32 %v2071, %v453
        %v2091 = vmul.f32 %v2070, %v454
        %v2092 = vmul.f32 %v2069, %v455
        %v2093 = vmul.f32 %v2068, %v452
        %v2094 = vmul.f32 %v2067, %v453
        %v2095 = vmul.f32 %v2066, %v454
        %v2096 = vmul.f32 %v2065, %v455
        %v2097 = vmul.f32 %v2064, %v452
        %v2098 = vmul.f32 %v2063, %v453
        %v2099 = vmul.f32 %v2062, %v454
        %v2100 = vmul.f32 %v2061, %v455
        %v2101 = vmul.f32 %v2060, %v452
        %v2102 = vmul.f32 %v2059, %v453
        %v2103 = vmul.f32 %v2058, %v454
        %v2104 = vmul.f32 %v2057, %v455
        %v2105 = vmul.f32 %v2056, %v452
        %v2106 = vmul.f32 %v2055, %v453
        %v2107 = vmul.f32 %v2054, %v454
        %v2108 = vmul.f32 %v2053, %v455
        %v2109 = vmul.f32 %v2052, %v452
        %v2110 = vmul.f32 %v2051, %v453
        %v2111 = vmul.f32 %v2050, %v454
        %v2112 = vmul.f32 %v2049, %v455
        %v2113 = vpack.c.bf16 %v2082, %v2081
        %v2114 = vpack.c.bf16 %v2084, %v2083
        %v2115 = vpack.c.bf16 %v2086, %v2085
        %v2116 = vpack.c.bf16 %v2088, %v2087
        %v2117 = vpack.c.bf16 %v2090, %v2089
        %v2118 = vpack.c.bf16 %v2092, %v2091
        %v2119 = vpack.c.bf16 %v2094, %v2093
        %v2120 = vpack.c.bf16 %v2096, %v2095
        %v2121 = vpack.c.bf16 %v2098, %v2097
        %v2122 = vpack.c.bf16 %v2100, %v2099
        %v2123 = vpack.c.bf16 %v2102, %v2101
        %v2124 = vpack.c.bf16 %v2104, %v2103
        %v2125 = vpack.c.bf16 %v2106, %v2105
        %v2126 = vpack.c.bf16 %v2108, %v2107
        %v2127 = vpack.c.bf16 %v2110, %v2109
        %v2128 = vpack.c.bf16 %v2112, %v2111
        %v2129 = vpack.c.bf16 %v1986, %v1985
        %v2130 = vpack.c.bf16 %v1988, %v1987
        %v2131 = vpack.c.bf16 %v1990, %v1989
        %v2132 = vpack.c.bf16 %v1992, %v1991
        %v2133 = vpack.c.bf16 %v1994, %v1993
        %v2134 = vpack.c.bf16 %v1996, %v1995
        %v2135 = vpack.c.bf16 %v1998, %v1997
        %v2136 = vpack.c.bf16 %v2000, %v1999
        %v2137 = vpack.c.bf16 %v2002, %v2001
        %v2138 = vpack.c.bf16 %v2004, %v2003
        %v2139 = vpack.c.bf16 %v2006, %v2005
        %v2140 = vpack.c.bf16 %v2008, %v2007
        %v2141 = vpack.c.bf16 %v2010, %v2009
        %v2142 = vpack.c.bf16 %v2012, %v2011
        %v2143 = vpack.c.bf16 %v2014, %v2013
        %v2144 = vpack.c.bf16 %v2016, %v2015
        %v2145 = vrot.slane %v1985, 1
        %v2146 = vrot.slane %v1986, 1
        %v2147 = vrot.slane %v1987, 1
        %v2148 = vrot.slane %v1988, 1
        %v2149 = vrot.slane %v1989, 1
        %v2150 = vrot.slane %v1990, 1
        %v2151 = vrot.slane %v1991, 1
        %v2152 = vrot.slane %v1992, 1
        %v2153 = vrot.slane %v1993, 1
        %v2154 = vrot.slane %v1994, 1
        %v2155 = vrot.slane %v1995, 1
        %v2156 = vrot.slane %v1996, 1
        %v2157 = vrot.slane %v1997, 1
        %v2158 = vrot.slane %v1998, 1
        %v2159 = vrot.slane %v1999, 1
        %v2160 = vrot.slane %v2000, 1
        %v2161 = vrot.slane %v2001, 1
        %v2162 = vrot.slane %v2002, 1
        %v2163 = vrot.slane %v2003, 1
        %v2164 = vrot.slane %v2004, 1
        %v2165 = vrot.slane %v2005, 1
        %v2166 = vrot.slane %v2006, 1
        %v2167 = vrot.slane %v2007, 1
        %v2168 = vrot.slane %v2008, 1
        %v2169 = vrot.slane %v2009, 1
        %v2170 = vrot.slane %v2010, 1
        %v2171 = vrot.slane %v2011, 1
        %v2172 = vrot.slane %v2012, 1
        %v2173 = vrot.slane %v2013, 1
        %v2174 = vrot.slane %v2014, 1
        %v2175 = vrot.slane %v2015, 1
        %v2176 = vrot.slane %v2016, 1
        %v2177 = vsel %vm661, %v2175, %v2176
        %v2178 = vsel %vm661, %v2174, %v2175
        %v2179 = vsel %vm661, %v2173, %v2174
        %v2180 = vsel %vm661, %v2172, %v2173
        %v2181 = vsel %vm661, %v2171, %v2172
        %v2182 = vsel %vm661, %v2170, %v2171
        %v2183 = vsel %vm661, %v2169, %v2170
        %v2184 = vsel %vm661, %v2168, %v2169
        %v2185 = vsel %vm661, %v2167, %v2168
        %v2186 = vsel %vm661, %v2166, %v2167
        %v2187 = vsel %vm661, %v2165, %v2166
        %v2188 = vsel %vm661, %v2164, %v2165
        %v2189 = vsel %vm661, %v2163, %v2164
        %v2190 = vsel %vm661, %v2162, %v2163
        %v2191 = vsel %vm661, %v2161, %v2162
        %v2192 = vsel %vm661, %v2160, %v2161
        %v2193 = vsel %vm661, %v2159, %v2160
        %v2194 = vsel %vm661, %v2158, %v2159
        %v2195 = vsel %vm661, %v2157, %v2158
        %v2196 = vsel %vm661, %v2156, %v2157
        %v2197 = vsel %vm661, %v2155, %v2156
        %v2198 = vsel %vm661, %v2154, %v2155
        %v2199 = vsel %vm661, %v2153, %v2154
        %v2200 = vsel %vm661, %v2152, %v2153
        %v2201 = vsel %vm661, %v2151, %v2152
        %v2202 = vsel %vm661, %v2150, %v2151
        %v2203 = vsel %vm661, %v2149, %v2150
        %v2204 = vsel %vm661, %v2148, %v2149
        %v2205 = vsel %vm661, %v2147, %v2148
        %v2206 = vsel %vm661, %v2146, %v2147
        %v2207 = vsel %vm661, %v2145, %v2146
        %v2208 = vsel %vm661, %v2176, %v2145
        %v2209 = vmul.f32 %v2207, %v464
        %v2210 = vmul.f32 %v2206, %v465
        %v2211 = vmul.f32 %v2205, %v466
        %v2212 = vmul.f32 %v2204, %v467
        %v2213 = vmul.f32 %v2203, %v464
        %v2214 = vmul.f32 %v2202, %v465
        %v2215 = vmul.f32 %v2201, %v466
        %v2216 = vmul.f32 %v2200, %v467
        %v2217 = vmul.f32 %v2199, %v464
        %v2218 = vmul.f32 %v2198, %v465
        %v2219 = vmul.f32 %v2197, %v466
        %v2220 = vmul.f32 %v2196, %v467
        %v2221 = vmul.f32 %v2195, %v464
        %v2222 = vmul.f32 %v2194, %v465
        %v2223 = vmul.f32 %v2193, %v466
        %v2224 = vmul.f32 %v2192, %v467
        %v2225 = vmul.f32 %v2191, %v464
        %v2226 = vmul.f32 %v2190, %v465
        %v2227 = vmul.f32 %v2189, %v466
        %v2228 = vmul.f32 %v2188, %v467
        %v2229 = vmul.f32 %v2187, %v464
        %v2230 = vmul.f32 %v2186, %v465
        %v2231 = vmul.f32 %v2185, %v466
        %v2232 = vmul.f32 %v2184, %v467
        %v2233 = vmul.f32 %v2183, %v464
        %v2234 = vmul.f32 %v2182, %v465
        %v2235 = vmul.f32 %v2181, %v466
        %v2236 = vmul.f32 %v2180, %v467
        %v2237 = vmul.f32 %v2179, %v464
        %v2238 = vmul.f32 %v2178, %v465
        %v2239 = vmul.f32 %v2177, %v466
        %v2240 = vmul.f32 %v2208, %v467
        %v2241 = vpack.c.bf16 %v2210, %v2209
        %v2242 = vpack.c.bf16 %v2212, %v2211
        %v2243 = vpack.c.bf16 %v2214, %v2213
        %v2244 = vpack.c.bf16 %v2216, %v2215
        %v2245 = vpack.c.bf16 %v2218, %v2217
        %v2246 = vpack.c.bf16 %v2220, %v2219
        %v2247 = vpack.c.bf16 %v2222, %v2221
        %v2248 = vpack.c.bf16 %v2224, %v2223
        %v2249 = vpack.c.bf16 %v2226, %v2225
        %v2250 = vpack.c.bf16 %v2228, %v2227
        %v2251 = vpack.c.bf16 %v2230, %v2229
        %v2252 = vpack.c.bf16 %v2232, %v2231
        %v2253 = vpack.c.bf16 %v2234, %v2233
        %v2254 = vpack.c.bf16 %v2236, %v2235
        %v2255 = vpack.c.bf16 %v2238, %v2237
        %v2256 = vpack.c.bf16 %v2240, %v2239
        %v2257 = vld [vmem:[#allocation8] sm:$0xf]
        %v2258 = vld [vmem:[#allocation8 + $0x4] sm:$0xf]
        %v2259 = vld [vmem:[#allocation8 + $0x8] sm:$0xf]
        %v2260 = vld [vmem:[#allocation8 + $0xc] sm:$0xf]
        %s2261 = scalar_lea.vmem [#allocation8], 16
        %v2262 = vld [vmem:[%s2261] sm:$0xf]
        %v2263 = vld [vmem:[%s2261 + $0x4] sm:$0xf]
        %v2264 = vld [vmem:[%s2261 + $0x8] sm:$0xf]
        %v2265 = vld [vmem:[%s2261 + $0xc] sm:$0xf]
        %v2270 = vunpack.c.l.b16 %v2262
        %v2271 = vunpack.c.l.b16 %v2263
        %v2272 = vunpack.c.l.b16 %v2264
        %v2273 = vunpack.c.l.b16 %v2265
        %v2274 = vpack.c.b16 %v2271, %v2270
        %v2275 = vpack.c.b16 %v2273, %v2272
        %v2279 = vsel %vm763, %v2129, 0
        %v2282 = vsel %vm763, %v2130, 0
        %v2285 = vsel %vm763, %v2131, 0
        %v2288 = vsel %vm763, %v2132, 0
        %v2291 = vsel %vm763, %v2133, 0
        %v2294 = vsel %vm763, %v2134, 0
        %v2297 = vsel %vm763, %v2135, 0
        %v2300 = vsel %vm763, %v2136, 0
        %v2303 = vsel %vm763, %v2137, 0
        %v2306 = vsel %vm763, %v2138, 0
        %v2309 = vsel %vm763, %v2139, 0
        %v2312 = vsel %vm763, %v2140, 0
        %v2315 = vsel %vm763, %v2141, 0
        %v2318 = vsel %vm763, %v2142, 0
        %v2321 = vsel %vm763, %v2143, 0
        %v2324 = vsel %vm763, %v2144, 0
        %2326 = vmatprep.subr.bf16.mxu0 0
        %2327 = vmatpush1.bf16.msra.mxu0 0
        %2328 = vmatprep.subr.bf16.mxu0 0
        %2329 = vmatpush1.bf16.msra.mxu0 0
        %2330 = vmatprep.subr.bf16.mxu0 0
        %2331 = vmatpush1.bf16.msra.mxu0 0
        %2332 = vmatprep.subr.bf16.mxu0 0
        %2333 = vmatpush1.bf16.msra.mxu0 0
        %2334 = vmatprep.subr.bf16.mxu0 0
        %2335 = vmatpush1.bf16.msra.mxu0 0
        %2336 = vmatprep.subr.bf16.mxu0 0
        %2337 = vmatpush1.bf16.msra.mxu0 0
        %2338 = vmatprep.subr.bf16.mxu0 0
        %2339 = vmatpush1.bf16.msra.mxu0 %v2275
        %2340 = vmatprep.subr.bf16.mxu0 0
        %2341 = vmatpush1.bf16.msra.mxu0 %v2274
        %2342 = vmatprep.subr.bf16.mxu0 0
        %2343 = vmatpush2.bf16.msra.mxu0 0
        %2344 = vmatprep.subr.bf16.mxu0 0
        %2345 = vmatpush2.bf16.msra.mxu0 0
        %2346 = vmatprep.subr.bf16.mxu0 0
        %2347 = vmatpush2.bf16.msra.mxu0 0
        %2348 = vmatprep.subr.bf16.mxu0 0
        %2349 = vmatpush2.bf16.msra.mxu0 0
        %2350 = vmatprep.subr.bf16.mxu0 0
        %2351 = vmatpush2.bf16.msra.mxu0 0
        %2352 = vmatprep.subr.bf16.mxu0 0
        %2353 = vmatpush2.bf16.msra.mxu0 0
        %2354 = vmatprep.subr.bf16.mxu0 0
        %2355 = vmatpush2.bf16.msra.mxu0 0
        %2356 = vmatprep.subr.bf16.mxu0 0
        %2357 = vmatpush2.bf16.msra.mxu0 0
        %2358 = vmatprep.mubr.bf16.mxu0 0
        %2359 = vmatmul.mubr.bf16.gmra.mxu0 %v2279
        %v2360 = vpop.f32.mrf.mxu0
        %v2361 = vadd.f32 0.0, %v2360
        %v2362 = vpop.f32.mrf.mxu0
        %v2363 = vpop.f32.mrf.mxu0
        %v2364 = vadd.f32 0.0, %v2363
        %v2365 = vpop.f32.mrf.mxu0
        %2366 = vmatprep.mubr.bf16.mxu0 0
        %2367 = vmatmul.mubr.bf16.gmra.mxu0 %v2282
        %v2368 = vpop.f32.mrf.mxu0
        %v2369 = vadd.f32 0.0, %v2368
        %v2370 = vpop.f32.mrf.mxu0
        %v2371 = vpop.f32.mrf.mxu0
        %v2372 = vadd.f32 0.0, %v2371
        %v2373 = vpop.f32.mrf.mxu0
        %2374 = vmatprep.mubr.bf16.mxu0 0
        %2375 = vmatmul.mubr.bf16.gmra.mxu0 %v2285
        %v2376 = vpop.f32.mrf.mxu0
        %v2377 = vadd.f32 0.0, %v2376
        %v2378 = vpop.f32.mrf.mxu0
        %v2379 = vpop.f32.mrf.mxu0
        %v2380 = vadd.f32 0.0, %v2379
        %v2381 = vpop.f32.mrf.mxu0
        %2382 = vmatprep.mubr.bf16.mxu0 0
        %2383 = vmatmul.mubr.bf16.gmra.mxu0 %v2288
        %v2384 = vpop.f32.mrf.mxu0
        %v2385 = vadd.f32 0.0, %v2384
        %v2386 = vpop.f32.mrf.mxu0
        %v2387 = vpop.f32.mrf.mxu0
        %v2388 = vadd.f32 0.0, %v2387
        %v2389 = vpop.f32.mrf.mxu0
        %2390 = vmatprep.mubr.bf16.mxu0 0
        %2391 = vmatmul.mubr.bf16.gmra.mxu0 %v2291
        %v2392 = vpop.f32.mrf.mxu0
        %v2393 = vadd.f32 0.0, %v2392
        %v2394 = vpop.f32.mrf.mxu0
        %v2395 = vpop.f32.mrf.mxu0
        %v2396 = vadd.f32 0.0, %v2395
        %v2397 = vpop.f32.mrf.mxu0
        %2398 = vmatprep.mubr.bf16.mxu0 0
        %2399 = vmatmul.mubr.bf16.gmra.mxu0 %v2294
        %v2400 = vpop.f32.mrf.mxu0
        %v2401 = vadd.f32 0.0, %v2400
        %v2402 = vpop.f32.mrf.mxu0
        %v2403 = vpop.f32.mrf.mxu0
        %v2404 = vadd.f32 0.0, %v2403
        %v2405 = vpop.f32.mrf.mxu0
        %2406 = vmatprep.mubr.bf16.mxu0 0
        %2407 = vmatmul.mubr.bf16.gmra.mxu0 %v2297
        %v2408 = vpop.f32.mrf.mxu0
        %v2409 = vadd.f32 0.0, %v2408
        %v2410 = vpop.f32.mrf.mxu0
        %v2411 = vpop.f32.mrf.mxu0
        %v2412 = vadd.f32 0.0, %v2411
        %v2413 = vpop.f32.mrf.mxu0
        %2414 = vmatprep.mubr.bf16.mxu0 0
        %2415 = vmatmul.mubr.bf16.gmra.mxu0 %v2300
        %v2416 = vpop.f32.mrf.mxu0
        %v2417 = vadd.f32 0.0, %v2416
        %v2418 = vpop.f32.mrf.mxu0
        %v2419 = vpop.f32.mrf.mxu0
        %v2420 = vadd.f32 0.0, %v2419
        %v2421 = vpop.f32.mrf.mxu0
        %2422 = vmatprep.mubr.bf16.mxu0 0
        %2423 = vmatmul.mubr.bf16.gmra.mxu0 %v2303
        %v2424 = vpop.f32.mrf.mxu0
        %v2425 = vadd.f32 0.0, %v2424
        %v2426 = vpop.f32.mrf.mxu0
        %v2427 = vpop.f32.mrf.mxu0
        %v2428 = vadd.f32 0.0, %v2427
        %v2429 = vpop.f32.mrf.mxu0
        %2430 = vmatprep.mubr.bf16.mxu0 0
        %2431 = vmatmul.mubr.bf16.gmra.mxu0 %v2306
        %v2432 = vpop.f32.mrf.mxu0
        %v2433 = vadd.f32 0.0, %v2432
        %v2434 = vpop.f32.mrf.mxu0
        %v2435 = vpop.f32.mrf.mxu0
        %v2436 = vadd.f32 0.0, %v2435
        %v2437 = vpop.f32.mrf.mxu0
        %2438 = vmatprep.mubr.bf16.mxu0 0
        %2439 = vmatmul.mubr.bf16.gmra.mxu0 %v2309
        %v2440 = vpop.f32.mrf.mxu0
        %v2441 = vadd.f32 0.0, %v2440
        %v2442 = vpop.f32.mrf.mxu0
        %v2443 = vpop.f32.mrf.mxu0
        %v2444 = vadd.f32 0.0, %v2443
        %v2445 = vpop.f32.mrf.mxu0
        %2446 = vmatprep.mubr.bf16.mxu0 0
        %2447 = vmatmul.mubr.bf16.gmra.mxu0 %v2312
        %v2448 = vpop.f32.mrf.mxu0
        %v2449 = vadd.f32 0.0, %v2448
        %v2450 = vpop.f32.mrf.mxu0
        %v2451 = vpop.f32.mrf.mxu0
        %v2452 = vadd.f32 0.0, %v2451
        %v2453 = vpop.f32.mrf.mxu0
        %2454 = vmatprep.mubr.bf16.mxu0 0
        %2455 = vmatmul.mubr.bf16.gmra.mxu0 %v2315
        %v2456 = vpop.f32.mrf.mxu0
        %v2457 = vadd.f32 0.0, %v2456
        %v2458 = vpop.f32.mrf.mxu0
        %v2459 = vpop.f32.mrf.mxu0
        %v2460 = vadd.f32 0.0, %v2459
        %v2461 = vpop.f32.mrf.mxu0
        %2462 = vmatprep.mubr.bf16.mxu0 0
        %2463 = vmatmul.mubr.bf16.gmra.mxu0 %v2318
        %v2464 = vpop.f32.mrf.mxu0
        %v2465 = vadd.f32 0.0, %v2464
        %v2466 = vpop.f32.mrf.mxu0
        %v2467 = vpop.f32.mrf.mxu0
        %v2468 = vadd.f32 0.0, %v2467
        %v2469 = vpop.f32.mrf.mxu0
        %2470 = vmatprep.mubr.bf16.mxu0 0
        %2471 = vmatmul.mubr.bf16.gmra.mxu0 %v2321
        %v2472 = vpop.f32.mrf.mxu0
        %v2473 = vadd.f32 0.0, %v2472
        %v2474 = vpop.f32.mrf.mxu0
        %v2475 = vpop.f32.mrf.mxu0
        %v2476 = vadd.f32 0.0, %v2475
        %v2477 = vpop.f32.mrf.mxu0
        %2478 = vmatprep.mubr.bf16.mxu0 0
        %2479 = vmatmul.mubr.bf16.gmra.mxu0 %v2324
        %v2480 = vpop.f32.mrf.mxu0
        %v2481 = vadd.f32 0.0, %v2480
        %v2482 = vpop.f32.mrf.mxu0
        %v2483 = vpop.f32.mrf.mxu0
        %v2484 = vadd.f32 0.0, %v2483
        %v2485 = vpop.f32.mrf.mxu0
        %2486 = vdwg.mxu0
        %v2491 = vunpack.c.l.b16 %v2257
        %v2492 = vunpack.c.l.b16 %v2258
        %v2493 = vunpack.c.l.b16 %v2259
        %v2494 = vunpack.c.l.b16 %v2260
        %v2495 = vpack.c.b16 %v2492, %v2491
        %v2496 = vpack.c.b16 %v2494, %v2493
        %v2500 = vsel %vm763, %v2113, 0
        %v2503 = vsel %vm763, %v2114, 0
        %v2506 = vsel %vm763, %v2115, 0
        %v2509 = vsel %vm763, %v2116, 0
        %v2512 = vsel %vm763, %v2117, 0
        %v2515 = vsel %vm763, %v2118, 0
        %v2518 = vsel %vm763, %v2119, 0
        %v2521 = vsel %vm763, %v2120, 0
        %v2524 = vsel %vm763, %v2121, 0
        %v2527 = vsel %vm763, %v2122, 0
        %v2530 = vsel %vm763, %v2123, 0
        %v2533 = vsel %vm763, %v2124, 0
        %v2536 = vsel %vm763, %v2125, 0
        %v2539 = vsel %vm763, %v2126, 0
        %v2542 = vsel %vm763, %v2127, 0
        %v2545 = vsel %vm763, %v2128, 0
        %2547 = vmatprep.subr.bf16.mxu0 0
        %2548 = vmatpush1.bf16.msra.mxu0 0
        %2549 = vmatprep.subr.bf16.mxu0 0
        %2550 = vmatpush1.bf16.msra.mxu0 0
        %2551 = vmatprep.subr.bf16.mxu0 0
        %2552 = vmatpush1.bf16.msra.mxu0 0
        %2553 = vmatprep.subr.bf16.mxu0 0
        %2554 = vmatpush1.bf16.msra.mxu0 0
        %2555 = vmatprep.subr.bf16.mxu0 0
        %2556 = vmatpush1.bf16.msra.mxu0 0
        %2557 = vmatprep.subr.bf16.mxu0 0
        %2558 = vmatpush1.bf16.msra.mxu0 0
        %2559 = vmatprep.subr.bf16.mxu0 0
        %2560 = vmatpush1.bf16.msra.mxu0 %v2496
        %2561 = vmatprep.subr.bf16.mxu0 0
        %2562 = vmatpush1.bf16.msra.mxu0 %v2495
        %2563 = vmatprep.subr.bf16.mxu0 0
        %2564 = vmatpush2.bf16.msra.mxu0 0
        %2565 = vmatprep.subr.bf16.mxu0 0
        %2566 = vmatpush2.bf16.msra.mxu0 0
        %2567 = vmatprep.subr.bf16.mxu0 0
        %2568 = vmatpush2.bf16.msra.mxu0 0
        %2569 = vmatprep.subr.bf16.mxu0 0
        %2570 = vmatpush2.bf16.msra.mxu0 0
        %2571 = vmatprep.subr.bf16.mxu0 0
        %2572 = vmatpush2.bf16.msra.mxu0 0
        %2573 = vmatprep.subr.bf16.mxu0 0
        %2574 = vmatpush2.bf16.msra.mxu0 0
        %2575 = vmatprep.subr.bf16.mxu0 0
        %2576 = vmatpush2.bf16.msra.mxu0 0
        %2577 = vmatprep.subr.bf16.mxu0 0
        %2578 = vmatpush2.bf16.msra.mxu0 0
        %2579 = vmatprep.mubr.bf16.mxu0 0
        %2580 = vmatmul.mubr.bf16.gmra.mxu0 %v2500
        %v2581 = vpop.f32.mrf.mxu0
        %v2582 = vadd.f32 %v2361, %v2581
        %v2583 = vpop.f32.mrf.mxu0
        %v2584 = vpop.f32.mrf.mxu0
        %v2585 = vadd.f32 %v2364, %v2584
        %v2586 = vpop.f32.mrf.mxu0
        %2587 = vmatprep.mubr.bf16.mxu0 0
        %2588 = vmatmul.mubr.bf16.gmra.mxu0 %v2503
        %v2589 = vpop.f32.mrf.mxu0
        %v2590 = vadd.f32 %v2369, %v2589
        %v2591 = vpop.f32.mrf.mxu0
        %v2592 = vpop.f32.mrf.mxu0
        %v2593 = vadd.f32 %v2372, %v2592
        %v2594 = vpop.f32.mrf.mxu0
        %2595 = vmatprep.mubr.bf16.mxu0 0
        %2596 = vmatmul.mubr.bf16.gmra.mxu0 %v2506
        %v2597 = vpop.f32.mrf.mxu0
        %v2598 = vadd.f32 %v2377, %v2597
        %v2599 = vpop.f32.mrf.mxu0
        %v2600 = vpop.f32.mrf.mxu0
        %v2601 = vadd.f32 %v2380, %v2600
        %v2602 = vpop.f32.mrf.mxu0
        %2603 = vmatprep.mubr.bf16.mxu0 0
        %2604 = vmatmul.mubr.bf16.gmra.mxu0 %v2509
        %v2605 = vpop.f32.mrf.mxu0
        %v2606 = vadd.f32 %v2385, %v2605
        %v2607 = vpop.f32.mrf.mxu0
        %v2608 = vpop.f32.mrf.mxu0
        %v2609 = vadd.f32 %v2388, %v2608
        %v2610 = vpop.f32.mrf.mxu0
        %2611 = vmatprep.mubr.bf16.mxu0 0
        %2612 = vmatmul.mubr.bf16.gmra.mxu0 %v2512
        %v2613 = vpop.f32.mrf.mxu0
        %v2614 = vadd.f32 %v2393, %v2613
        %v2615 = vpop.f32.mrf.mxu0
        %v2616 = vpop.f32.mrf.mxu0
        %v2617 = vadd.f32 %v2396, %v2616
        %v2618 = vpop.f32.mrf.mxu0
        %2619 = vmatprep.mubr.bf16.mxu0 0
        %2620 = vmatmul.mubr.bf16.gmra.mxu0 %v2515
        %v2621 = vpop.f32.mrf.mxu0
        %v2622 = vadd.f32 %v2401, %v2621
        %v2623 = vpop.f32.mrf.mxu0
        %v2624 = vpop.f32.mrf.mxu0
        %v2625 = vadd.f32 %v2404, %v2624
        %v2626 = vpop.f32.mrf.mxu0
        %2627 = vmatprep.mubr.bf16.mxu0 0
        %2628 = vmatmul.mubr.bf16.gmra.mxu0 %v2518
        %v2629 = vpop.f32.mrf.mxu0
        %v2630 = vadd.f32 %v2409, %v2629
        %v2631 = vpop.f32.mrf.mxu0
        %v2632 = vpop.f32.mrf.mxu0
        %v2633 = vadd.f32 %v2412, %v2632
        %v2634 = vpop.f32.mrf.mxu0
        %2635 = vmatprep.mubr.bf16.mxu0 0
        %2636 = vmatmul.mubr.bf16.gmra.mxu0 %v2521
        %v2637 = vpop.f32.mrf.mxu0
        %v2638 = vadd.f32 %v2417, %v2637
        %v2639 = vpop.f32.mrf.mxu0
        %v2640 = vpop.f32.mrf.mxu0
        %v2641 = vadd.f32 %v2420, %v2640
        %v2642 = vpop.f32.mrf.mxu0
        %2643 = vmatprep.mubr.bf16.mxu0 0
        %2644 = vmatmul.mubr.bf16.gmra.mxu0 %v2524
        %v2645 = vpop.f32.mrf.mxu0
        %v2646 = vadd.f32 %v2425, %v2645
        %v2647 = vpop.f32.mrf.mxu0
        %v2648 = vpop.f32.mrf.mxu0
        %v2649 = vadd.f32 %v2428, %v2648
        %v2650 = vpop.f32.mrf.mxu0
        %2651 = vmatprep.mubr.bf16.mxu0 0
        %2652 = vmatmul.mubr.bf16.gmra.mxu0 %v2527
        %v2653 = vpop.f32.mrf.mxu0
        %v2654 = vadd.f32 %v2433, %v2653
        %v2655 = vpop.f32.mrf.mxu0
        %v2656 = vpop.f32.mrf.mxu0
        %v2657 = vadd.f32 %v2436, %v2656
        %v2658 = vpop.f32.mrf.mxu0
        %2659 = vmatprep.mubr.bf16.mxu0 0
        %2660 = vmatmul.mubr.bf16.gmra.mxu0 %v2530
        %v2661 = vpop.f32.mrf.mxu0
        %v2662 = vadd.f32 %v2441, %v2661
        %v2663 = vpop.f32.mrf.mxu0
        %v2664 = vpop.f32.mrf.mxu0
        %v2665 = vadd.f32 %v2444, %v2664
        %v2666 = vpop.f32.mrf.mxu0
        %2667 = vmatprep.mubr.bf16.mxu0 0
        %2668 = vmatmul.mubr.bf16.gmra.mxu0 %v2533
        %v2669 = vpop.f32.mrf.mxu0
        %v2670 = vadd.f32 %v2449, %v2669
        %v2671 = vpop.f32.mrf.mxu0
        %v2672 = vpop.f32.mrf.mxu0
        %v2673 = vadd.f32 %v2452, %v2672
        %v2674 = vpop.f32.mrf.mxu0
        %2675 = vmatprep.mubr.bf16.mxu0 0
        %2676 = vmatmul.mubr.bf16.gmra.mxu0 %v2536
        %v2677 = vpop.f32.mrf.mxu0
        %v2678 = vadd.f32 %v2457, %v2677
        %v2679 = vpop.f32.mrf.mxu0
        %v2680 = vpop.f32.mrf.mxu0
        %v2681 = vadd.f32 %v2460, %v2680
        %v2682 = vpop.f32.mrf.mxu0
        %2683 = vmatprep.mubr.bf16.mxu0 0
        %2684 = vmatmul.mubr.bf16.gmra.mxu0 %v2539
        %v2685 = vpop.f32.mrf.mxu0
        %v2686 = vadd.f32 %v2465, %v2685
        %v2687 = vpop.f32.mrf.mxu0
        %v2688 = vpop.f32.mrf.mxu0
        %v2689 = vadd.f32 %v2468, %v2688
        %v2690 = vpop.f32.mrf.mxu0
        %2691 = vmatprep.mubr.bf16.mxu0 0
        %2692 = vmatmul.mubr.bf16.gmra.mxu0 %v2542
        %v2693 = vpop.f32.mrf.mxu0
        %v2694 = vadd.f32 %v2473, %v2693
        %v2695 = vpop.f32.mrf.mxu0
        %v2696 = vpop.f32.mrf.mxu0
        %v2697 = vadd.f32 %v2476, %v2696
        %v2698 = vpop.f32.mrf.mxu0
        %2699 = vmatprep.mubr.bf16.mxu0 0
        %2700 = vmatmul.mubr.bf16.gmra.mxu0 %v2545
        %v2701 = vpop.f32.mrf.mxu0
        %v2702 = vadd.f32 %v2481, %v2701
        %v2703 = vpop.f32.mrf.mxu0
        %v2704 = vpop.f32.mrf.mxu0
        %v2705 = vadd.f32 %v2484, %v2704
        %v2706 = vpop.f32.mrf.mxu0
        %2707 = vdwg.mxu0
        %s2708 = scalar_lea.vmem [#allocation8], 32
        %v2709 = vld [vmem:[%s2708] sm:$0xf]
        %v2710 = vld [vmem:[%s2708 + $0x4] sm:$0xf]
        %v2711 = vld [vmem:[%s2708 + $0x8] sm:$0xf]
        %v2712 = vld [vmem:[%s2708 + $0xc] sm:$0xf]
        %v2717 = vunpack.c.l.b16 %v2709
        %v2718 = vunpack.c.l.b16 %v2710
        %v2719 = vunpack.c.l.b16 %v2711
        %v2720 = vunpack.c.l.b16 %v2712
        %v2721 = vpack.c.b16 %v2718, %v2717
        %v2722 = vpack.c.b16 %v2720, %v2719
        %v2726 = vsel %vm763, %v2241, 0
        %v2729 = vsel %vm763, %v2242, 0
        %v2732 = vsel %vm763, %v2243, 0
        %v2735 = vsel %vm763, %v2244, 0
        %v2738 = vsel %vm763, %v2245, 0
        %v2741 = vsel %vm763, %v2246, 0
        %v2744 = vsel %vm763, %v2247, 0
        %v2747 = vsel %vm763, %v2248, 0
        %v2750 = vsel %vm763, %v2249, 0
        %v2753 = vsel %vm763, %v2250, 0
        %v2756 = vsel %vm763, %v2251, 0
        %v2759 = vsel %vm763, %v2252, 0
        %v2762 = vsel %vm763, %v2253, 0
        %v2765 = vsel %vm763, %v2254, 0
        %v2768 = vsel %vm763, %v2255, 0
        %v2771 = vsel %vm763, %v2256, 0
        %2773 = vmatprep.subr.bf16.mxu0 0
        %2774 = vmatpush1.bf16.msra.mxu0 0
        %2775 = vmatprep.subr.bf16.mxu0 0
        %2776 = vmatpush1.bf16.msra.mxu0 0
        %2777 = vmatprep.subr.bf16.mxu0 0
        %2778 = vmatpush1.bf16.msra.mxu0 0
        %2779 = vmatprep.subr.bf16.mxu0 0
        %2780 = vmatpush1.bf16.msra.mxu0 0
        %2781 = vmatprep.subr.bf16.mxu0 0
        %2782 = vmatpush1.bf16.msra.mxu0 0
        %2783 = vmatprep.subr.bf16.mxu0 0
        %2784 = vmatpush1.bf16.msra.mxu0 0
        %2785 = vmatprep.subr.bf16.mxu0 0
        %2786 = vmatpush1.bf16.msra.mxu0 %v2722
        %2787 = vmatprep.subr.bf16.mxu0 0
        %2788 = vmatpush1.bf16.msra.mxu0 %v2721
        %2789 = vmatprep.subr.bf16.mxu0 0
        %2790 = vmatpush2.bf16.msra.mxu0 0
        %2791 = vmatprep.subr.bf16.mxu0 0
        %2792 = vmatpush2.bf16.msra.mxu0 0
        %2793 = vmatprep.subr.bf16.mxu0 0
        %2794 = vmatpush2.bf16.msra.mxu0 0
        %2795 = vmatprep.subr.bf16.mxu0 0
        %2796 = vmatpush2.bf16.msra.mxu0 0
        %2797 = vmatprep.subr.bf16.mxu0 0
        %2798 = vmatpush2.bf16.msra.mxu0 0
        %2799 = vmatprep.subr.bf16.mxu0 0
        %2800 = vmatpush2.bf16.msra.mxu0 0
        %2801 = vmatprep.subr.bf16.mxu0 0
        %2802 = vmatpush2.bf16.msra.mxu0 0
        %2803 = vmatprep.subr.bf16.mxu0 0
        %2804 = vmatpush2.bf16.msra.mxu0 0
        %2805 = vmatprep.mubr.bf16.mxu0 0
        %2806 = vmatmul.mubr.bf16.gmra.mxu0 %v2726
        %v2807 = vpop.f32.mrf.mxu0
        %v2808 = vadd.f32 0.0, %v2807
        %v2809 = vpop.f32.mrf.mxu0
        %v2810 = vpop.f32.mrf.mxu0
        %v2811 = vadd.f32 0.0, %v2810
        %v2812 = vpop.f32.mrf.mxu0
        %2813 = vmatprep.mubr.bf16.mxu0 0
        %2814 = vmatmul.mubr.bf16.gmra.mxu0 %v2729
        %v2815 = vpop.f32.mrf.mxu0
        %v2816 = vadd.f32 0.0, %v2815
        %v2817 = vpop.f32.mrf.mxu0
        %v2818 = vpop.f32.mrf.mxu0
        %v2819 = vadd.f32 0.0, %v2818
        %v2820 = vpop.f32.mrf.mxu0
        %2821 = vmatprep.mubr.bf16.mxu0 0
        %2822 = vmatmul.mubr.bf16.gmra.mxu0 %v2732
        %v2823 = vpop.f32.mrf.mxu0
        %v2824 = vadd.f32 0.0, %v2823
        %v2825 = vpop.f32.mrf.mxu0
        %v2826 = vpop.f32.mrf.mxu0
        %v2827 = vadd.f32 0.0, %v2826
        %v2828 = vpop.f32.mrf.mxu0
        %2829 = vmatprep.mubr.bf16.mxu0 0
        %2830 = vmatmul.mubr.bf16.gmra.mxu0 %v2735
        %v2831 = vpop.f32.mrf.mxu0
        %v2832 = vadd.f32 0.0, %v2831
        %v2833 = vpop.f32.mrf.mxu0
        %v2834 = vpop.f32.mrf.mxu0
        %v2835 = vadd.f32 0.0, %v2834
        %v2836 = vpop.f32.mrf.mxu0
        %2837 = vmatprep.mubr.bf16.mxu0 0
        %2838 = vmatmul.mubr.bf16.gmra.mxu0 %v2738
        %v2839 = vpop.f32.mrf.mxu0
        %v2840 = vadd.f32 0.0, %v2839
        %v2841 = vpop.f32.mrf.mxu0
        %v2842 = vpop.f32.mrf.mxu0
        %v2843 = vadd.f32 0.0, %v2842
        %v2844 = vpop.f32.mrf.mxu0
        %2845 = vmatprep.mubr.bf16.mxu0 0
        %2846 = vmatmul.mubr.bf16.gmra.mxu0 %v2741
        %v2847 = vpop.f32.mrf.mxu0
        %v2848 = vadd.f32 0.0, %v2847
        %v2849 = vpop.f32.mrf.mxu0
        %v2850 = vpop.f32.mrf.mxu0
        %v2851 = vadd.f32 0.0, %v2850
        %v2852 = vpop.f32.mrf.mxu0
        %2853 = vmatprep.mubr.bf16.mxu0 0
        %2854 = vmatmul.mubr.bf16.gmra.mxu0 %v2744
        %v2855 = vpop.f32.mrf.mxu0
        %v2856 = vadd.f32 0.0, %v2855
        %v2857 = vpop.f32.mrf.mxu0
        %v2858 = vpop.f32.mrf.mxu0
        %v2859 = vadd.f32 0.0, %v2858
        %v2860 = vpop.f32.mrf.mxu0
        %2861 = vmatprep.mubr.bf16.mxu0 0
        %2862 = vmatmul.mubr.bf16.gmra.mxu0 %v2747
        %v2863 = vpop.f32.mrf.mxu0
        %v2864 = vadd.f32 0.0, %v2863
        %v2865 = vpop.f32.mrf.mxu0
        %v2866 = vpop.f32.mrf.mxu0
        %v2867 = vadd.f32 0.0, %v2866
        %v2868 = vpop.f32.mrf.mxu0
        %2869 = vmatprep.mubr.bf16.mxu0 0
        %2870 = vmatmul.mubr.bf16.gmra.mxu0 %v2750
        %v2871 = vpop.f32.mrf.mxu0
        %v2872 = vadd.f32 0.0, %v2871
        %v2873 = vpop.f32.mrf.mxu0
        %v2874 = vpop.f32.mrf.mxu0
        %v2875 = vadd.f32 0.0, %v2874
        %v2876 = vpop.f32.mrf.mxu0
        %2877 = vmatprep.mubr.bf16.mxu0 0
        %2878 = vmatmul.mubr.bf16.gmra.mxu0 %v2753
        %v2879 = vpop.f32.mrf.mxu0
        %v2880 = vadd.f32 0.0, %v2879
        %v2881 = vpop.f32.mrf.mxu0
        %v2882 = vpop.f32.mrf.mxu0
        %v2883 = vadd.f32 0.0, %v2882
        %v2884 = vpop.f32.mrf.mxu0
        %2885 = vmatprep.mubr.bf16.mxu0 0
        %2886 = vmatmul.mubr.bf16.gmra.mxu0 %v2756
        %v2887 = vpop.f32.mrf.mxu0
        %v2888 = vadd.f32 0.0, %v2887
        %v2889 = vpop.f32.mrf.mxu0
        %v2890 = vpop.f32.mrf.mxu0
        %v2891 = vadd.f32 0.0, %v2890
        %v2892 = vpop.f32.mrf.mxu0
        %2893 = vmatprep.mubr.bf16.mxu0 0
        %2894 = vmatmul.mubr.bf16.gmra.mxu0 %v2759
        %v2895 = vpop.f32.mrf.mxu0
        %v2896 = vadd.f32 0.0, %v2895
        %v2897 = vpop.f32.mrf.mxu0
        %v2898 = vpop.f32.mrf.mxu0
        %v2899 = vadd.f32 0.0, %v2898
        %v2900 = vpop.f32.mrf.mxu0
        %2901 = vmatprep.mubr.bf16.mxu0 0
        %2902 = vmatmul.mubr.bf16.gmra.mxu0 %v2762
        %v2903 = vpop.f32.mrf.mxu0
        %v2904 = vadd.f32 0.0, %v2903
        %v2905 = vpop.f32.mrf.mxu0
        %v2906 = vpop.f32.mrf.mxu0
        %v2907 = vadd.f32 0.0, %v2906
        %v2908 = vpop.f32.mrf.mxu0
        %2909 = vmatprep.mubr.bf16.mxu0 0
        %2910 = vmatmul.mubr.bf16.gmra.mxu0 %v2765
        %v2911 = vpop.f32.mrf.mxu0
        %v2912 = vadd.f32 0.0, %v2911
        %v2913 = vpop.f32.mrf.mxu0
        %v2914 = vpop.f32.mrf.mxu0
        %v2915 = vadd.f32 0.0, %v2914
        %v2916 = vpop.f32.mrf.mxu0
        %2917 = vmatprep.mubr.bf16.mxu0 0
        %2918 = vmatmul.mubr.bf16.gmra.mxu0 %v2768
        %v2919 = vpop.f32.mrf.mxu0
        %v2920 = vadd.f32 0.0, %v2919
        %v2921 = vpop.f32.mrf.mxu0
        %v2922 = vpop.f32.mrf.mxu0
        %v2923 = vadd.f32 0.0, %v2922
        %v2924 = vpop.f32.mrf.mxu0
        %2925 = vmatprep.mubr.bf16.mxu0 0
        %2926 = vmatmul.mubr.bf16.gmra.mxu0 %v2771
        %v2927 = vpop.f32.mrf.mxu0
        %v2928 = vadd.f32 0.0, %v2927
        %v2929 = vpop.f32.mrf.mxu0
        %v2930 = vpop.f32.mrf.mxu0
        %v2931 = vadd.f32 0.0, %v2930
        %v2932 = vpop.f32.mrf.mxu0
        %2933 = vdwg.mxu0
        %v2934 = vadd.f32 %v2582, %v2808
        %v2935 = vadd.f32 %v2585, %v2811
        %v2936 = vadd.f32 %v2590, %v2816
        %v2937 = vadd.f32 %v2593, %v2819
        %v2938 = vadd.f32 %v2598, %v2824
        %v2939 = vadd.f32 %v2601, %v2827
        %v2940 = vadd.f32 %v2606, %v2832
        %v2941 = vadd.f32 %v2609, %v2835
        %v2942 = vadd.f32 %v2614, %v2840
        %v2943 = vadd.f32 %v2617, %v2843
        %v2944 = vadd.f32 %v2622, %v2848
        %v2945 = vadd.f32 %v2625, %v2851
        %v2946 = vadd.f32 %v2630, %v2856
        %v2947 = vadd.f32 %v2633, %v2859
        %v2948 = vadd.f32 %v2638, %v2864
        %v2949 = vadd.f32 %v2641, %v2867
        %v2950 = vadd.f32 %v2646, %v2872
        %v2951 = vadd.f32 %v2649, %v2875
        %v2952 = vadd.f32 %v2654, %v2880
        %v2953 = vadd.f32 %v2657, %v2883
        %v2954 = vadd.f32 %v2662, %v2888
        %v2955 = vadd.f32 %v2665, %v2891
        %v2956 = vadd.f32 %v2670, %v2896
        %v2957 = vadd.f32 %v2673, %v2899
        %v2958 = vadd.f32 %v2678, %v2904
        %v2959 = vadd.f32 %v2681, %v2907
        %v2960 = vadd.f32 %v2686, %v2912
        %v2961 = vadd.f32 %v2689, %v2915
        %v2962 = vadd.f32 %v2694, %v2920
        %v2963 = vadd.f32 %v2697, %v2923
        %v2964 = vadd.f32 %v2702, %v2928
        %v2965 = vadd.f32 %v2705, %v2931
        %v2966 = vld [vmem:[%s6] sm:$0x1]
        %v2968 = vlaneseq
        %v2969 = vshrl.u32 %v2968, 7
        %v2970 = vsub.s32 0, %v2969
        %v2971 = vrot.slane %v2966, %v2970
        %v2973 = vadd.f32 %v2934, %v2971
        %v2974 = vadd.f32 %v2935, %v2971
        %v2975 = vadd.f32 %v2936, %v2971
        %v2976 = vadd.f32 %v2937, %v2971
        %v2977 = vadd.f32 %v2938, %v2971
        %v2978 = vadd.f32 %v2939, %v2971
        %v2979 = vadd.f32 %v2940, %v2971
        %v2980 = vadd.f32 %v2941, %v2971
        %v2981 = vadd.f32 %v2942, %v2971
        %v2982 = vadd.f32 %v2943, %v2971
        %v2983 = vadd.f32 %v2944, %v2971
        %v2984 = vadd.f32 %v2945, %v2971
        %v2985 = vadd.f32 %v2946, %v2971
        %v2986 = vadd.f32 %v2947, %v2971
        %v2987 = vadd.f32 %v2948, %v2971
        %v2988 = vadd.f32 %v2949, %v2971
        %v2989 = vadd.f32 %v2950, %v2971
        %v2990 = vadd.f32 %v2951, %v2971
        %v2991 = vadd.f32 %v2952, %v2971
        %v2992 = vadd.f32 %v2953, %v2971
        %v2993 = vadd.f32 %v2954, %v2971
        %v2994 = vadd.f32 %v2955, %v2971
        %v2995 = vadd.f32 %v2956, %v2971
        %v2996 = vadd.f32 %v2957, %v2971
        %v2997 = vadd.f32 %v2958, %v2971
        %v2998 = vadd.f32 %v2959, %v2971
        %v2999 = vadd.f32 %v2960, %v2971
        %v3000 = vadd.f32 %v2961, %v2971
        %v3001 = vadd.f32 %v2962, %v2971
        %v3002 = vadd.f32 %v2963, %v2971
        %v3003 = vadd.f32 %v2964, %v2971
        %v3004 = vadd.f32 %v2965, %v2971
        %v3005 = vmax.f32 %v2973, 0.0
        %v3006 = vmax.f32 %v2974, 0.0
        %v3007 = vmax.f32 %v2975, 0.0
        %v3008 = vmax.f32 %v2976, 0.0
        %v3009 = vmax.f32 %v2977, 0.0
        %v3010 = vmax.f32 %v2978, 0.0
        %v3011 = vmax.f32 %v2979, 0.0
        %v3012 = vmax.f32 %v2980, 0.0
        %v3013 = vmax.f32 %v2981, 0.0
        %v3014 = vmax.f32 %v2982, 0.0
        %v3015 = vmax.f32 %v2983, 0.0
        %v3016 = vmax.f32 %v2984, 0.0
        %v3017 = vmax.f32 %v2985, 0.0
        %v3018 = vmax.f32 %v2986, 0.0
        %v3019 = vmax.f32 %v2987, 0.0
        %v3020 = vmax.f32 %v2988, 0.0
        %v3021 = vmax.f32 %v2989, 0.0
        %v3022 = vmax.f32 %v2990, 0.0
        %v3023 = vmax.f32 %v2991, 0.0
        %v3024 = vmax.f32 %v2992, 0.0
        %v3025 = vmax.f32 %v2993, 0.0
        %v3026 = vmax.f32 %v2994, 0.0
        %v3027 = vmax.f32 %v2995, 0.0
        %v3028 = vmax.f32 %v2996, 0.0
        %v3029 = vmax.f32 %v2997, 0.0
        %v3030 = vmax.f32 %v2998, 0.0
        %v3031 = vmax.f32 %v2999, 0.0
        %v3032 = vmax.f32 %v3000, 0.0
        %v3033 = vmax.f32 %v3001, 0.0
        %v3034 = vmax.f32 %v3002, 0.0
        %v3035 = vmax.f32 %v3003, 0.0
        %v3036 = vmax.f32 %v3004, 0.0
        %v3037 = vsel %vm763, %v3005, 0.0
        %3038 = vadd.xlane.f32.xlu0 %v3037
        %v3039 = vpop.xlane.xlu0 %3038
        %v3040 = vsel %vm763, %v3006, 0.0
        %3041 = vadd.xlane.f32.xlu0 %v3040
        %v3042 = vpop.xlane.xlu0 %3041
        %v3043 = vsel %vm763, %v3007, 0.0
        %3044 = vadd.xlane.f32.xlu0 %v3043
        %v3045 = vpop.xlane.xlu0 %3044
        %v3046 = vsel %vm763, %v3008, 0.0
        %3047 = vadd.xlane.f32.xlu0 %v3046
        %v3048 = vpop.xlane.xlu0 %3047
        %v3049 = vsel %vm763, %v3009, 0.0
        %3050 = vadd.xlane.f32.xlu0 %v3049
        %v3051 = vpop.xlane.xlu0 %3050
        %v3052 = vsel %vm763, %v3010, 0.0
        %3053 = vadd.xlane.f32.xlu0 %v3052
        %v3054 = vpop.xlane.xlu0 %3053
        %v3055 = vsel %vm763, %v3011, 0.0
        %3056 = vadd.xlane.f32.xlu0 %v3055
        %v3057 = vpop.xlane.xlu0 %3056
        %v3058 = vsel %vm763, %v3012, 0.0
        %3059 = vadd.xlane.f32.xlu0 %v3058
        %v3060 = vpop.xlane.xlu0 %3059
        %v3061 = vsel %vm763, %v3013, 0.0
        %3062 = vadd.xlane.f32.xlu0 %v3061
        %v3063 = vpop.xlane.xlu0 %3062
        %v3064 = vsel %vm763, %v3014, 0.0
        %3065 = vadd.xlane.f32.xlu0 %v3064
        %v3066 = vpop.xlane.xlu0 %3065
        %v3067 = vsel %vm763, %v3015, 0.0
        %3068 = vadd.xlane.f32.xlu0 %v3067
        %v3069 = vpop.xlane.xlu0 %3068
        %v3070 = vsel %vm763, %v3016, 0.0
        %3071 = vadd.xlane.f32.xlu0 %v3070
        %v3072 = vpop.xlane.xlu0 %3071
        %v3073 = vsel %vm763, %v3017, 0.0
        %3074 = vadd.xlane.f32.xlu0 %v3073
        %v3075 = vpop.xlane.xlu0 %3074
        %v3076 = vsel %vm763, %v3018, 0.0
        %3077 = vadd.xlane.f32.xlu0 %v3076
        %v3078 = vpop.xlane.xlu0 %3077
        %v3079 = vsel %vm763, %v3019, 0.0
        %3080 = vadd.xlane.f32.xlu0 %v3079
        %v3081 = vpop.xlane.xlu0 %3080
        %v3082 = vsel %vm763, %v3020, 0.0
        %3083 = vadd.xlane.f32.xlu0 %v3082
        %v3084 = vpop.xlane.xlu0 %3083
        %v3085 = vsel %vm763, %v3021, 0.0
        %3086 = vadd.xlane.f32.xlu0 %v3085
        %v3087 = vpop.xlane.xlu0 %3086
        %v3088 = vsel %vm763, %v3022, 0.0
        %3089 = vadd.xlane.f32.xlu0 %v3088
        %v3090 = vpop.xlane.xlu0 %3089
        %v3091 = vsel %vm763, %v3023, 0.0
        %3092 = vadd.xlane.f32.xlu0 %v3091
        %v3093 = vpop.xlane.xlu0 %3092
        %v3094 = vsel %vm763, %v3024, 0.0
        %3095 = vadd.xlane.f32.xlu0 %v3094
        %v3096 = vpop.xlane.xlu0 %3095
        %v3097 = vsel %vm763, %v3025, 0.0
        %3098 = vadd.xlane.f32.xlu0 %v3097
        %v3099 = vpop.xlane.xlu0 %3098
        %v3100 = vsel %vm763, %v3026, 0.0
        %3101 = vadd.xlane.f32.xlu0 %v3100
        %v3102 = vpop.xlane.xlu0 %3101
        %v3103 = vsel %vm763, %v3027, 0.0
        %3104 = vadd.xlane.f32.xlu0 %v3103
        %v3105 = vpop.xlane.xlu0 %3104
        %v3106 = vsel %vm763, %v3028, 0.0
        %3107 = vadd.xlane.f32.xlu0 %v3106
        %v3108 = vpop.xlane.xlu0 %3107
        %v3109 = vsel %vm763, %v3029, 0.0
        %3110 = vadd.xlane.f32.xlu0 %v3109
        %v3111 = vpop.xlane.xlu0 %3110
        %v3112 = vsel %vm763, %v3030, 0.0
        %3113 = vadd.xlane.f32.xlu0 %v3112
        %v3114 = vpop.xlane.xlu0 %3113
        %v3115 = vsel %vm763, %v3031, 0.0
        %3116 = vadd.xlane.f32.xlu0 %v3115
        %v3117 = vpop.xlane.xlu0 %3116
        %v3118 = vsel %vm763, %v3032, 0.0
        %3119 = vadd.xlane.f32.xlu0 %v3118
        %v3120 = vpop.xlane.xlu0 %3119
        %v3121 = vsel %vm763, %v3033, 0.0
        %3122 = vadd.xlane.f32.xlu0 %v3121
        %v3123 = vpop.xlane.xlu0 %3122
        %v3124 = vsel %vm763, %v3034, 0.0
        %3125 = vadd.xlane.f32.xlu0 %v3124
        %v3126 = vpop.xlane.xlu0 %3125
        %v3127 = vsel %vm763, %v3035, 0.0
        %3128 = vadd.xlane.f32.xlu0 %v3127
        %v3129 = vpop.xlane.xlu0 %3128
        %v3130 = vsel %vm763, %v3036, 0.0
        %3131 = vadd.xlane.f32.xlu0 %v3130
        %v3132 = vpop.xlane.xlu0 %3131
        %v3133 = vmul.f32 %v3039, 0.03125
        %v3134 = vmul.f32 %v3042, 0.03125
        %v3135 = vmul.f32 %v3045, 0.03125
        %v3136 = vmul.f32 %v3048, 0.03125
        %v3137 = vmul.f32 %v3051, 0.03125
        %v3138 = vmul.f32 %v3054, 0.03125
        %v3139 = vmul.f32 %v3057, 0.03125
        %v3140 = vmul.f32 %v3060, 0.03125
        %v3141 = vmul.f32 %v3063, 0.03125
        %v3142 = vmul.f32 %v3066, 0.03125
        %v3143 = vmul.f32 %v3069, 0.03125
        %v3144 = vmul.f32 %v3072, 0.03125
        %v3145 = vmul.f32 %v3075, 0.03125
        %v3146 = vmul.f32 %v3078, 0.03125
        %v3147 = vmul.f32 %v3081, 0.03125
        %v3148 = vmul.f32 %v3084, 0.03125
        %v3149 = vmul.f32 %v3087, 0.03125
        %v3150 = vmul.f32 %v3090, 0.03125
        %v3151 = vmul.f32 %v3093, 0.03125
        %v3152 = vmul.f32 %v3096, 0.03125
        %v3153 = vmul.f32 %v3099, 0.03125
        %v3154 = vmul.f32 %v3102, 0.03125
        %v3155 = vmul.f32 %v3105, 0.03125
        %v3156 = vmul.f32 %v3108, 0.03125
        %v3157 = vmul.f32 %v3111, 0.03125
        %v3158 = vmul.f32 %v3114, 0.03125
        %v3159 = vmul.f32 %v3117, 0.03125
        %v3160 = vmul.f32 %v3120, 0.03125
        %v3161 = vmul.f32 %v3123, 0.03125
        %v3162 = vmul.f32 %v3126, 0.03125
        %v3163 = vmul.f32 %v3129, 0.03125
        %v3164 = vmul.f32 %v3132, 0.03125
        %v3165 = vsub.f32 %v3005, %v3133
        %v3166 = vsub.f32 %v3006, %v3134
        %v3167 = vsub.f32 %v3007, %v3135
        %v3168 = vsub.f32 %v3008, %v3136
        %v3169 = vsub.f32 %v3009, %v3137
        %v3170 = vsub.f32 %v3010, %v3138
        %v3171 = vsub.f32 %v3011, %v3139
        %v3172 = vsub.f32 %v3012, %v3140
        %v3173 = vsub.f32 %v3013, %v3141
        %v3174 = vsub.f32 %v3014, %v3142
        %v3175 = vsub.f32 %v3015, %v3143
        %v3176 = vsub.f32 %v3016, %v3144
        %v3177 = vsub.f32 %v3017, %v3145
        %v3178 = vsub.f32 %v3018, %v3146
        %v3179 = vsub.f32 %v3019, %v3147
        %v3180 = vsub.f32 %v3020, %v3148
        %v3181 = vsub.f32 %v3021, %v3149
        %v3182 = vsub.f32 %v3022, %v3150
        %v3183 = vsub.f32 %v3023, %v3151
        %v3184 = vsub.f32 %v3024, %v3152
        %v3185 = vsub.f32 %v3025, %v3153
        %v3186 = vsub.f32 %v3026, %v3154
        %v3187 = vsub.f32 %v3027, %v3155
        %v3188 = vsub.f32 %v3028, %v3156
        %v3189 = vsub.f32 %v3029, %v3157
        %v3190 = vsub.f32 %v3030, %v3158
        %v3191 = vsub.f32 %v3031, %v3159
        %v3192 = vsub.f32 %v3032, %v3160
        %v3193 = vsub.f32 %v3033, %v3161
        %v3194 = vsub.f32 %v3034, %v3162
        %v3195 = vsub.f32 %v3035, %v3163
        %v3196 = vsub.f32 %v3036, %v3164
        %v3197 = vmul.f32 %v3165, %v3165
        %v3198 = vmul.f32 %v3166, %v3166
        %v3199 = vmul.f32 %v3167, %v3167
        %v3200 = vmul.f32 %v3168, %v3168
        %v3201 = vmul.f32 %v3169, %v3169
        %v3202 = vmul.f32 %v3170, %v3170
        %v3203 = vmul.f32 %v3171, %v3171
        %v3204 = vmul.f32 %v3172, %v3172
        %v3205 = vmul.f32 %v3173, %v3173
        %v3206 = vmul.f32 %v3174, %v3174
        %v3207 = vmul.f32 %v3175, %v3175
        %v3208 = vmul.f32 %v3176, %v3176
        %v3209 = vmul.f32 %v3177, %v3177
        %v3210 = vmul.f32 %v3178, %v3178
        %v3211 = vmul.f32 %v3179, %v3179
        %v3212 = vmul.f32 %v3180, %v3180
        %v3213 = vmul.f32 %v3181, %v3181
        %v3214 = vmul.f32 %v3182, %v3182
        %v3215 = vmul.f32 %v3183, %v3183
        %v3216 = vmul.f32 %v3184, %v3184
        %v3217 = vmul.f32 %v3185, %v3185
        %v3218 = vmul.f32 %v3186, %v3186
        %v3219 = vmul.f32 %v3187, %v3187
        %v3220 = vmul.f32 %v3188, %v3188
        %v3221 = vmul.f32 %v3189, %v3189
        %v3222 = vmul.f32 %v3190, %v3190
        %v3223 = vmul.f32 %v3191, %v3191
        %v3224 = vmul.f32 %v3192, %v3192
        %v3225 = vmul.f32 %v3193, %v3193
        %v3226 = vmul.f32 %v3194, %v3194
        %v3227 = vmul.f32 %v3195, %v3195
        %v3228 = vmul.f32 %v3196, %v3196
        %v3229 = vsel %vm763, %v3197, 0.0
        %3230 = vadd.xlane.f32.xlu0 %v3229
        %v3231 = vpop.xlane.xlu0 %3230
        %v3232 = vsel %vm763, %v3198, 0.0
        %3233 = vadd.xlane.f32.xlu0 %v3232
        %v3234 = vpop.xlane.xlu0 %3233
        %v3235 = vsel %vm763, %v3199, 0.0
        %3236 = vadd.xlane.f32.xlu0 %v3235
        %v3237 = vpop.xlane.xlu0 %3236
        %v3238 = vsel %vm763, %v3200, 0.0
        %3239 = vadd.xlane.f32.xlu0 %v3238
        %v3240 = vpop.xlane.xlu0 %3239
        %v3241 = vsel %vm763, %v3201, 0.0
        %3242 = vadd.xlane.f32.xlu0 %v3241
        %v3243 = vpop.xlane.xlu0 %3242
        %v3244 = vsel %vm763, %v3202, 0.0
        %3245 = vadd.xlane.f32.xlu0 %v3244
        %v3246 = vpop.xlane.xlu0 %3245
        %v3247 = vsel %vm763, %v3203, 0.0
        %3248 = vadd.xlane.f32.xlu0 %v3247
        %v3249 = vpop.xlane.xlu0 %3248
        %v3250 = vsel %vm763, %v3204, 0.0
        %3251 = vadd.xlane.f32.xlu0 %v3250
        %v3252 = vpop.xlane.xlu0 %3251
        %v3253 = vsel %vm763, %v3205, 0.0
        %3254 = vadd.xlane.f32.xlu0 %v3253
        %v3255 = vpop.xlane.xlu0 %3254
        %v3256 = vsel %vm763, %v3206, 0.0
        %3257 = vadd.xlane.f32.xlu0 %v3256
        %v3258 = vpop.xlane.xlu0 %3257
        %v3259 = vsel %vm763, %v3207, 0.0
        %3260 = vadd.xlane.f32.xlu0 %v3259
        %v3261 = vpop.xlane.xlu0 %3260
        %v3262 = vsel %vm763, %v3208, 0.0
        %3263 = vadd.xlane.f32.xlu0 %v3262
        %v3264 = vpop.xlane.xlu0 %3263
        %v3265 = vsel %vm763, %v3209, 0.0
        %3266 = vadd.xlane.f32.xlu0 %v3265
        %v3267 = vpop.xlane.xlu0 %3266
        %v3268 = vsel %vm763, %v3210, 0.0
        %3269 = vadd.xlane.f32.xlu0 %v3268
        %v3270 = vpop.xlane.xlu0 %3269
        %v3271 = vsel %vm763, %v3211, 0.0
        %3272 = vadd.xlane.f32.xlu0 %v3271
        %v3273 = vpop.xlane.xlu0 %3272
        %v3274 = vsel %vm763, %v3212, 0.0
        %3275 = vadd.xlane.f32.xlu0 %v3274
        %v3276 = vpop.xlane.xlu0 %3275
        %v3277 = vsel %vm763, %v3213, 0.0
        %3278 = vadd.xlane.f32.xlu0 %v3277
        %v3279 = vpop.xlane.xlu0 %3278
        %v3280 = vsel %vm763, %v3214, 0.0
        %3281 = vadd.xlane.f32.xlu0 %v3280
        %v3282 = vpop.xlane.xlu0 %3281
        %v3283 = vsel %vm763, %v3215, 0.0
        %3284 = vadd.xlane.f32.xlu0 %v3283
        %v3285 = vpop.xlane.xlu0 %3284
        %v3286 = vsel %vm763, %v3216, 0.0
        %3287 = vadd.xlane.f32.xlu0 %v3286
        %v3288 = vpop.xlane.xlu0 %3287
        %v3289 = vsel %vm763, %v3217, 0.0
        %3290 = vadd.xlane.f32.xlu0 %v3289
        %v3291 = vpop.xlane.xlu0 %3290
        %v3292 = vsel %vm763, %v3218, 0.0
        %3293 = vadd.xlane.f32.xlu0 %v3292
        %v3294 = vpop.xlane.xlu0 %3293
        %v3295 = vsel %vm763, %v3219, 0.0
        %3296 = vadd.xlane.f32.xlu0 %v3295
        %v3297 = vpop.xlane.xlu0 %3296
        %v3298 = vsel %vm763, %v3220, 0.0
        %3299 = vadd.xlane.f32.xlu0 %v3298
        %v3300 = vpop.xlane.xlu0 %3299
        %v3301 = vsel %vm763, %v3221, 0.0
        %3302 = vadd.xlane.f32.xlu0 %v3301
        %v3303 = vpop.xlane.xlu0 %3302
        %v3304 = vsel %vm763, %v3222, 0.0
        %3305 = vadd.xlane.f32.xlu0 %v3304
        %v3306 = vpop.xlane.xlu0 %3305
        %v3307 = vsel %vm763, %v3223, 0.0
        %3308 = vadd.xlane.f32.xlu0 %v3307
        %v3309 = vpop.xlane.xlu0 %3308
        %v3310 = vsel %vm763, %v3224, 0.0
        %3311 = vadd.xlane.f32.xlu0 %v3310
        %v3312 = vpop.xlane.xlu0 %3311
        %v3313 = vsel %vm763, %v3225, 0.0
        %3314 = vadd.xlane.f32.xlu0 %v3313
        %v3315 = vpop.xlane.xlu0 %3314
        %v3316 = vsel %vm763, %v3226, 0.0
        %3317 = vadd.xlane.f32.xlu0 %v3316
        %v3318 = vpop.xlane.xlu0 %3317
        %v3319 = vsel %vm763, %v3227, 0.0
        %3320 = vadd.xlane.f32.xlu0 %v3319
        %v3321 = vpop.xlane.xlu0 %3320
        %v3322 = vsel %vm763, %v3228, 0.0
        %3323 = vadd.xlane.f32.xlu0 %v3322
        %v3324 = vpop.xlane.xlu0 %3323
        %v3325 = vmul.f32 %v3231, 0.03125
        %v3326 = vmul.f32 %v3234, 0.03125
        %v3327 = vmul.f32 %v3237, 0.03125
        %v3328 = vmul.f32 %v3240, 0.03125
        %v3329 = vmul.f32 %v3243, 0.03125
        %v3330 = vmul.f32 %v3246, 0.03125
        %v3331 = vmul.f32 %v3249, 0.03125
        %v3332 = vmul.f32 %v3252, 0.03125
        %v3333 = vmul.f32 %v3255, 0.03125
        %v3334 = vmul.f32 %v3258, 0.03125
        %v3335 = vmul.f32 %v3261, 0.03125
        %v3336 = vmul.f32 %v3264, 0.03125
        %v3337 = vmul.f32 %v3267, 0.03125
        %v3338 = vmul.f32 %v3270, 0.03125
        %v3339 = vmul.f32 %v3273, 0.03125
        %v3340 = vmul.f32 %v3276, 0.03125
        %v3341 = vmul.f32 %v3279, 0.03125
        %v3342 = vmul.f32 %v3282, 0.03125
        %v3343 = vmul.f32 %v3285, 0.03125
        %v3344 = vmul.f32 %v3288, 0.03125
        %v3345 = vmul.f32 %v3291, 0.03125
        %v3346 = vmul.f32 %v3294, 0.03125
        %v3347 = vmul.f32 %v3297, 0.03125
        %v3348 = vmul.f32 %v3300, 0.03125
        %v3349 = vmul.f32 %v3303, 0.03125
        %v3350 = vmul.f32 %v3306, 0.03125
        %v3351 = vmul.f32 %v3309, 0.03125
        %v3352 = vmul.f32 %v3312, 0.03125
        %v3353 = vmul.f32 %v3315, 0.03125
        %v3354 = vmul.f32 %v3318, 0.03125
        %v3355 = vmul.f32 %v3321, 0.03125
        %v3356 = vmul.f32 %v3324, 0.03125
        %v3357 = vadd.f32 %v3325, 1e-05
        %v3358 = vadd.f32 %v3326, 1e-05
        %v3359 = vadd.f32 %v3327, 1e-05
        %v3360 = vadd.f32 %v3328, 1e-05
        %v3361 = vadd.f32 %v3329, 1e-05
        %v3362 = vadd.f32 %v3330, 1e-05
        %v3363 = vadd.f32 %v3331, 1e-05
        %v3364 = vadd.f32 %v3332, 1e-05
        %v3365 = vadd.f32 %v3333, 1e-05
        %v3366 = vadd.f32 %v3334, 1e-05
        %v3367 = vadd.f32 %v3335, 1e-05
        %v3368 = vadd.f32 %v3336, 1e-05
        %v3369 = vadd.f32 %v3337, 1e-05
        %v3370 = vadd.f32 %v3338, 1e-05
        %v3371 = vadd.f32 %v3339, 1e-05
        %v3372 = vadd.f32 %v3340, 1e-05
        %v3373 = vadd.f32 %v3341, 1e-05
        %v3374 = vadd.f32 %v3342, 1e-05
        %v3375 = vadd.f32 %v3343, 1e-05
        %v3376 = vadd.f32 %v3344, 1e-05
        %v3377 = vadd.f32 %v3345, 1e-05
        %v3378 = vadd.f32 %v3346, 1e-05
        %v3379 = vadd.f32 %v3347, 1e-05
        %v3380 = vadd.f32 %v3348, 1e-05
        %v3381 = vadd.f32 %v3349, 1e-05
        %v3382 = vadd.f32 %v3350, 1e-05
        %v3383 = vadd.f32 %v3351, 1e-05
        %v3384 = vadd.f32 %v3352, 1e-05
        %v3385 = vadd.f32 %v3353, 1e-05
        %v3386 = vadd.f32 %v3354, 1e-05
        %v3387 = vadd.f32 %v3355, 1e-05
        %v3388 = vadd.f32 %v3356, 1e-05
        %v3389 = vrsqrt.pop %v3357
        %v3390 = vrsqrt.pop %v3358
        %v3391 = vrsqrt.pop %v3359
        %v3392 = vrsqrt.pop %v3360
        %v3393 = vrsqrt.pop %v3361
        %v3394 = vrsqrt.pop %v3362
        %v3395 = vrsqrt.pop %v3363
        %v3396 = vrsqrt.pop %v3364
        %v3397 = vrsqrt.pop %v3365
        %v3398 = vrsqrt.pop %v3366
        %v3399 = vrsqrt.pop %v3367
        %v3400 = vrsqrt.pop %v3368
        %v3401 = vrsqrt.pop %v3369
        %v3402 = vrsqrt.pop %v3370
        %v3403 = vrsqrt.pop %v3371
        %v3404 = vrsqrt.pop %v3372
        %v3405 = vrsqrt.pop %v3373
        %v3406 = vrsqrt.pop %v3374
        %v3407 = vrsqrt.pop %v3375
        %v3408 = vrsqrt.pop %v3376
        %v3409 = vrsqrt.pop %v3377
        %v3410 = vrsqrt.pop %v3378
        %v3411 = vrsqrt.pop %v3379
        %v3412 = vrsqrt.pop %v3380
        %v3413 = vrsqrt.pop %v3381
        %v3414 = vrsqrt.pop %v3382
        %v3415 = vrsqrt.pop %v3383
        %v3416 = vrsqrt.pop %v3384
        %v3417 = vrsqrt.pop %v3385
        %v3418 = vrsqrt.pop %v3386
        %v3419 = vrsqrt.pop %v3387
        %v3420 = vrsqrt.pop %v3388
        %v3421 = vmul.f32 %v3165, %v3389
        %v3422 = vmul.f32 %v3166, %v3390
        %v3423 = vmul.f32 %v3167, %v3391
        %v3424 = vmul.f32 %v3168, %v3392
        %v3425 = vmul.f32 %v3169, %v3393
        %v3426 = vmul.f32 %v3170, %v3394
        %v3427 = vmul.f32 %v3171, %v3395
        %v3428 = vmul.f32 %v3172, %v3396
        %v3429 = vmul.f32 %v3173, %v3397
        %v3430 = vmul.f32 %v3174, %v3398
        %v3431 = vmul.f32 %v3175, %v3399
        %v3432 = vmul.f32 %v3176, %v3400
        %v3433 = vmul.f32 %v3177, %v3401
        %v3434 = vmul.f32 %v3178, %v3402
        %v3435 = vmul.f32 %v3179, %v3403
        %v3436 = vmul.f32 %v3180, %v3404
        %v3437 = vmul.f32 %v3181, %v3405
        %v3438 = vmul.f32 %v3182, %v3406
        %v3439 = vmul.f32 %v3183, %v3407
        %v3440 = vmul.f32 %v3184, %v3408
        %v3441 = vmul.f32 %v3185, %v3409
        %v3442 = vmul.f32 %v3186, %v3410
        %v3443 = vmul.f32 %v3187, %v3411
        %v3444 = vmul.f32 %v3188, %v3412
        %v3445 = vmul.f32 %v3189, %v3413
        %v3446 = vmul.f32 %v3190, %v3414
        %v3447 = vmul.f32 %v3191, %v3415
        %v3448 = vmul.f32 %v3192, %v3416
        %v3449 = vmul.f32 %v3193, %v3417
        %v3450 = vmul.f32 %v3194, %v3418
        %v3451 = vmul.f32 %v3195, %v3419
        %v3452 = vmul.f32 %v3196, %v3420
        %v3453 = vld [vmem:[%s7] sm:$0x1]
        %v3455 = vlaneseq
        %v3456 = vshrl.u32 %v3455, 7
        %v3457 = vsub.s32 0, %v3456
        %v3458 = vrot.slane %v3453, %v3457
        %v3460 = vmul.f32 %v3421, %v3458
        %v3461 = vmul.f32 %v3422, %v3458
        %v3462 = vmul.f32 %v3423, %v3458
        %v3463 = vmul.f32 %v3424, %v3458
        %v3464 = vmul.f32 %v3425, %v3458
        %v3465 = vmul.f32 %v3426, %v3458
        %v3466 = vmul.f32 %v3427, %v3458
        %v3467 = vmul.f32 %v3428, %v3458
        %v3468 = vmul.f32 %v3429, %v3458
        %v3469 = vmul.f32 %v3430, %v3458
        %v3470 = vmul.f32 %v3431, %v3458
        %v3471 = vmul.f32 %v3432, %v3458
        %v3472 = vmul.f32 %v3433, %v3458
        %v3473 = vmul.f32 %v3434, %v3458
        %v3474 = vmul.f32 %v3435, %v3458
        %v3475 = vmul.f32 %v3436, %v3458
        %v3476 = vmul.f32 %v3437, %v3458
        %v3477 = vmul.f32 %v3438, %v3458
        %v3478 = vmul.f32 %v3439, %v3458
        %v3479 = vmul.f32 %v3440, %v3458
        %v3480 = vmul.f32 %v3441, %v3458
        %v3481 = vmul.f32 %v3442, %v3458
        %v3482 = vmul.f32 %v3443, %v3458
        %v3483 = vmul.f32 %v3444, %v3458
        %v3484 = vmul.f32 %v3445, %v3458
        %v3485 = vmul.f32 %v3446, %v3458
        %v3486 = vmul.f32 %v3447, %v3458
        %v3487 = vmul.f32 %v3448, %v3458
        %v3488 = vmul.f32 %v3449, %v3458
        %v3489 = vmul.f32 %v3450, %v3458
        %v3490 = vmul.f32 %v3451, %v3458
        %v3491 = vmul.f32 %v3452, %v3458
        %v3492 = vld [vmem:[%s8] sm:$0x1]
        %v3494 = vlaneseq
        %v3495 = vshrl.u32 %v3494, 7
        %v3496 = vsub.s32 0, %v3495
        %v3497 = vrot.slane %v3492, %v3496
        %v3499 = vadd.f32 %v3460, %v3497
        %v3500 = vadd.f32 %v3461, %v3497
        %v3501 = vadd.f32 %v3462, %v3497
        %v3502 = vadd.f32 %v3463, %v3497
        %v3503 = vadd.f32 %v3464, %v3497
        %v3504 = vadd.f32 %v3465, %v3497
        %v3505 = vadd.f32 %v3466, %v3497
        %v3506 = vadd.f32 %v3467, %v3497
        %v3507 = vadd.f32 %v3468, %v3497
        %v3508 = vadd.f32 %v3469, %v3497
        %v3509 = vadd.f32 %v3470, %v3497
        %v3510 = vadd.f32 %v3471, %v3497
        %v3511 = vadd.f32 %v3472, %v3497
        %v3512 = vadd.f32 %v3473, %v3497
        %v3513 = vadd.f32 %v3474, %v3497
        %v3514 = vadd.f32 %v3475, %v3497
        %v3515 = vadd.f32 %v3476, %v3497
        %v3516 = vadd.f32 %v3477, %v3497
        %v3517 = vadd.f32 %v3478, %v3497
        %v3518 = vadd.f32 %v3479, %v3497
        %v3519 = vadd.f32 %v3480, %v3497
        %v3520 = vadd.f32 %v3481, %v3497
        %v3521 = vadd.f32 %v3482, %v3497
        %v3522 = vadd.f32 %v3483, %v3497
        %v3523 = vadd.f32 %v3484, %v3497
        %v3524 = vadd.f32 %v3485, %v3497
        %v3525 = vadd.f32 %v3486, %v3497
        %v3526 = vadd.f32 %v3487, %v3497
        %v3527 = vadd.f32 %v3488, %v3497
        %v3528 = vadd.f32 %v3489, %v3497
        %v3529 = vadd.f32 %v3490, %v3497
        %v3530 = vadd.f32 %v3491, %v3497
        %v3531 = vld [vmem:[%s9] sm:$0xff]
        %v3532 = vld [vmem:[%s9 + $0x8] sm:$0xff]
        %v3533 = vld [vmem:[%s9 + $0x10] sm:$0xff]
        %v3534 = vld [vmem:[%s9 + $0x18] sm:$0xff]
        %3536 = vset.pattern.permute.xlu0 0
        %3537 = vperm.xlu0 %3536, %v3531
        %v3538 = vpop.permute.xlu0 %3537
        %3541 = vset.pattern.permute.xlu0 0
        %3542 = vperm.xlu0 %3541, %v3532
        %v3543 = vpop.permute.xlu0 %3542
        %3546 = vset.pattern.permute.xlu0 0
        %3547 = vperm.xlu0 %3546, %v3533
        %v3548 = vpop.permute.xlu0 %3547
        %3551 = vset.pattern.permute.xlu0 0
        %3552 = vperm.xlu0 %3551, %v3534
        %v3553 = vpop.permute.xlu0 %3552
        %v3555 = vmul.f32 %v3499, %v3538
        %v3556 = vmul.f32 %v3500, %v3543
        %v3557 = vmul.f32 %v3501, %v3548
        %v3558 = vmul.f32 %v3502, %v3553
        %v3559 = vmul.f32 %v3503, %v3538
        %v3560 = vmul.f32 %v3504, %v3543
        %v3561 = vmul.f32 %v3505, %v3548
        %v3562 = vmul.f32 %v3506, %v3553
        %v3563 = vmul.f32 %v3507, %v3538
        %v3564 = vmul.f32 %v3508, %v3543
        %v3565 = vmul.f32 %v3509, %v3548
        %v3566 = vmul.f32 %v3510, %v3553
        %v3567 = vmul.f32 %v3511, %v3538
        %v3568 = vmul.f32 %v3512, %v3543
        %v3569 = vmul.f32 %v3513, %v3548
        %v3570 = vmul.f32 %v3514, %v3553
        %v3571 = vmul.f32 %v3515, %v3538
        %v3572 = vmul.f32 %v3516, %v3543
        %v3573 = vmul.f32 %v3517, %v3548
        %v3574 = vmul.f32 %v3518, %v3553
        %v3575 = vmul.f32 %v3519, %v3538
        %v3576 = vmul.f32 %v3520, %v3543
        %v3577 = vmul.f32 %v3521, %v3548
        %v3578 = vmul.f32 %v3522, %v3553
        %v3579 = vmul.f32 %v3523, %v3538
        %v3580 = vmul.f32 %v3524, %v3543
        %v3581 = vmul.f32 %v3525, %v3548
        %v3582 = vmul.f32 %v3526, %v3553
        %v3583 = vmul.f32 %v3527, %v3538
        %v3584 = vmul.f32 %v3528, %v3543
        %v3585 = vmul.f32 %v3529, %v3548
        %v3586 = vmul.f32 %v3530, %v3553
        %v3587 = vsel %vm763, %v3555, 0.0
        %v3588 = vsel %vm763, %v3556, 0.0
        %v3589 = vadd.f32 %v3587, %v3588
        %v3590 = vsel %vm763, %v3557, 0.0
        %v3591 = vadd.f32 %v3589, %v3590
        %v3592 = vsel %vm763, %v3558, 0.0
        %v3593 = vadd.f32 %v3591, %v3592
        %v3594 = vrot.slane %v3593, 4
        %v3595 = vadd.f32 %v3593, %v3594
        %v3596 = vrot.slane %v3595, 2
        %v3597 = vadd.f32 %v3595, %v3596
        %v3598 = vrot.slane %v3597, 1
        %v3599 = vadd.f32 %v3597, %v3598
        %v3600 = vsel %vm763, %v3559, 0.0
        %v3601 = vsel %vm763, %v3560, 0.0
        %v3602 = vadd.f32 %v3600, %v3601
        %v3603 = vsel %vm763, %v3561, 0.0
        %v3604 = vadd.f32 %v3602, %v3603
        %v3605 = vsel %vm763, %v3562, 0.0
        %v3606 = vadd.f32 %v3604, %v3605
        %v3607 = vrot.slane %v3606, 4
        %v3608 = vadd.f32 %v3606, %v3607
        %v3609 = vrot.slane %v3608, 2
        %v3610 = vadd.f32 %v3608, %v3609
        %v3611 = vrot.slane %v3610, 1
        %v3612 = vadd.f32 %v3610, %v3611
        %v3613 = vsel %vm763, %v3563, 0.0
        %v3614 = vsel %vm763, %v3564, 0.0
        %v3615 = vadd.f32 %v3613, %v3614
        %v3616 = vsel %vm763, %v3565, 0.0
        %v3617 = vadd.f32 %v3615, %v3616
        %v3618 = vsel %vm763, %v3566, 0.0
        %v3619 = vadd.f32 %v3617, %v3618
        %v3620 = vrot.slane %v3619, 4
        %v3621 = vadd.f32 %v3619, %v3620
        %v3622 = vrot.slane %v3621, 2
        %v3623 = vadd.f32 %v3621, %v3622
        %v3624 = vrot.slane %v3623, 1
        %v3625 = vadd.f32 %v3623, %v3624
        %v3626 = vsel %vm763, %v3567, 0.0
        %v3627 = vsel %vm763, %v3568, 0.0
        %v3628 = vadd.f32 %v3626, %v3627
        %v3629 = vsel %vm763, %v3569, 0.0
        %v3630 = vadd.f32 %v3628, %v3629
        %v3631 = vsel %vm763, %v3570, 0.0
        %v3632 = vadd.f32 %v3630, %v3631
        %v3633 = vrot.slane %v3632, 4
        %v3634 = vadd.f32 %v3632, %v3633
        %v3635 = vrot.slane %v3634, 2
        %v3636 = vadd.f32 %v3634, %v3635
        %v3637 = vrot.slane %v3636, 1
        %v3638 = vadd.f32 %v3636, %v3637
        %v3639 = vsel %vm763, %v3571, 0.0
        %v3640 = vsel %vm763, %v3572, 0.0
        %v3641 = vadd.f32 %v3639, %v3640
        %v3642 = vsel %vm763, %v3573, 0.0
        %v3643 = vadd.f32 %v3641, %v3642
        %v3644 = vsel %vm763, %v3574, 0.0
        %v3645 = vadd.f32 %v3643, %v3644
        %v3646 = vrot.slane %v3645, 4
        %v3647 = vadd.f32 %v3645, %v3646
        %v3648 = vrot.slane %v3647, 2
        %v3649 = vadd.f32 %v3647, %v3648
        %v3650 = vrot.slane %v3649, 1
        %v3651 = vadd.f32 %v3649, %v3650
        %v3652 = vsel %vm763, %v3575, 0.0
        %v3653 = vsel %vm763, %v3576, 0.0
        %v3654 = vadd.f32 %v3652, %v3653
        %v3655 = vsel %vm763, %v3577, 0.0
        %v3656 = vadd.f32 %v3654, %v3655
        %v3657 = vsel %vm763, %v3578, 0.0
        %v3658 = vadd.f32 %v3656, %v3657
        %v3659 = vrot.slane %v3658, 4
        %v3660 = vadd.f32 %v3658, %v3659
        %v3661 = vrot.slane %v3660, 2
        %v3662 = vadd.f32 %v3660, %v3661
        %v3663 = vrot.slane %v3662, 1
        %v3664 = vadd.f32 %v3662, %v3663
        %v3665 = vsel %vm763, %v3579, 0.0
        %v3666 = vsel %vm763, %v3580, 0.0
        %v3667 = vadd.f32 %v3665, %v3666
        %v3668 = vsel %vm763, %v3581, 0.0
        %v3669 = vadd.f32 %v3667, %v3668
        %v3670 = vsel %vm763, %v3582, 0.0
        %v3671 = vadd.f32 %v3669, %v3670
        %v3672 = vrot.slane %v3671, 4
        %v3673 = vadd.f32 %v3671, %v3672
        %v3674 = vrot.slane %v3673, 2
        %v3675 = vadd.f32 %v3673, %v3674
        %v3676 = vrot.slane %v3675, 1
        %v3677 = vadd.f32 %v3675, %v3676
        %v3678 = vsel %vm763, %v3583, 0.0
        %v3679 = vsel %vm763, %v3584, 0.0
        %v3680 = vadd.f32 %v3678, %v3679
        %v3681 = vsel %vm763, %v3585, 0.0
        %v3682 = vadd.f32 %v3680, %v3681
        %v3683 = vsel %vm763, %v3586, 0.0
        %v3684 = vadd.f32 %v3682, %v3683
        %v3685 = vrot.slane %v3684, 4
        %v3686 = vadd.f32 %v3684, %v3685
        %v3687 = vrot.slane %v3686, 2
        %v3688 = vadd.f32 %v3686, %v3687
        %v3689 = vrot.slane %v3688, 1
        %v3690 = vadd.f32 %v3688, %v3689
        %v3691 = vld [vmem:[#allocation2] sm:$0x1]
        %v3693 = vlaneseq
        %v3694 = vshrl.u32 %v3693, 7
        %v3695 = vsub.s32 0, %v3694
        %v3696 = vrot.slane %v3691, %v3695
        %3697 = vset.pattern.permute.xlu0 0
        %3698 = vperm.xlu0 %3697, %v3696
        %v3699 = vpop.permute.xlu0 %3698
        %v3701 = vadd.f32 %v3599, %v3699
        %v3702 = vadd.f32 %v3612, %v3699
        %v3703 = vadd.f32 %v3625, %v3699
        %v3704 = vadd.f32 %v3638, %v3699
        %v3705 = vadd.f32 %v3651, %v3699
        %v3706 = vadd.f32 %v3664, %v3699
        %v3707 = vadd.f32 %v3677, %v3699
        %v3708 = vadd.f32 %v3690, %v3699
        %vm3717 = vcmask 1041409
        %v3718 = vsel %vm3717, %v3702, %v3701
        %vm3719 = vcmask 1042434
        %v3720 = vsel %vm3719, %v3703, %v3718
        %vm3721 = vcmask 1043459
        %v3722 = vsel %vm3721, %v3704, %v3720
        %vm3723 = vcmask 1044484
        %v3724 = vsel %vm3723, %v3705, %v3722
        %vm3725 = vcmask 1045509
        %v3726 = vsel %vm3725, %v3706, %v3724
        %vm3727 = vcmask 1046534
        %v3728 = vsel %vm3727, %v3707, %v3726
        %vm3729 = vcmask 1047559
        %v3730 = vsel %vm3729, %v3708, %v3728
        %3732 = vst.msk [vmem:[%s436] sm:$0xff] %vm763, %v3730
        %s3733 = sand.u32 %s275, 1
        %s3734 = scalar_lea.sflag [#allocation5], %s3733
        %s3735 = sand.u32 %s275, 1
        %s3736 = smul.addr %s3735, 8
        %s3737 = scalar_lea.vmem [#allocation9], %s3736
        // Predicated region
        $region77: #{tpu_custom_call.1} parent=63 // pred_check
          %p3738 = pneg %p285
        $region78: #{tpu_custom_call.1} parent=63 // pred_check_branch
          %3740 = sbr.rel (%p3738) target = $region80
        $region79: #{tpu_custom_call.1} parent=63 // pred_region
          %s3742 = ssub.s32 128, 128
          %3743 = vsyncadd %s3734, %s3742
          %s3744 = smul.addr %s31, 128
          %s3745 = scalar_lea.hbm %s11, %s3744
          %s3747 = sshll.u32 %s3737, 4
          %s3748 = int_to_ptr.vmem [resolvable:$true] %s3747
          %3750 = dma.vmem_to_hbm [thread:$0]  %s3748, 128, %s3745, %s3734
        $region80: #{tpu_custom_call.1} parent=63 // pred_fallthru
          _
      $region64: #{tpu_custom_call.1} parent=5 // pred_fallthru
        _
      %p3751 = scmp.le.s32.totalorder 2, %s26
      // Predicated region
      $region81: #{tpu_custom_call.1} parent=5 // pred_check
        %p3752 = pneg %p3751
      $region82: #{tpu_custom_call.1} parent=5 // pred_check_branch
        %3754 = sbr.rel (%p3752) target = $region84
      $region83: #{tpu_custom_call.1} parent=5 // pred_region
        %s3755 = ssub.s32 %s26, 2
        // Predicated region
        $region85: #{tpu_custom_call.1} parent=83 // pred_check
          %p3756 = pneg %p291
        $region86: #{tpu_custom_call.1} parent=83 // pred_check_branch
          %3758 = sbr.rel (%p3756) target = $region88
        $region87: #{tpu_custom_call.1} parent=83 // pred_region
          %s3759 = sand.u32 %s276, 1
          %s3760 = scalar_lea.sflag [#allocation5], %s3759
          %s3761 = sand.u32 %s276, 1
          %s3762 = smul.addr %s3761, 8
          %s3763 = scalar_lea.vmem [#allocation9], %s3762
          %3764 = dma.done %s3760, 128
        $region88: #{tpu_custom_call.1} parent=83 // pred_fallthru
          _
      $region84: #{tpu_custom_call.1} parent=5 // pred_fallthru
        _
    $region6: #{tpu_custom_call.1} parent=1 // loop_footer
      %s30 = sadd.s32 1, %s26
    $region7: #{tpu_custom_call.1} parent=1 // loop_footer_branch
      %25 = sbr.rel target = $region3
    $region8: #{tpu_custom_call.1} parent=1 // loop_exit
      _
    %3765 = vsyncpa [#allocation4], 1
    %s3766 = scalar_lea.sflag [#allocation4], 1
    %3767 = vsyncpa %s3766, 1
    %3768 = vsyncpa [#allocation7], 1
    %3769 = vsyncpa [#allocation5], 1
    %s3770 = scalar_lea.sflag [#allocation5], 1
    %3771 = vsyncpa %s3770, 1

</llo_original>
